<compile_context>
chip_gen: v5e
topology: v5e:2x2
jax: 0.10.0
libtpu: 0.0.40
codegen_flags: <defaults>
</compile_context>

<pallas_src>
import jax
import jax.numpy as jnp
from jax.experimental import pallas as pl
from jax.experimental.pallas import tpu as pltpu

_LANES = 128
# Below this the standalone pallas_call (dispatch + fusion barrier) costs more
# than the whole HBM roundtrip -> use fused jnp.maximum instead.
_PALLAS_MIN_BYTES = 4 << 20
# 8192 rows * 128 lanes * 4 B = 4 MiB per f32 block (2 MiB for bf16).
# in + out, double-buffered => ~16 MiB of VMEM, under the 24 MiB limit below.
_MAX_BLOCK_ROWS = 8192
_ROW_ALIGN = 16  # multiple of 16 covers bf16 sublane packing as well as f32


def _relu_kernel(x_ref, o_ref):
    # Elementwise ReLU on the VPU over the whole lane-dense VMEM tile.
    o_ref[...] = jnp.maximum(x_ref[...], jnp.zeros((), x_ref.dtype))


def _relu_pallas_2d(x2d: jax.Array) -> jax.Array:
    rows, lanes = x2d.shape
    # At least 2 grid steps (v7x megacore can shard "parallel" axes across its
    # 2 TensorCores); cap the block at _MAX_BLOCK_ROWS to bound VMEM.
    half_rows = pl.cdiv(rows, 2)
    half_rows = pl.cdiv(half_rows, _ROW_ALIGN) * _ROW_ALIGN
    block_rows = min(_MAX_BLOCK_ROWS, half_rows)
    grid = pl.cdiv(rows, block_rows)
    nbytes = x2d.size * x2d.dtype.itemsize

    return pl.pallas_call(
        _relu_kernel,
        out_shape=jax.ShapeDtypeStruct(x2d.shape, x2d.dtype),
        grid=(grid,),
        in_specs=[pl.BlockSpec((block_rows, lanes), lambda i: (i, 0))],
        out_specs=pl.BlockSpec((block_rows, lanes), lambda i: (i, 0)),
        cost_estimate=pl.CostEstimate(
            flops=x2d.size, transcendentals=0, bytes_accessed=2 * nbytes
        ),
        compiler_params=pltpu.CompilerParams(
            dimension_semantics=("parallel",),
            vmem_limit_bytes=24 << 20,
        ),
    )(x2d)


def relu_pallas(x: jax.Array) -> jax.Array:
    """ReLU(x). Matches torch.nn.ReLU; uses Pallas only when it can pay off."""
    total = x.size
    nbytes = total * jnp.dtype(x.dtype).itemsize

    # Small (e.g. this module's 226 KB input) or ragged (not a multiple of 128
    # elements): a standalone custom call is pure overhead and/or would need
    # pad+slice HBM copies -> emit plain jnp.maximum so XLA can fuse it.
    if nbytes < _PALLAS_MIN_BYTES or total % _LANES != 0:
        return jnp.maximum(x, jnp.zeros((), x.dtype))

    rows = total // _LANES
    x2d = x.reshape(rows, _LANES)  # pure bitcast reshape: lane-dense, no copy
    out2d = _relu_pallas_2d(x2d)
    return out2d.reshape(x.shape)


class M:
    """JAX/Pallas equivalent of the PyTorch module M (a single ReLU)."""

    def __init__(self):
        pass  # ReLU has no parameters.

    def __call__(self, x114: jax.Array) -> jax.Array:
        x115 = relu_pallas(x114)
        return x115


if __name__ == "__main__":
    key = jax.random.PRNGKey(0)
    k1, k2 = jax.random.split(key)
    m = M()

    # 1) Module-spec input [1, 288, 14, 14] f32 (226 KB): fused fast path.
    x114 = jax.random.normal(k1, (1, 288, 14, 14), dtype=jnp.float32)
    y = jax.block_until_ready(m(x114))
    ref = jnp.maximum(x114, 0.0)
    assert y.shape == x114.shape and y.dtype == x114.dtype
    assert bool(jnp.allclose(y, ref)), "ReLU (fused path) mismatch vs reference"

    # 2) Larger input (~6.9 MiB): exercises the Pallas kernel path (grid=2).
    x_big = jax.random.normal(k2, (2, 288, 56, 56), dtype=jnp.float32)
    y_big = jax.block_until_ready(m(x_big))
    ref_big = jnp.maximum(x_big, 0.0)
    assert y_big.shape == x_big.shape and y_big.dtype == x_big.dtype
    assert bool(jnp.allclose(y_big, ref_big)), "Pallas ReLU mismatch vs reference"

    print("KERNEL_OK")
</pallas_src>

<mosaic_0001>
module attributes {stable_mosaic.version = 11 : i64} {
  func.func @_relu_kernel(%arg0: i32, %arg1: memref<7056x128xf32, #tpu.memory_space<vmem>>, %arg2: memref<7056x128xf32, #tpu.memory_space<vmem>>) attributes {dimension_semantics = [#tpu.dimension_semantics<parallel>], iteration_bounds = array<i64: 2>, scalar_prefetch = 0 : i64, scratch_operands = 0 : i64, tpu.core_type = #tpu.core_type<tc>, window_params = [{transform_indices = @transform_0, window_bounds = array<i64: 7056, 128>}, {transform_indices = @transform_1, window_bounds = array<i64: 7056, 128>}]} {
    %c0 = arith.constant 0 : index
    %c0_0 = arith.constant 0 : index
    %0 = vector.load %arg1[%c0, %c0_0] : memref<7056x128xf32, #tpu.memory_space<vmem>>, vector<7056x128xf32>
    %cst = arith.constant 0.000000e+00 : f32
    %1 = vector.broadcast %cst : f32 to vector<7056x128xf32>
    %2 = arith.maximumf %0, %1 : vector<7056x128xf32>
    %c0_1 = arith.constant 0 : index
    %c0_2 = arith.constant 0 : index
    %3 = vector.load %arg2[%c0_1, %c0_2] : memref<7056x128xf32, #tpu.memory_space<vmem>>, vector<7056x128xf32>
    tpu.vector_store %arg2[%c0_1, %c0_2], %2 {strides = array<i32>} : memref<7056x128xf32, #tpu.memory_space<vmem>>, vector<7056x128xf32>,
    return
  }
  func.func @transform_0(%arg0: i32) -> (i32, i32) {
    %c0_i32 = arith.constant 0 : i32
    %c0_i32_0 = arith.constant 0 : i32
    return %arg0, %c0_i32 : i32, i32
  }
  func.func @transform_1(%arg0: i32) -> (i32, i32) {
    %c0_i32 = arith.constant 0 : i32
    %c0_i32_0 = arith.constant 0 : i32
    return %arg0, %c0_i32 : i32, i32
  }
}

</mosaic_0001>

<llo_original>
// kernel: tpu_custom_call.1
$region0: #{tpu_custom_call.1}
  #allocation0 [shape = 'u32[]', space=smem, size = 0x4, offset = 0x4, fixed_abs, tag = 'smem constant byte address 0x4 - core index']
  #allocation1 [shape = 'u32[72,128]{1,0:T(1,128)}', space=vmem, size = 0x9000, scoped, tag = 'internal scratch']
  %s0 = inlined_call_operand.hbm [shape: f32[14112,128], index: 0, kind: input, shape index: {}]
  %s1 = inlined_call_operand.hbm [shape: f32[14112,128], index: 1, kind: output, shape index: {}]
  %s2 = sld [smem:[#allocation0]]
  $region41: #{tpu_custom_call.1} parent=0
    _
  %s4 = ssub.s32 1, %s2
  %s5 = scalar_select 0, %s4, %s2
  $region1: #{tpu_custom_call.1} parent=0
    #allocation2 [shape = 'u8[7225344]{0}', space=vmem, size = 0x6e4000, scoped, tag = 'input window, operand 0']
    #allocation3 [shape = 's32[2]{0}', space=sflag, size = 0x8, scoped, tag = 'scoped memory for tpu_custom_call.1']
    #allocation4 [shape = 's32[2]{0}', space=sflag, size = 0x8, scoped, tag = 'scoped memory for tpu_custom_call.1']
    #allocation5 [shape = 'u8[7225344]{0}', space=vmem, size = 0x6e4000, scoped, tag = 'output window, operand 0']
    %6 = vsyncpa [#allocation3], 0
    %s7 = scalar_lea.sflag [#allocation3], 1
    %8 = vsyncpa %s7, 0
    %9 = vsyncpa [#allocation4], 0
    %s10 = scalar_lea.sflag [#allocation4], 1
    %11 = vsyncpa %s10, 0
    loop: start=0, step=1, limit=4
    $region2: #{tpu_custom_call.1} parent=1 // loop_pre_header
      _
    $region3: #{tpu_custom_call.1} parent=1 // loop_header
      %s13 = sphi 0, %s17
      %p14 = scmp.ge.s32.totalorder %s13, 4
      %s23 = sphi 0, %s25
      %s26 = sphi 0, %s23
      %s27 = sphi 0, %s26
      %s43 = sphi 0, %s27
      %s49 = sphi 0, %s51
      %s52 = sphi 0, %s49
      %s53 = sphi 0, %s52
      %s69 = sphi 0, %s53
    $region4: #{tpu_custom_call.1} parent=1 // loop_header_branch
      %16 = sbr.rel (%p14) target = $region8
    $region5: #{tpu_custom_call.1} parent=1 // loop_body
      %s18 = ssub.s32 %s13, 1
      %s19 = ssub.s32 %s13, 2
      %s20 = sadd.s32 %s13, 1
      %s21 = ssub.s32 %s13, %s20
      %p22 = scmp.eq.s32.totalorder %s21, 0
      %s24 = sadd.s32 %s23, 1
      %s25 = scalar_select %p22, %s23, %s24
      %p28 = pneg %p22
      %p29 = scmp.eq.s32.totalorder %s13, 1
      %p30 = por %p28, %p29
      %p31 = scmp.ne.s32.totalorder %s23, %s26
      %p32 = scmp.eq.s32.totalorder %s13, 0
      %p33 = por %p31, %p32
      %p34 = scmp.ne.s32.totalorder %s23, %s26
      %p35 = scmp.eq.s32.totalorder %s18, 1
      %p36 = por %p34, %p35
      %p37 = scmp.ne.s32.totalorder %s26, %s27
      %p38 = scmp.eq.s32.totalorder %s18, 0
      %p39 = por %p37, %p38
      %p40 = scmp.ne.s32.totalorder %s26, %s27
      %p41 = scmp.eq.s32.totalorder %s19, 1
      %p42 = por %p40, %p41
      %p44 = scmp.ne.s32.totalorder %s27, %s43
      %p45 = scmp.eq.s32.totalorder %s19, 0
      %p46 = por %p44, %p45
      %s47 = ssub.s32 %s13, %s20
      %p48 = scmp.eq.s32.totalorder %s47, 0
      %s50 = sadd.s32 %s49, 1
      %s51 = scalar_select %p48, %s49, %s50
      %p54 = pneg %p48
      %p55 = scmp.eq.s32.totalorder %s13, 1
      %p56 = por %p54, %p55
      %p57 = scmp.ne.s32.totalorder %s49, %s52
      %p58 = scmp.eq.s32.totalorder %s13, 0
      %p59 = por %p57, %p58
      %p60 = scmp.ne.s32.totalorder %s49, %s52
      %p61 = scmp.eq.s32.totalorder %s18, 1
      %p62 = por %p60, %p61
      %p63 = scmp.ne.s32.totalorder %s52, %s53
      %p64 = scmp.eq.s32.totalorder %s18, 0
      %p65 = por %p63, %p64
      %p66 = scmp.ne.s32.totalorder %s52, %s53
      %p67 = scmp.eq.s32.totalorder %s19, 1
      %p68 = por %p66, %p67
      %p70 = scmp.ne.s32.totalorder %s53, %s69
      %p71 = scmp.eq.s32.totalorder %s19, 0
      %p72 = por %p70, %p71
      %p73 = scmp.le.s32.totalorder 1, %s13
      %p74 = scmp.lt.s32.totalorder %s13, 3
      %p75 = pnand %p73, %p74
      %p76 = pneg %p75
      // Predicated region
      $region9: #{tpu_custom_call.1} parent=5 // pred_check
        _
      $region10: #{tpu_custom_call.1} parent=5 // pred_check_branch
        %78 = sbr.rel (%p75) target = $region12
      $region11: #{tpu_custom_call.1} parent=5 // pred_region
        %s79 = ssub.s32 %s13, 1
      $region12: #{tpu_custom_call.1} parent=5 // pred_fallthru
        _
      %p80 = scmp.lt.s32.totalorder %s13, 2
      // Predicated region
      $region13: #{tpu_custom_call.1} parent=5 // pred_check
        %p81 = pneg %p80
      $region14: #{tpu_custom_call.1} parent=5 // pred_check_branch
        %83 = sbr.rel (%p81) target = $region16
      $region15: #{tpu_custom_call.1} parent=5 // pred_region
        // Predicated region
        $region17: #{tpu_custom_call.1} parent=15 // pred_check
          %p84 = pneg %p33
        $region18: #{tpu_custom_call.1} parent=15 // pred_check_branch
          %86 = sbr.rel (%p84) target = $region20
        $region19: #{tpu_custom_call.1} parent=15 // pred_region
          %s87 = sand.u32 %s23, 1
          %s88 = scalar_lea.sflag [#allocation3], %s87
          %s89 = sand.u32 %s23, 1
          %s90 = smul.addr %s89, 7056
          %s91 = scalar_lea.vmem [#allocation2], %s90
          %s92 = smul.u32 882, %s13
          %94 = vsyncadd %s88, 0
          %s95 = smul.addr %s92, 8
          %s96 = scalar_lea.hbm %s0, %s95
          %s97 = sshll.u32 %s96, 4
          %s98 = int_to_ptr.hbm [resolvable:$true] %s97
          %s99 = sshll.u32 %s91, 4
          %s100 = int_to_ptr.vmem [resolvable:$true] %s99
          %105 = dma.hbm_to_vmem [thread:$0]  %s98, 112896, %s100, %s88, 128, 128, 8
        $region20: #{tpu_custom_call.1} parent=15 // pred_fallthru
          _
      $region16: #{tpu_custom_call.1} parent=5 // pred_fallthru
        _
      %p106 = scmp.le.s32.totalorder 1, %s13
      %p107 = scmp.lt.s32.totalorder %s13, 3
      %p108 = pnand %p106, %p107
      %p109 = pneg %p108
      // Predicated region
      $region21: #{tpu_custom_call.1} parent=5 // pred_check
        _
      $region22: #{tpu_custom_call.1} parent=5 // pred_check_branch
        %111 = sbr.rel (%p108) target = $region24
      $region23: #{tpu_custom_call.1} parent=5 // pred_region
        %s112 = ssub.s32 %s13, 1
        %s113 = sand.u32 %s26, 1
        %s114 = scalar_lea.sflag [#allocation3], %s113
        %s115 = sand.u32 %s26, 1
        %s116 = smul.addr %s115, 7056
        %s117 = scalar_lea.vmem [#allocation2], %s116
        // Predicated region
        $region25: #{tpu_custom_call.1} parent=23 // pred_check
          %p118 = pneg %p39
        $region26: #{tpu_custom_call.1} parent=23 // pred_check_branch
          %120 = sbr.rel (%p118) target = $region28
        $region27: #{tpu_custom_call.1} parent=23 // pred_region
          %122 = dma.done %s114, 112896
        $region28: #{tpu_custom_call.1} parent=23 // pred_fallthru
          _
        %s123 = sand.u32 %s26, 1
        %s124 = scalar_lea.sflag [#allocation3], %s123
        %s125 = sand.u32 %s26, 1
        %s126 = smul.addr %s125, 7056
        %s127 = scalar_lea.vmem [#allocation2], %s126
        %p128 = pneg %p39
        %p129 = pneg %p36
        %p130 = pneg %p65
        %p131 = pneg %p62
        %s132 = sand.u32 %s52, 1
        %s133 = scalar_lea.sflag [#allocation4], %s132
        %s134 = sand.u32 %s52, 1
        %s135 = smul.addr %s134, 7056
        %s136 = scalar_lea.vmem [#allocation5], %s135
        %s137 = smul.u32 882, %s18
        %s138 = smul.u32 882, %s18
        %v139 = vld [vmem:[%s117] sm:$0xff]
        %v140 = vld [vmem:[%s117 + $0x8] sm:$0xff]
        %v141 = vld [vmem:[%s117 + $0x10] sm:$0xff]
        %v142 = vld [vmem:[%s117 + $0x18] sm:$0xff]
        %v143 = vld [vmem:[%s117 + $0x20] sm:$0xff]
        %v144 = vld [vmem:[%s117 + $0x28] sm:$0xff]
        %v145 = vld [vmem:[%s117 + $0x30] sm:$0xff]
        %v146 = vld [vmem:[%s117 + $0x38] sm:$0xff]
        %v147 = vld [vmem:[%s117 + $0x40] sm:$0xff]
        %v148 = vld [vmem:[%s117 + $0x48] sm:$0xff]
        %v149 = vld [vmem:[%s117 + $0x50] sm:$0xff]
        %v150 = vld [vmem:[%s117 + $0x58] sm:$0xff]
        %v151 = vld [vmem:[%s117 + $0x60] sm:$0xff]
        %v152 = vld [vmem:[%s117 + $0x68] sm:$0xff]
        %v153 = vld [vmem:[%s117 + $0x70] sm:$0xff]
        %v154 = vld [vmem:[%s117 + $0x78] sm:$0xff]
        %v155 = vld [vmem:[%s117 + $0x80] sm:$0xff]
        %v156 = vld [vmem:[%s117 + $0x88] sm:$0xff]
        %v157 = vld [vmem:[%s117 + $0x90] sm:$0xff]
        %v158 = vld [vmem:[%s117 + $0x98] sm:$0xff]
        %v159 = vld [vmem:[%s117 + $0xa0] sm:$0xff]
        %v160 = vld [vmem:[%s117 + $0xa8] sm:$0xff]
        %v161 = vld [vmem:[%s117 + $0xb0] sm:$0xff]
        %v162 = vld [vmem:[%s117 + $0xb8] sm:$0xff]
        %v163 = vld [vmem:[%s117 + $0xc0] sm:$0xff]
        %v164 = vld [vmem:[%s117 + $0xc8] sm:$0xff]
        %v165 = vld [vmem:[%s117 + $0xd0] sm:$0xff]
        %v166 = vld [vmem:[%s117 + $0xd8] sm:$0xff]
        %v167 = vld [vmem:[%s117 + $0xe0] sm:$0xff]
        %v168 = vld [vmem:[%s117 + $0xe8] sm:$0xff]
        %v169 = vld [vmem:[%s117 + $0xf0] sm:$0xff]
        %v170 = vld [vmem:[%s117 + $0xf8] sm:$0xff]
        %v171 = vld [vmem:[%s117 + $0x100] sm:$0xff]
        %v172 = vld [vmem:[%s117 + $0x108] sm:$0xff]
        %v173 = vld [vmem:[%s117 + $0x110] sm:$0xff]
        %v174 = vld [vmem:[%s117 + $0x118] sm:$0xff]
        %v175 = vld [vmem:[%s117 + $0x120] sm:$0xff]
        %v176 = vld [vmem:[%s117 + $0x128] sm:$0xff]
        %v177 = vld [vmem:[%s117 + $0x130] sm:$0xff]
        %v178 = vld [vmem:[%s117 + $0x138] sm:$0xff]
        %v179 = vld [vmem:[%s117 + $0x140] sm:$0xff]
        %v180 = vld [vmem:[%s117 + $0x148] sm:$0xff]
        %v181 = vld [vmem:[%s117 + $0x150] sm:$0xff]
        %v182 = vld [vmem:[%s117 + $0x158] sm:$0xff]
        %v183 = vld [vmem:[%s117 + $0x160] sm:$0xff]
        %v184 = vld [vmem:[%s117 + $0x168] sm:$0xff]
        %v185 = vld [vmem:[%s117 + $0x170] sm:$0xff]
        %v186 = vld [vmem:[%s117 + $0x178] sm:$0xff]
        %v187 = vld [vmem:[%s117 + $0x180] sm:$0xff]
        %v188 = vld [vmem:[%s117 + $0x188] sm:$0xff]
        %v189 = vld [vmem:[%s117 + $0x190] sm:$0xff]
        %v190 = vld [vmem:[%s117 + $0x198] sm:$0xff]
        %v191 = vld [vmem:[%s117 + $0x1a0] sm:$0xff]
        %v192 = vld [vmem:[%s117 + $0x1a8] sm:$0xff]
        %v193 = vld [vmem:[%s117 + $0x1b0] sm:$0xff]
        %v194 = vld [vmem:[%s117 + $0x1b8] sm:$0xff]
        %v195 = vld [vmem:[%s117 + $0x1c0] sm:$0xff]
        %v196 = vld [vmem:[%s117 + $0x1c8] sm:$0xff]
        %v197 = vld [vmem:[%s117 + $0x1d0] sm:$0xff]
        %v198 = vld [vmem:[%s117 + $0x1d8] sm:$0xff]
        %v199 = vld [vmem:[%s117 + $0x1e0] sm:$0xff]
        %v200 = vld [vmem:[%s117 + $0x1e8] sm:$0xff]
        %v201 = vld [vmem:[%s117 + $0x1f0] sm:$0xff]
        %v202 = vld [vmem:[%s117 + $0x1f8] sm:$0xff]
        %v203 = vld [vmem:[%s117 + $0x200] sm:$0xff]
        %v204 = vld [vmem:[%s117 + $0x208] sm:$0xff]
        %v205 = vld [vmem:[%s117 + $0x210] sm:$0xff]
        %v206 = vld [vmem:[%s117 + $0x218] sm:$0xff]
        %v207 = vld [vmem:[%s117 + $0x220] sm:$0xff]
        %v208 = vld [vmem:[%s117 + $0x228] sm:$0xff]
        %v209 = vld [vmem:[%s117 + $0x230] sm:$0xff]
        %v210 = vld [vmem:[%s117 + $0x238] sm:$0xff]
        %v211 = vld [vmem:[%s117 + $0x240] sm:$0xff]
        %v212 = vld [vmem:[%s117 + $0x248] sm:$0xff]
        %v213 = vld [vmem:[%s117 + $0x250] sm:$0xff]
        %v214 = vld [vmem:[%s117 + $0x258] sm:$0xff]
        %v215 = vld [vmem:[%s117 + $0x260] sm:$0xff]
        %v216 = vld [vmem:[%s117 + $0x268] sm:$0xff]
        %v217 = vld [vmem:[%s117 + $0x270] sm:$0xff]
        %v218 = vld [vmem:[%s117 + $0x278] sm:$0xff]
        %v219 = vld [vmem:[%s117 + $0x280] sm:$0xff]
        %v220 = vld [vmem:[%s117 + $0x288] sm:$0xff]
        %v221 = vld [vmem:[%s117 + $0x290] sm:$0xff]
        %v222 = vld [vmem:[%s117 + $0x298] sm:$0xff]
        %v223 = vld [vmem:[%s117 + $0x2a0] sm:$0xff]
        %v224 = vld [vmem:[%s117 + $0x2a8] sm:$0xff]
        %v225 = vld [vmem:[%s117 + $0x2b0] sm:$0xff]
        %v226 = vld [vmem:[%s117 + $0x2b8] sm:$0xff]
        %v227 = vld [vmem:[%s117 + $0x2c0] sm:$0xff]
        %v228 = vld [vmem:[%s117 + $0x2c8] sm:$0xff]
        %v229 = vld [vmem:[%s117 + $0x2d0] sm:$0xff]
        %v230 = vld [vmem:[%s117 + $0x2d8] sm:$0xff]
        %v231 = vld [vmem:[%s117 + $0x2e0] sm:$0xff]
        %v232 = vld [vmem:[%s117 + $0x2e8] sm:$0xff]
        %v233 = vld [vmem:[%s117 + $0x2f0] sm:$0xff]
        %v234 = vld [vmem:[%s117 + $0x2f8] sm:$0xff]
        %v235 = vld [vmem:[%s117 + $0x300] sm:$0xff]
        %v236 = vld [vmem:[%s117 + $0x308] sm:$0xff]
        %v237 = vld [vmem:[%s117 + $0x310] sm:$0xff]
        %v238 = vld [vmem:[%s117 + $0x318] sm:$0xff]
        %v239 = vld [vmem:[%s117 + $0x320] sm:$0xff]
        %v240 = vld [vmem:[%s117 + $0x328] sm:$0xff]
        %v241 = vld [vmem:[%s117 + $0x330] sm:$0xff]
        %v242 = vld [vmem:[%s117 + $0x338] sm:$0xff]
        %v243 = vld [vmem:[%s117 + $0x340] sm:$0xff]
        %v244 = vld [vmem:[%s117 + $0x348] sm:$0xff]
        %v245 = vld [vmem:[%s117 + $0x350] sm:$0xff]
        %v246 = vld [vmem:[%s117 + $0x358] sm:$0xff]
        %v247 = vld [vmem:[%s117 + $0x360] sm:$0xff]
        %v248 = vld [vmem:[%s117 + $0x368] sm:$0xff]
        %v249 = vld [vmem:[%s117 + $0x370] sm:$0xff]
        %v250 = vld [vmem:[%s117 + $0x378] sm:$0xff]
        %v251 = vld [vmem:[%s117 + $0x380] sm:$0xff]
        %v252 = vld [vmem:[%s117 + $0x388] sm:$0xff]
        %v253 = vld [vmem:[%s117 + $0x390] sm:$0xff]
        %v254 = vld [vmem:[%s117 + $0x398] sm:$0xff]
        %v255 = vld [vmem:[%s117 + $0x3a0] sm:$0xff]
        %v256 = vld [vmem:[%s117 + $0x3a8] sm:$0xff]
        %v257 = vld [vmem:[%s117 + $0x3b0] sm:$0xff]
        %v258 = vld [vmem:[%s117 + $0x3b8] sm:$0xff]
        %v259 = vld [vmem:[%s117 + $0x3c0] sm:$0xff]
        %v260 = vld [vmem:[%s117 + $0x3c8] sm:$0xff]
        %v261 = vld [vmem:[%s117 + $0x3d0] sm:$0xff]
        %v262 = vld [vmem:[%s117 + $0x3d8] sm:$0xff]
        %v263 = vld [vmem:[%s117 + $0x3e0] sm:$0xff]
        %v264 = vld [vmem:[%s117 + $0x3e8] sm:$0xff]
        %v265 = vld [vmem:[%s117 + $0x3f0] sm:$0xff]
        %v266 = vld [vmem:[%s117 + $0x3f8] sm:$0xff]
        %v267 = vld [vmem:[%s117 + $0x400] sm:$0xff]
        %v268 = vld [vmem:[%s117 + $0x408] sm:$0xff]
        %v269 = vld [vmem:[%s117 + $0x410] sm:$0xff]
        %v270 = vld [vmem:[%s117 + $0x418] sm:$0xff]
        %v271 = vld [vmem:[%s117 + $0x420] sm:$0xff]
        %v272 = vld [vmem:[%s117 + $0x428] sm:$0xff]
        %v273 = vld [vmem:[%s117 + $0x430] sm:$0xff]
        %v274 = vld [vmem:[%s117 + $0x438] sm:$0xff]
        %v275 = vld [vmem:[%s117 + $0x440] sm:$0xff]
        %v276 = vld [vmem:[%s117 + $0x448] sm:$0xff]
        %v277 = vld [vmem:[%s117 + $0x450] sm:$0xff]
        %v278 = vld [vmem:[%s117 + $0x458] sm:$0xff]
        %v279 = vld [vmem:[%s117 + $0x460] sm:$0xff]
        %v280 = vld [vmem:[%s117 + $0x468] sm:$0xff]
        %v281 = vld [vmem:[%s117 + $0x470] sm:$0xff]
        %v282 = vld [vmem:[%s117 + $0x478] sm:$0xff]
        %v283 = vld [vmem:[%s117 + $0x480] sm:$0xff]
        %v284 = vld [vmem:[%s117 + $0x488] sm:$0xff]
        %v285 = vld [vmem:[%s117 + $0x490] sm:$0xff]
        %v286 = vld [vmem:[%s117 + $0x498] sm:$0xff]
        %v287 = vld [vmem:[%s117 + $0x4a0] sm:$0xff]
        %v288 = vld [vmem:[%s117 + $0x4a8] sm:$0xff]
        %v289 = vld [vmem:[%s117 + $0x4b0] sm:$0xff]
        %v290 = vld [vmem:[%s117 + $0x4b8] sm:$0xff]
        %v291 = vld [vmem:[%s117 + $0x4c0] sm:$0xff]
        %v292 = vld [vmem:[%s117 + $0x4c8] sm:$0xff]
        %v293 = vld [vmem:[%s117 + $0x4d0] sm:$0xff]
        %v294 = vld [vmem:[%s117 + $0x4d8] sm:$0xff]
        %v295 = vld [vmem:[%s117 + $0x4e0] sm:$0xff]
        %v296 = vld [vmem:[%s117 + $0x4e8] sm:$0xff]
        %v297 = vld [vmem:[%s117 + $0x4f0] sm:$0xff]
        %v298 = vld [vmem:[%s117 + $0x4f8] sm:$0xff]
        %v299 = vld [vmem:[%s117 + $0x500] sm:$0xff]
        %v300 = vld [vmem:[%s117 + $0x508] sm:$0xff]
        %v301 = vld [vmem:[%s117 + $0x510] sm:$0xff]
        %v302 = vld [vmem:[%s117 + $0x518] sm:$0xff]
        %v303 = vld [vmem:[%s117 + $0x520] sm:$0xff]
        %v304 = vld [vmem:[%s117 + $0x528] sm:$0xff]
        %v305 = vld [vmem:[%s117 + $0x530] sm:$0xff]
        %v306 = vld [vmem:[%s117 + $0x538] sm:$0xff]
        %v307 = vld [vmem:[%s117 + $0x540] sm:$0xff]
        %v308 = vld [vmem:[%s117 + $0x548] sm:$0xff]
        %v309 = vld [vmem:[%s117 + $0x550] sm:$0xff]
        %v310 = vld [vmem:[%s117 + $0x558] sm:$0xff]
        %v311 = vld [vmem:[%s117 + $0x560] sm:$0xff]
        %v312 = vld [vmem:[%s117 + $0x568] sm:$0xff]
        %v313 = vld [vmem:[%s117 + $0x570] sm:$0xff]
        %v314 = vld [vmem:[%s117 + $0x578] sm:$0xff]
        %v315 = vld [vmem:[%s117 + $0x580] sm:$0xff]
        %v316 = vld [vmem:[%s117 + $0x588] sm:$0xff]
        %v317 = vld [vmem:[%s117 + $0x590] sm:$0xff]
        %v318 = vld [vmem:[%s117 + $0x598] sm:$0xff]
        %v319 = vld [vmem:[%s117 + $0x5a0] sm:$0xff]
        %v320 = vld [vmem:[%s117 + $0x5a8] sm:$0xff]
        %v321 = vld [vmem:[%s117 + $0x5b0] sm:$0xff]
        %v322 = vld [vmem:[%s117 + $0x5b8] sm:$0xff]
        %v323 = vld [vmem:[%s117 + $0x5c0] sm:$0xff]
        %v324 = vld [vmem:[%s117 + $0x5c8] sm:$0xff]
        %v325 = vld [vmem:[%s117 + $0x5d0] sm:$0xff]
        %v326 = vld [vmem:[%s117 + $0x5d8] sm:$0xff]
        %v327 = vld [vmem:[%s117 + $0x5e0] sm:$0xff]
        %v328 = vld [vmem:[%s117 + $0x5e8] sm:$0xff]
        %v329 = vld [vmem:[%s117 + $0x5f0] sm:$0xff]
        %v330 = vld [vmem:[%s117 + $0x5f8] sm:$0xff]
        %v331 = vld [vmem:[%s117 + $0x600] sm:$0xff]
        %v332 = vld [vmem:[%s117 + $0x608] sm:$0xff]
        %v333 = vld [vmem:[%s117 + $0x610] sm:$0xff]
        %v334 = vld [vmem:[%s117 + $0x618] sm:$0xff]
        %v335 = vld [vmem:[%s117 + $0x620] sm:$0xff]
        %v336 = vld [vmem:[%s117 + $0x628] sm:$0xff]
        %v337 = vld [vmem:[%s117 + $0x630] sm:$0xff]
        %v338 = vld [vmem:[%s117 + $0x638] sm:$0xff]
        %v339 = vld [vmem:[%s117 + $0x640] sm:$0xff]
        %v340 = vld [vmem:[%s117 + $0x648] sm:$0xff]
        %v341 = vld [vmem:[%s117 + $0x650] sm:$0xff]
        %v342 = vld [vmem:[%s117 + $0x658] sm:$0xff]
        %v343 = vld [vmem:[%s117 + $0x660] sm:$0xff]
        %v344 = vld [vmem:[%s117 + $0x668] sm:$0xff]
        %v345 = vld [vmem:[%s117 + $0x670] sm:$0xff]
        %v346 = vld [vmem:[%s117 + $0x678] sm:$0xff]
        %v347 = vld [vmem:[%s117 + $0x680] sm:$0xff]
        %v348 = vld [vmem:[%s117 + $0x688] sm:$0xff]
        %v349 = vld [vmem:[%s117 + $0x690] sm:$0xff]
        %v350 = vld [vmem:[%s117 + $0x698] sm:$0xff]
        %v351 = vld [vmem:[%s117 + $0x6a0] sm:$0xff]
        %v352 = vld [vmem:[%s117 + $0x6a8] sm:$0xff]
        %v353 = vld [vmem:[%s117 + $0x6b0] sm:$0xff]
        %v354 = vld [vmem:[%s117 + $0x6b8] sm:$0xff]
        %v355 = vld [vmem:[%s117 + $0x6c0] sm:$0xff]
        %v356 = vld [vmem:[%s117 + $0x6c8] sm:$0xff]
        %v357 = vld [vmem:[%s117 + $0x6d0] sm:$0xff]
        %v358 = vld [vmem:[%s117 + $0x6d8] sm:$0xff]
        %v359 = vld [vmem:[%s117 + $0x6e0] sm:$0xff]
        %v360 = vld [vmem:[%s117 + $0x6e8] sm:$0xff]
        %v361 = vld [vmem:[%s117 + $0x6f0] sm:$0xff]
        %v362 = vld [vmem:[%s117 + $0x6f8] sm:$0xff]
        %v363 = vld [vmem:[%s117 + $0x700] sm:$0xff]
        %v364 = vld [vmem:[%s117 + $0x708] sm:$0xff]
        %v365 = vld [vmem:[%s117 + $0x710] sm:$0xff]
        %v366 = vld [vmem:[%s117 + $0x718] sm:$0xff]
        %v367 = vld [vmem:[%s117 + $0x720] sm:$0xff]
        %v368 = vld [vmem:[%s117 + $0x728] sm:$0xff]
        %v369 = vld [vmem:[%s117 + $0x730] sm:$0xff]
        %v370 = vld [vmem:[%s117 + $0x738] sm:$0xff]
        %v371 = vld [vmem:[%s117 + $0x740] sm:$0xff]
        %v372 = vld [vmem:[%s117 + $0x748] sm:$0xff]
        %v373 = vld [vmem:[%s117 + $0x750] sm:$0xff]
        %v374 = vld [vmem:[%s117 + $0x758] sm:$0xff]
        %v375 = vld [vmem:[%s117 + $0x760] sm:$0xff]
        %v376 = vld [vmem:[%s117 + $0x768] sm:$0xff]
        %v377 = vld [vmem:[%s117 + $0x770] sm:$0xff]
        %v378 = vld [vmem:[%s117 + $0x778] sm:$0xff]
        %v379 = vld [vmem:[%s117 + $0x780] sm:$0xff]
        %v380 = vld [vmem:[%s117 + $0x788] sm:$0xff]
        %v381 = vld [vmem:[%s117 + $0x790] sm:$0xff]
        %v382 = vld [vmem:[%s117 + $0x798] sm:$0xff]
        %v383 = vld [vmem:[%s117 + $0x7a0] sm:$0xff]
        %v384 = vld [vmem:[%s117 + $0x7a8] sm:$0xff]
        %v385 = vld [vmem:[%s117 + $0x7b0] sm:$0xff]
        %v386 = vld [vmem:[%s117 + $0x7b8] sm:$0xff]
        %v387 = vld [vmem:[%s117 + $0x7c0] sm:$0xff]
        %v388 = vld [vmem:[%s117 + $0x7c8] sm:$0xff]
        %v389 = vld [vmem:[%s117 + $0x7d0] sm:$0xff]
        %v390 = vld [vmem:[%s117 + $0x7d8] sm:$0xff]
        %v391 = vld [vmem:[%s117 + $0x7e0] sm:$0xff]
        %v392 = vld [vmem:[%s117 + $0x7e8] sm:$0xff]
        %v393 = vld [vmem:[%s117 + $0x7f0] sm:$0xff]
        %v394 = vld [vmem:[%s117 + $0x7f8] sm:$0xff]
        %v395 = vld [vmem:[%s117 + $0x800] sm:$0xff]
        %v396 = vld [vmem:[%s117 + $0x808] sm:$0xff]
        %v397 = vld [vmem:[%s117 + $0x810] sm:$0xff]
        %v398 = vld [vmem:[%s117 + $0x818] sm:$0xff]
        %v399 = vld [vmem:[%s117 + $0x820] sm:$0xff]
        %v400 = vld [vmem:[%s117 + $0x828] sm:$0xff]
        %v401 = vld [vmem:[%s117 + $0x830] sm:$0xff]
        %v402 = vld [vmem:[%s117 + $0x838] sm:$0xff]
        %v403 = vld [vmem:[%s117 + $0x840] sm:$0xff]
        %v404 = vld [vmem:[%s117 + $0x848] sm:$0xff]
        %v405 = vld [vmem:[%s117 + $0x850] sm:$0xff]
        %v406 = vld [vmem:[%s117 + $0x858] sm:$0xff]
        %v407 = vld [vmem:[%s117 + $0x860] sm:$0xff]
        %v408 = vld [vmem:[%s117 + $0x868] sm:$0xff]
        %v409 = vld [vmem:[%s117 + $0x870] sm:$0xff]
        %v410 = vld [vmem:[%s117 + $0x878] sm:$0xff]
        %v411 = vld [vmem:[%s117 + $0x880] sm:$0xff]
        %v412 = vld [vmem:[%s117 + $0x888] sm:$0xff]
        %v413 = vld [vmem:[%s117 + $0x890] sm:$0xff]
        %v414 = vld [vmem:[%s117 + $0x898] sm:$0xff]
        %v415 = vld [vmem:[%s117 + $0x8a0] sm:$0xff]
        %v416 = vld [vmem:[%s117 + $0x8a8] sm:$0xff]
        %v417 = vld [vmem:[%s117 + $0x8b0] sm:$0xff]
        %v418 = vld [vmem:[%s117 + $0x8b8] sm:$0xff]
        %v419 = vld [vmem:[%s117 + $0x8c0] sm:$0xff]
        %v420 = vld [vmem:[%s117 + $0x8c8] sm:$0xff]
        %v421 = vld [vmem:[%s117 + $0x8d0] sm:$0xff]
        %v422 = vld [vmem:[%s117 + $0x8d8] sm:$0xff]
        %v423 = vld [vmem:[%s117 + $0x8e0] sm:$0xff]
        %v424 = vld [vmem:[%s117 + $0x8e8] sm:$0xff]
        %v425 = vld [vmem:[%s117 + $0x8f0] sm:$0xff]
        %v426 = vld [vmem:[%s117 + $0x8f8] sm:$0xff]
        %v427 = vld [vmem:[%s117 + $0x900] sm:$0xff]
        %v428 = vld [vmem:[%s117 + $0x908] sm:$0xff]
        %v429 = vld [vmem:[%s117 + $0x910] sm:$0xff]
        %v430 = vld [vmem:[%s117 + $0x918] sm:$0xff]
        %v431 = vld [vmem:[%s117 + $0x920] sm:$0xff]
        %v432 = vld [vmem:[%s117 + $0x928] sm:$0xff]
        %v433 = vld [vmem:[%s117 + $0x930] sm:$0xff]
        %v434 = vld [vmem:[%s117 + $0x938] sm:$0xff]
        %v435 = vld [vmem:[%s117 + $0x940] sm:$0xff]
        %v436 = vld [vmem:[%s117 + $0x948] sm:$0xff]
        %v437 = vld [vmem:[%s117 + $0x950] sm:$0xff]
        %v438 = vld [vmem:[%s117 + $0x958] sm:$0xff]
        %v439 = vld [vmem:[%s117 + $0x960] sm:$0xff]
        %v440 = vld [vmem:[%s117 + $0x968] sm:$0xff]
        %v441 = vld [vmem:[%s117 + $0x970] sm:$0xff]
        %v442 = vld [vmem:[%s117 + $0x978] sm:$0xff]
        %v443 = vld [vmem:[%s117 + $0x980] sm:$0xff]
        %v444 = vld [vmem:[%s117 + $0x988] sm:$0xff]
        %v445 = vld [vmem:[%s117 + $0x990] sm:$0xff]
        %v446 = vld [vmem:[%s117 + $0x998] sm:$0xff]
        %v447 = vld [vmem:[%s117 + $0x9a0] sm:$0xff]
        %v448 = vld [vmem:[%s117 + $0x9a8] sm:$0xff]
        %v449 = vld [vmem:[%s117 + $0x9b0] sm:$0xff]
        %v450 = vld [vmem:[%s117 + $0x9b8] sm:$0xff]
        %v451 = vld [vmem:[%s117 + $0x9c0] sm:$0xff]
        %v452 = vld [vmem:[%s117 + $0x9c8] sm:$0xff]
        %v453 = vld [vmem:[%s117 + $0x9d0] sm:$0xff]
        %v454 = vld [vmem:[%s117 + $0x9d8] sm:$0xff]
        %v455 = vld [vmem:[%s117 + $0x9e0] sm:$0xff]
        %v456 = vld [vmem:[%s117 + $0x9e8] sm:$0xff]
        %v457 = vld [vmem:[%s117 + $0x9f0] sm:$0xff]
        %v458 = vld [vmem:[%s117 + $0x9f8] sm:$0xff]
        %v459 = vld [vmem:[%s117 + $0xa00] sm:$0xff]
        %v460 = vld [vmem:[%s117 + $0xa08] sm:$0xff]
        %v461 = vld [vmem:[%s117 + $0xa10] sm:$0xff]
        %v462 = vld [vmem:[%s117 + $0xa18] sm:$0xff]
        %v463 = vld [vmem:[%s117 + $0xa20] sm:$0xff]
        %v464 = vld [vmem:[%s117 + $0xa28] sm:$0xff]
        %v465 = vld [vmem:[%s117 + $0xa30] sm:$0xff]
        %v466 = vld [vmem:[%s117 + $0xa38] sm:$0xff]
        %v467 = vld [vmem:[%s117 + $0xa40] sm:$0xff]
        %v468 = vld [vmem:[%s117 + $0xa48] sm:$0xff]
        %v469 = vld [vmem:[%s117 + $0xa50] sm:$0xff]
        %v470 = vld [vmem:[%s117 + $0xa58] sm:$0xff]
        %v471 = vld [vmem:[%s117 + $0xa60] sm:$0xff]
        %v472 = vld [vmem:[%s117 + $0xa68] sm:$0xff]
        %v473 = vld [vmem:[%s117 + $0xa70] sm:$0xff]
        %v474 = vld [vmem:[%s117 + $0xa78] sm:$0xff]
        %v475 = vld [vmem:[%s117 + $0xa80] sm:$0xff]
        %v476 = vld [vmem:[%s117 + $0xa88] sm:$0xff]
        %v477 = vld [vmem:[%s117 + $0xa90] sm:$0xff]
        %v478 = vld [vmem:[%s117 + $0xa98] sm:$0xff]
        %v479 = vld [vmem:[%s117 + $0xaa0] sm:$0xff]
        %v480 = vld [vmem:[%s117 + $0xaa8] sm:$0xff]
        %v481 = vld [vmem:[%s117 + $0xab0] sm:$0xff]
        %v482 = vld [vmem:[%s117 + $0xab8] sm:$0xff]
        %v483 = vld [vmem:[%s117 + $0xac0] sm:$0xff]
        %v484 = vld [vmem:[%s117 + $0xac8] sm:$0xff]
        %v485 = vld [vmem:[%s117 + $0xad0] sm:$0xff]
        %v486 = vld [vmem:[%s117 + $0xad8] sm:$0xff]
        %v487 = vld [vmem:[%s117 + $0xae0] sm:$0xff]
        %v488 = vld [vmem:[%s117 + $0xae8] sm:$0xff]
        %v489 = vld [vmem:[%s117 + $0xaf0] sm:$0xff]
        %v490 = vld [vmem:[%s117 + $0xaf8] sm:$0xff]
        %v491 = vld [vmem:[%s117 + $0xb00] sm:$0xff]
        %v492 = vld [vmem:[%s117 + $0xb08] sm:$0xff]
        %v493 = vld [vmem:[%s117 + $0xb10] sm:$0xff]
        %v494 = vld [vmem:[%s117 + $0xb18] sm:$0xff]
        %v495 = vld [vmem:[%s117 + $0xb20] sm:$0xff]
        %v496 = vld [vmem:[%s117 + $0xb28] sm:$0xff]
        %v497 = vld [vmem:[%s117 + $0xb30] sm:$0xff]
        %v498 = vld [vmem:[%s117 + $0xb38] sm:$0xff]
        %v499 = vld [vmem:[%s117 + $0xb40] sm:$0xff]
        %v500 = vld [vmem:[%s117 + $0xb48] sm:$0xff]
        %v501 = vld [vmem:[%s117 + $0xb50] sm:$0xff]
        %v502 = vld [vmem:[%s117 + $0xb58] sm:$0xff]
        %v503 = vld [vmem:[%s117 + $0xb60] sm:$0xff]
        %v504 = vld [vmem:[%s117 + $0xb68] sm:$0xff]
        %v505 = vld [vmem:[%s117 + $0xb70] sm:$0xff]
        %v506 = vld [vmem:[%s117 + $0xb78] sm:$0xff]
        %v507 = vld [vmem:[%s117 + $0xb80] sm:$0xff]
        %v508 = vld [vmem:[%s117 + $0xb88] sm:$0xff]
        %v509 = vld [vmem:[%s117 + $0xb90] sm:$0xff]
        %v510 = vld [vmem:[%s117 + $0xb98] sm:$0xff]
        %v511 = vld [vmem:[%s117 + $0xba0] sm:$0xff]
        %v512 = vld [vmem:[%s117 + $0xba8] sm:$0xff]
        %v513 = vld [vmem:[%s117 + $0xbb0] sm:$0xff]
        %v514 = vld [vmem:[%s117 + $0xbb8] sm:$0xff]
        %v515 = vld [vmem:[%s117 + $0xbc0] sm:$0xff]
        %v516 = vld [vmem:[%s117 + $0xbc8] sm:$0xff]
        %v517 = vld [vmem:[%s117 + $0xbd0] sm:$0xff]
        %v518 = vld [vmem:[%s117 + $0xbd8] sm:$0xff]
        %v519 = vld [vmem:[%s117 + $0xbe0] sm:$0xff]
        %v520 = vld [vmem:[%s117 + $0xbe8] sm:$0xff]
        %v521 = vld [vmem:[%s117 + $0xbf0] sm:$0xff]
        %v522 = vld [vmem:[%s117 + $0xbf8] sm:$0xff]
        %v523 = vld [vmem:[%s117 + $0xc00] sm:$0xff]
        %v524 = vld [vmem:[%s117 + $0xc08] sm:$0xff]
        %v525 = vld [vmem:[%s117 + $0xc10] sm:$0xff]
        %v526 = vld [vmem:[%s117 + $0xc18] sm:$0xff]
        %v527 = vld [vmem:[%s117 + $0xc20] sm:$0xff]
        %v528 = vld [vmem:[%s117 + $0xc28] sm:$0xff]
        %v529 = vld [vmem:[%s117 + $0xc30] sm:$0xff]
        %v530 = vld [vmem:[%s117 + $0xc38] sm:$0xff]
        %v531 = vld [vmem:[%s117 + $0xc40] sm:$0xff]
        %v532 = vld [vmem:[%s117 + $0xc48] sm:$0xff]
        %v533 = vld [vmem:[%s117 + $0xc50] sm:$0xff]
        %v534 = vld [vmem:[%s117 + $0xc58] sm:$0xff]
        %v535 = vld [vmem:[%s117 + $0xc60] sm:$0xff]
        %v536 = vld [vmem:[%s117 + $0xc68] sm:$0xff]
        %v537 = vld [vmem:[%s117 + $0xc70] sm:$0xff]
        %v538 = vld [vmem:[%s117 + $0xc78] sm:$0xff]
        %v539 = vld [vmem:[%s117 + $0xc80] sm:$0xff]
        %v540 = vld [vmem:[%s117 + $0xc88] sm:$0xff]
        %v541 = vld [vmem:[%s117 + $0xc90] sm:$0xff]
        %v542 = vld [vmem:[%s117 + $0xc98] sm:$0xff]
        %v543 = vld [vmem:[%s117 + $0xca0] sm:$0xff]
        %v544 = vld [vmem:[%s117 + $0xca8] sm:$0xff]
        %v545 = vld [vmem:[%s117 + $0xcb0] sm:$0xff]
        %v546 = vld [vmem:[%s117 + $0xcb8] sm:$0xff]
        %v547 = vld [vmem:[%s117 + $0xcc0] sm:$0xff]
        %v548 = vld [vmem:[%s117 + $0xcc8] sm:$0xff]
        %v549 = vld [vmem:[%s117 + $0xcd0] sm:$0xff]
        %v550 = vld [vmem:[%s117 + $0xcd8] sm:$0xff]
        %v551 = vld [vmem:[%s117 + $0xce0] sm:$0xff]
        %v552 = vld [vmem:[%s117 + $0xce8] sm:$0xff]
        %v553 = vld [vmem:[%s117 + $0xcf0] sm:$0xff]
        %v554 = vld [vmem:[%s117 + $0xcf8] sm:$0xff]
        %v555 = vld [vmem:[%s117 + $0xd00] sm:$0xff]
        %v556 = vld [vmem:[%s117 + $0xd08] sm:$0xff]
        %v557 = vld [vmem:[%s117 + $0xd10] sm:$0xff]
        %v558 = vld [vmem:[%s117 + $0xd18] sm:$0xff]
        %v559 = vld [vmem:[%s117 + $0xd20] sm:$0xff]
        %v560 = vld [vmem:[%s117 + $0xd28] sm:$0xff]
        %v561 = vld [vmem:[%s117 + $0xd30] sm:$0xff]
        %v562 = vld [vmem:[%s117 + $0xd38] sm:$0xff]
        %v563 = vld [vmem:[%s117 + $0xd40] sm:$0xff]
        %v564 = vld [vmem:[%s117 + $0xd48] sm:$0xff]
        %v565 = vld [vmem:[%s117 + $0xd50] sm:$0xff]
        %v566 = vld [vmem:[%s117 + $0xd58] sm:$0xff]
        %v567 = vld [vmem:[%s117 + $0xd60] sm:$0xff]
        %v568 = vld [vmem:[%s117 + $0xd68] sm:$0xff]
        %v569 = vld [vmem:[%s117 + $0xd70] sm:$0xff]
        %v570 = vld [vmem:[%s117 + $0xd78] sm:$0xff]
        %v571 = vld [vmem:[%s117 + $0xd80] sm:$0xff]
        %v572 = vld [vmem:[%s117 + $0xd88] sm:$0xff]
        %v573 = vld [vmem:[%s117 + $0xd90] sm:$0xff]
        %v574 = vld [vmem:[%s117 + $0xd98] sm:$0xff]
        %v575 = vld [vmem:[%s117 + $0xda0] sm:$0xff]
        %v576 = vld [vmem:[%s117 + $0xda8] sm:$0xff]
        %v577 = vld [vmem:[%s117 + $0xdb0] sm:$0xff]
        %v578 = vld [vmem:[%s117 + $0xdb8] sm:$0xff]
        %v579 = vld [vmem:[%s117 + $0xdc0] sm:$0xff]
        %v580 = vld [vmem:[%s117 + $0xdc8] sm:$0xff]
        %v581 = vld [vmem:[%s117 + $0xdd0] sm:$0xff]
        %v582 = vld [vmem:[%s117 + $0xdd8] sm:$0xff]
        %v583 = vld [vmem:[%s117 + $0xde0] sm:$0xff]
        %v584 = vld [vmem:[%s117 + $0xde8] sm:$0xff]
        %v585 = vld [vmem:[%s117 + $0xdf0] sm:$0xff]
        %v586 = vld [vmem:[%s117 + $0xdf8] sm:$0xff]
        %v587 = vld [vmem:[%s117 + $0xe00] sm:$0xff]
        %v588 = vld [vmem:[%s117 + $0xe08] sm:$0xff]
        %v589 = vld [vmem:[%s117 + $0xe10] sm:$0xff]
        %v590 = vld [vmem:[%s117 + $0xe18] sm:$0xff]
        %v591 = vld [vmem:[%s117 + $0xe20] sm:$0xff]
        %v592 = vld [vmem:[%s117 + $0xe28] sm:$0xff]
        %v593 = vld [vmem:[%s117 + $0xe30] sm:$0xff]
        %v594 = vld [vmem:[%s117 + $0xe38] sm:$0xff]
        %v595 = vld [vmem:[%s117 + $0xe40] sm:$0xff]
        %v596 = vld [vmem:[%s117 + $0xe48] sm:$0xff]
        %v597 = vld [vmem:[%s117 + $0xe50] sm:$0xff]
        %v598 = vld [vmem:[%s117 + $0xe58] sm:$0xff]
        %v599 = vld [vmem:[%s117 + $0xe60] sm:$0xff]
        %v600 = vld [vmem:[%s117 + $0xe68] sm:$0xff]
        %v601 = vld [vmem:[%s117 + $0xe70] sm:$0xff]
        %v602 = vld [vmem:[%s117 + $0xe78] sm:$0xff]
        %v603 = vld [vmem:[%s117 + $0xe80] sm:$0xff]
        %v604 = vld [vmem:[%s117 + $0xe88] sm:$0xff]
        %v605 = vld [vmem:[%s117 + $0xe90] sm:$0xff]
        %v606 = vld [vmem:[%s117 + $0xe98] sm:$0xff]
        %v607 = vld [vmem:[%s117 + $0xea0] sm:$0xff]
        %v608 = vld [vmem:[%s117 + $0xea8] sm:$0xff]
        %v609 = vld [vmem:[%s117 + $0xeb0] sm:$0xff]
        %v610 = vld [vmem:[%s117 + $0xeb8] sm:$0xff]
        %v611 = vld [vmem:[%s117 + $0xec0] sm:$0xff]
        %v612 = vld [vmem:[%s117 + $0xec8] sm:$0xff]
        %v613 = vld [vmem:[%s117 + $0xed0] sm:$0xff]
        %v614 = vld [vmem:[%s117 + $0xed8] sm:$0xff]
        %v615 = vld [vmem:[%s117 + $0xee0] sm:$0xff]
        %v616 = vld [vmem:[%s117 + $0xee8] sm:$0xff]
        %v617 = vld [vmem:[%s117 + $0xef0] sm:$0xff]
        %v618 = vld [vmem:[%s117 + $0xef8] sm:$0xff]
        %v619 = vld [vmem:[%s117 + $0xf00] sm:$0xff]
        %v620 = vld [vmem:[%s117 + $0xf08] sm:$0xff]
        %v621 = vld [vmem:[%s117 + $0xf10] sm:$0xff]
        %v622 = vld [vmem:[%s117 + $0xf18] sm:$0xff]
        %v623 = vld [vmem:[%s117 + $0xf20] sm:$0xff]
        %v624 = vld [vmem:[%s117 + $0xf28] sm:$0xff]
        %v625 = vld [vmem:[%s117 + $0xf30] sm:$0xff]
        %v626 = vld [vmem:[%s117 + $0xf38] sm:$0xff]
        %v627 = vld [vmem:[%s117 + $0xf40] sm:$0xff]
        %v628 = vld [vmem:[%s117 + $0xf48] sm:$0xff]
        %v629 = vld [vmem:[%s117 + $0xf50] sm:$0xff]
        %v630 = vld [vmem:[%s117 + $0xf58] sm:$0xff]
        %v631 = vld [vmem:[%s117 + $0xf60] sm:$0xff]
        %v632 = vld [vmem:[%s117 + $0xf68] sm:$0xff]
        %v633 = vld [vmem:[%s117 + $0xf70] sm:$0xff]
        %v634 = vld [vmem:[%s117 + $0xf78] sm:$0xff]
        %v635 = vld [vmem:[%s117 + $0xf80] sm:$0xff]
        %v636 = vld [vmem:[%s117 + $0xf88] sm:$0xff]
        %v637 = vld [vmem:[%s117 + $0xf90] sm:$0xff]
        %v638 = vld [vmem:[%s117 + $0xf98] sm:$0xff]
        %v639 = vld [vmem:[%s117 + $0xfa0] sm:$0xff]
        %v640 = vld [vmem:[%s117 + $0xfa8] sm:$0xff]
        %v641 = vld [vmem:[%s117 + $0xfb0] sm:$0xff]
        %v642 = vld [vmem:[%s117 + $0xfb8] sm:$0xff]
        %v643 = vld [vmem:[%s117 + $0xfc0] sm:$0xff]
        %v644 = vld [vmem:[%s117 + $0xfc8] sm:$0xff]
        %v645 = vld [vmem:[%s117 + $0xfd0] sm:$0xff]
        %v646 = vld [vmem:[%s117 + $0xfd8] sm:$0xff]
        %v647 = vld [vmem:[%s117 + $0xfe0] sm:$0xff]
        %v648 = vld [vmem:[%s117 + $0xfe8] sm:$0xff]
        %v649 = vld [vmem:[%s117 + $0xff0] sm:$0xff]
        %v650 = vld [vmem:[%s117 + $0xff8] sm:$0xff]
        %v651 = vld [vmem:[%s117 + $0x1000] sm:$0xff]
        %v652 = vld [vmem:[%s117 + $0x1008] sm:$0xff]
        %v653 = vld [vmem:[%s117 + $0x1010] sm:$0xff]
        %v654 = vld [vmem:[%s117 + $0x1018] sm:$0xff]
        %v655 = vld [vmem:[%s117 + $0x1020] sm:$0xff]
        %v656 = vld [vmem:[%s117 + $0x1028] sm:$0xff]
        %v657 = vld [vmem:[%s117 + $0x1030] sm:$0xff]
        %v658 = vld [vmem:[%s117 + $0x1038] sm:$0xff]
        %v659 = vld [vmem:[%s117 + $0x1040] sm:$0xff]
        %v660 = vld [vmem:[%s117 + $0x1048] sm:$0xff]
        %v661 = vld [vmem:[%s117 + $0x1050] sm:$0xff]
        %v662 = vld [vmem:[%s117 + $0x1058] sm:$0xff]
        %v663 = vld [vmem:[%s117 + $0x1060] sm:$0xff]
        %v664 = vld [vmem:[%s117 + $0x1068] sm:$0xff]
        %v665 = vld [vmem:[%s117 + $0x1070] sm:$0xff]
        %v666 = vld [vmem:[%s117 + $0x1078] sm:$0xff]
        %v667 = vld [vmem:[%s117 + $0x1080] sm:$0xff]
        %v668 = vld [vmem:[%s117 + $0x1088] sm:$0xff]
        %v669 = vld [vmem:[%s117 + $0x1090] sm:$0xff]
        %v670 = vld [vmem:[%s117 + $0x1098] sm:$0xff]
        %v671 = vld [vmem:[%s117 + $0x10a0] sm:$0xff]
        %v672 = vld [vmem:[%s117 + $0x10a8] sm:$0xff]
        %v673 = vld [vmem:[%s117 + $0x10b0] sm:$0xff]
        %v674 = vld [vmem:[%s117 + $0x10b8] sm:$0xff]
        %v675 = vld [vmem:[%s117 + $0x10c0] sm:$0xff]
        %v676 = vld [vmem:[%s117 + $0x10c8] sm:$0xff]
        %v677 = vld [vmem:[%s117 + $0x10d0] sm:$0xff]
        %v678 = vld [vmem:[%s117 + $0x10d8] sm:$0xff]
        %v679 = vld [vmem:[%s117 + $0x10e0] sm:$0xff]
        %v680 = vld [vmem:[%s117 + $0x10e8] sm:$0xff]
        %v681 = vld [vmem:[%s117 + $0x10f0] sm:$0xff]
        %v682 = vld [vmem:[%s117 + $0x10f8] sm:$0xff]
        %v683 = vld [vmem:[%s117 + $0x1100] sm:$0xff]
        %v684 = vld [vmem:[%s117 + $0x1108] sm:$0xff]
        %v685 = vld [vmem:[%s117 + $0x1110] sm:$0xff]
        %v686 = vld [vmem:[%s117 + $0x1118] sm:$0xff]
        %v687 = vld [vmem:[%s117 + $0x1120] sm:$0xff]
        %v688 = vld [vmem:[%s117 + $0x1128] sm:$0xff]
        %v689 = vld [vmem:[%s117 + $0x1130] sm:$0xff]
        %v690 = vld [vmem:[%s117 + $0x1138] sm:$0xff]
        %v691 = vld [vmem:[%s117 + $0x1140] sm:$0xff]
        %v692 = vld [vmem:[%s117 + $0x1148] sm:$0xff]
        %v693 = vld [vmem:[%s117 + $0x1150] sm:$0xff]
        %v694 = vld [vmem:[%s117 + $0x1158] sm:$0xff]
        %v695 = vld [vmem:[%s117 + $0x1160] sm:$0xff]
        %v696 = vld [vmem:[%s117 + $0x1168] sm:$0xff]
        %v697 = vld [vmem:[%s117 + $0x1170] sm:$0xff]
        %v698 = vld [vmem:[%s117 + $0x1178] sm:$0xff]
        %v699 = vld [vmem:[%s117 + $0x1180] sm:$0xff]
        %v700 = vld [vmem:[%s117 + $0x1188] sm:$0xff]
        %v701 = vld [vmem:[%s117 + $0x1190] sm:$0xff]
        %v702 = vld [vmem:[%s117 + $0x1198] sm:$0xff]
        %v703 = vld [vmem:[%s117 + $0x11a0] sm:$0xff]
        %v704 = vld [vmem:[%s117 + $0x11a8] sm:$0xff]
        %v705 = vld [vmem:[%s117 + $0x11b0] sm:$0xff]
        %v706 = vld [vmem:[%s117 + $0x11b8] sm:$0xff]
        %v707 = vld [vmem:[%s117 + $0x11c0] sm:$0xff]
        %v708 = vld [vmem:[%s117 + $0x11c8] sm:$0xff]
        %v709 = vld [vmem:[%s117 + $0x11d0] sm:$0xff]
        %v710 = vld [vmem:[%s117 + $0x11d8] sm:$0xff]
        %v711 = vld [vmem:[%s117 + $0x11e0] sm:$0xff]
        %v712 = vld [vmem:[%s117 + $0x11e8] sm:$0xff]
        %v713 = vld [vmem:[%s117 + $0x11f0] sm:$0xff]
        %v714 = vld [vmem:[%s117 + $0x11f8] sm:$0xff]
        %v715 = vld [vmem:[%s117 + $0x1200] sm:$0xff]
        %v716 = vld [vmem:[%s117 + $0x1208] sm:$0xff]
        %v717 = vld [vmem:[%s117 + $0x1210] sm:$0xff]
        %v718 = vld [vmem:[%s117 + $0x1218] sm:$0xff]
        %v719 = vld [vmem:[%s117 + $0x1220] sm:$0xff]
        %v720 = vld [vmem:[%s117 + $0x1228] sm:$0xff]
        %v721 = vld [vmem:[%s117 + $0x1230] sm:$0xff]
        %v722 = vld [vmem:[%s117 + $0x1238] sm:$0xff]
        %v723 = vld [vmem:[%s117 + $0x1240] sm:$0xff]
        %v724 = vld [vmem:[%s117 + $0x1248] sm:$0xff]
        %v725 = vld [vmem:[%s117 + $0x1250] sm:$0xff]
        %v726 = vld [vmem:[%s117 + $0x1258] sm:$0xff]
        %v727 = vld [vmem:[%s117 + $0x1260] sm:$0xff]
        %v728 = vld [vmem:[%s117 + $0x1268] sm:$0xff]
        %v729 = vld [vmem:[%s117 + $0x1270] sm:$0xff]
        %v730 = vld [vmem:[%s117 + $0x1278] sm:$0xff]
        %v731 = vld [vmem:[%s117 + $0x1280] sm:$0xff]
        %v732 = vld [vmem:[%s117 + $0x1288] sm:$0xff]
        %v733 = vld [vmem:[%s117 + $0x1290] sm:$0xff]
        %v734 = vld [vmem:[%s117 + $0x1298] sm:$0xff]
        %v735 = vld [vmem:[%s117 + $0x12a0] sm:$0xff]
        %v736 = vld [vmem:[%s117 + $0x12a8] sm:$0xff]
        %v737 = vld [vmem:[%s117 + $0x12b0] sm:$0xff]
        %v738 = vld [vmem:[%s117 + $0x12b8] sm:$0xff]
        %v739 = vld [vmem:[%s117 + $0x12c0] sm:$0xff]
        %v740 = vld [vmem:[%s117 + $0x12c8] sm:$0xff]
        %v741 = vld [vmem:[%s117 + $0x12d0] sm:$0xff]
        %v742 = vld [vmem:[%s117 + $0x12d8] sm:$0xff]
        %v743 = vld [vmem:[%s117 + $0x12e0] sm:$0xff]
        %v744 = vld [vmem:[%s117 + $0x12e8] sm:$0xff]
        %v745 = vld [vmem:[%s117 + $0x12f0] sm:$0xff]
        %v746 = vld [vmem:[%s117 + $0x12f8] sm:$0xff]
        %v747 = vld [vmem:[%s117 + $0x1300] sm:$0xff]
        %v748 = vld [vmem:[%s117 + $0x1308] sm:$0xff]
        %v749 = vld [vmem:[%s117 + $0x1310] sm:$0xff]
        %v750 = vld [vmem:[%s117 + $0x1318] sm:$0xff]
        %v751 = vld [vmem:[%s117 + $0x1320] sm:$0xff]
        %v752 = vld [vmem:[%s117 + $0x1328] sm:$0xff]
        %v753 = vld [vmem:[%s117 + $0x1330] sm:$0xff]
        %v754 = vld [vmem:[%s117 + $0x1338] sm:$0xff]
        %v755 = vld [vmem:[%s117 + $0x1340] sm:$0xff]
        %v756 = vld [vmem:[%s117 + $0x1348] sm:$0xff]
        %v757 = vld [vmem:[%s117 + $0x1350] sm:$0xff]
        %v758 = vld [vmem:[%s117 + $0x1358] sm:$0xff]
        %v759 = vld [vmem:[%s117 + $0x1360] sm:$0xff]
        %v760 = vld [vmem:[%s117 + $0x1368] sm:$0xff]
        %v761 = vld [vmem:[%s117 + $0x1370] sm:$0xff]
        %v762 = vld [vmem:[%s117 + $0x1378] sm:$0xff]
        %v763 = vld [vmem:[%s117 + $0x1380] sm:$0xff]
        %v764 = vld [vmem:[%s117 + $0x1388] sm:$0xff]
        %v765 = vld [vmem:[%s117 + $0x1390] sm:$0xff]
        %v766 = vld [vmem:[%s117 + $0x1398] sm:$0xff]
        %v767 = vld [vmem:[%s117 + $0x13a0] sm:$0xff]
        %v768 = vld [vmem:[%s117 + $0x13a8] sm:$0xff]
        %v769 = vld [vmem:[%s117 + $0x13b0] sm:$0xff]
        %v770 = vld [vmem:[%s117 + $0x13b8] sm:$0xff]
        %v771 = vld [vmem:[%s117 + $0x13c0] sm:$0xff]
        %v772 = vld [vmem:[%s117 + $0x13c8] sm:$0xff]
        %v773 = vld [vmem:[%s117 + $0x13d0] sm:$0xff]
        %v774 = vld [vmem:[%s117 + $0x13d8] sm:$0xff]
        %v775 = vld [vmem:[%s117 + $0x13e0] sm:$0xff]
        %v776 = vld [vmem:[%s117 + $0x13e8] sm:$0xff]
        %v777 = vld [vmem:[%s117 + $0x13f0] sm:$0xff]
        %v778 = vld [vmem:[%s117 + $0x13f8] sm:$0xff]
        %v779 = vld [vmem:[%s117 + $0x1400] sm:$0xff]
        %v780 = vld [vmem:[%s117 + $0x1408] sm:$0xff]
        %v781 = vld [vmem:[%s117 + $0x1410] sm:$0xff]
        %v782 = vld [vmem:[%s117 + $0x1418] sm:$0xff]
        %v783 = vld [vmem:[%s117 + $0x1420] sm:$0xff]
        %v784 = vld [vmem:[%s117 + $0x1428] sm:$0xff]
        %v785 = vld [vmem:[%s117 + $0x1430] sm:$0xff]
        %v786 = vld [vmem:[%s117 + $0x1438] sm:$0xff]
        %v787 = vld [vmem:[%s117 + $0x1440] sm:$0xff]
        %v788 = vld [vmem:[%s117 + $0x1448] sm:$0xff]
        %v789 = vld [vmem:[%s117 + $0x1450] sm:$0xff]
        %v790 = vld [vmem:[%s117 + $0x1458] sm:$0xff]
        %v791 = vld [vmem:[%s117 + $0x1460] sm:$0xff]
        %v792 = vld [vmem:[%s117 + $0x1468] sm:$0xff]
        %v793 = vld [vmem:[%s117 + $0x1470] sm:$0xff]
        %v794 = vld [vmem:[%s117 + $0x1478] sm:$0xff]
        %v795 = vld [vmem:[%s117 + $0x1480] sm:$0xff]
        %v796 = vld [vmem:[%s117 + $0x1488] sm:$0xff]
        %v797 = vld [vmem:[%s117 + $0x1490] sm:$0xff]
        %v798 = vld [vmem:[%s117 + $0x1498] sm:$0xff]
        %v799 = vld [vmem:[%s117 + $0x14a0] sm:$0xff]
        %v800 = vld [vmem:[%s117 + $0x14a8] sm:$0xff]
        %v801 = vld [vmem:[%s117 + $0x14b0] sm:$0xff]
        %v802 = vld [vmem:[%s117 + $0x14b8] sm:$0xff]
        %v803 = vld [vmem:[%s117 + $0x14c0] sm:$0xff]
        %v804 = vld [vmem:[%s117 + $0x14c8] sm:$0xff]
        %v805 = vld [vmem:[%s117 + $0x14d0] sm:$0xff]
        %v806 = vld [vmem:[%s117 + $0x14d8] sm:$0xff]
        %v807 = vld [vmem:[%s117 + $0x14e0] sm:$0xff]
        %v808 = vld [vmem:[%s117 + $0x14e8] sm:$0xff]
        %v809 = vld [vmem:[%s117 + $0x14f0] sm:$0xff]
        %v810 = vld [vmem:[%s117 + $0x14f8] sm:$0xff]
        %v811 = vld [vmem:[%s117 + $0x1500] sm:$0xff]
        %v812 = vld [vmem:[%s117 + $0x1508] sm:$0xff]
        %v813 = vld [vmem:[%s117 + $0x1510] sm:$0xff]
        %v814 = vld [vmem:[%s117 + $0x1518] sm:$0xff]
        %v815 = vld [vmem:[%s117 + $0x1520] sm:$0xff]
        %v816 = vld [vmem:[%s117 + $0x1528] sm:$0xff]
        %v817 = vld [vmem:[%s117 + $0x1530] sm:$0xff]
        %v818 = vld [vmem:[%s117 + $0x1538] sm:$0xff]
        %v819 = vld [vmem:[%s117 + $0x1540] sm:$0xff]
        %v820 = vld [vmem:[%s117 + $0x1548] sm:$0xff]
        %v821 = vld [vmem:[%s117 + $0x1550] sm:$0xff]
        %v822 = vld [vmem:[%s117 + $0x1558] sm:$0xff]
        %v823 = vld [vmem:[%s117 + $0x1560] sm:$0xff]
        %v824 = vld [vmem:[%s117 + $0x1568] sm:$0xff]
        %v825 = vld [vmem:[%s117 + $0x1570] sm:$0xff]
        %v826 = vld [vmem:[%s117 + $0x1578] sm:$0xff]
        %v827 = vld [vmem:[%s117 + $0x1580] sm:$0xff]
        %v828 = vld [vmem:[%s117 + $0x1588] sm:$0xff]
        %v829 = vld [vmem:[%s117 + $0x1590] sm:$0xff]
        %v830 = vld [vmem:[%s117 + $0x1598] sm:$0xff]
        %v831 = vld [vmem:[%s117 + $0x15a0] sm:$0xff]
        %v832 = vld [vmem:[%s117 + $0x15a8] sm:$0xff]
        %v833 = vld [vmem:[%s117 + $0x15b0] sm:$0xff]
        %v834 = vld [vmem:[%s117 + $0x15b8] sm:$0xff]
        %v835 = vld [vmem:[%s117 + $0x15c0] sm:$0xff]
        %v836 = vld [vmem:[%s117 + $0x15c8] sm:$0xff]
        %v837 = vld [vmem:[%s117 + $0x15d0] sm:$0xff]
        %v838 = vld [vmem:[%s117 + $0x15d8] sm:$0xff]
        %v839 = vld [vmem:[%s117 + $0x15e0] sm:$0xff]
        %v840 = vld [vmem:[%s117 + $0x15e8] sm:$0xff]
        %v841 = vld [vmem:[%s117 + $0x15f0] sm:$0xff]
        %v842 = vld [vmem:[%s117 + $0x15f8] sm:$0xff]
        %v843 = vld [vmem:[%s117 + $0x1600] sm:$0xff]
        %v844 = vld [vmem:[%s117 + $0x1608] sm:$0xff]
        %v845 = vld [vmem:[%s117 + $0x1610] sm:$0xff]
        %v846 = vld [vmem:[%s117 + $0x1618] sm:$0xff]
        %v847 = vld [vmem:[%s117 + $0x1620] sm:$0xff]
        %v848 = vld [vmem:[%s117 + $0x1628] sm:$0xff]
        %v849 = vld [vmem:[%s117 + $0x1630] sm:$0xff]
        %v850 = vld [vmem:[%s117 + $0x1638] sm:$0xff]
        %v851 = vld [vmem:[%s117 + $0x1640] sm:$0xff]
        %v852 = vld [vmem:[%s117 + $0x1648] sm:$0xff]
        %v853 = vld [vmem:[%s117 + $0x1650] sm:$0xff]
        %v854 = vld [vmem:[%s117 + $0x1658] sm:$0xff]
        %v855 = vld [vmem:[%s117 + $0x1660] sm:$0xff]
        %v856 = vld [vmem:[%s117 + $0x1668] sm:$0xff]
        %v857 = vld [vmem:[%s117 + $0x1670] sm:$0xff]
        %v858 = vld [vmem:[%s117 + $0x1678] sm:$0xff]
        %v859 = vld [vmem:[%s117 + $0x1680] sm:$0xff]
        %v860 = vld [vmem:[%s117 + $0x1688] sm:$0xff]
        %v861 = vld [vmem:[%s117 + $0x1690] sm:$0xff]
        %v862 = vld [vmem:[%s117 + $0x1698] sm:$0xff]
        %v863 = vld [vmem:[%s117 + $0x16a0] sm:$0xff]
        %v864 = vld [vmem:[%s117 + $0x16a8] sm:$0xff]
        %v865 = vld [vmem:[%s117 + $0x16b0] sm:$0xff]
        %v866 = vld [vmem:[%s117 + $0x16b8] sm:$0xff]
        %v867 = vld [vmem:[%s117 + $0x16c0] sm:$0xff]
        %v868 = vld [vmem:[%s117 + $0x16c8] sm:$0xff]
        %v869 = vld [vmem:[%s117 + $0x16d0] sm:$0xff]
        %v870 = vld [vmem:[%s117 + $0x16d8] sm:$0xff]
        %v871 = vld [vmem:[%s117 + $0x16e0] sm:$0xff]
        %v872 = vld [vmem:[%s117 + $0x16e8] sm:$0xff]
        %v873 = vld [vmem:[%s117 + $0x16f0] sm:$0xff]
        %v874 = vld [vmem:[%s117 + $0x16f8] sm:$0xff]
        %v875 = vld [vmem:[%s117 + $0x1700] sm:$0xff]
        %v876 = vld [vmem:[%s117 + $0x1708] sm:$0xff]
        %v877 = vld [vmem:[%s117 + $0x1710] sm:$0xff]
        %v878 = vld [vmem:[%s117 + $0x1718] sm:$0xff]
        %v879 = vld [vmem:[%s117 + $0x1720] sm:$0xff]
        %v880 = vld [vmem:[%s117 + $0x1728] sm:$0xff]
        %v881 = vld [vmem:[%s117 + $0x1730] sm:$0xff]
        %v882 = vld [vmem:[%s117 + $0x1738] sm:$0xff]
        %v883 = vld [vmem:[%s117 + $0x1740] sm:$0xff]
        %v884 = vld [vmem:[%s117 + $0x1748] sm:$0xff]
        %v885 = vld [vmem:[%s117 + $0x1750] sm:$0xff]
        %v886 = vld [vmem:[%s117 + $0x1758] sm:$0xff]
        %v887 = vld [vmem:[%s117 + $0x1760] sm:$0xff]
        %v888 = vld [vmem:[%s117 + $0x1768] sm:$0xff]
        %v889 = vld [vmem:[%s117 + $0x1770] sm:$0xff]
        %v890 = vld [vmem:[%s117 + $0x1778] sm:$0xff]
        %v891 = vld [vmem:[%s117 + $0x1780] sm:$0xff]
        %v892 = vld [vmem:[%s117 + $0x1788] sm:$0xff]
        %v893 = vld [vmem:[%s117 + $0x1790] sm:$0xff]
        %v894 = vld [vmem:[%s117 + $0x1798] sm:$0xff]
        %v895 = vld [vmem:[%s117 + $0x17a0] sm:$0xff]
        %v896 = vld [vmem:[%s117 + $0x17a8] sm:$0xff]
        %v897 = vld [vmem:[%s117 + $0x17b0] sm:$0xff]
        %v898 = vld [vmem:[%s117 + $0x17b8] sm:$0xff]
        %v899 = vld [vmem:[%s117 + $0x17c0] sm:$0xff]
        %v900 = vld [vmem:[%s117 + $0x17c8] sm:$0xff]
        %v901 = vld [vmem:[%s117 + $0x17d0] sm:$0xff]
        %v902 = vld [vmem:[%s117 + $0x17d8] sm:$0xff]
        %v903 = vld [vmem:[%s117 + $0x17e0] sm:$0xff]
        %v904 = vld [vmem:[%s117 + $0x17e8] sm:$0xff]
        %v905 = vld [vmem:[%s117 + $0x17f0] sm:$0xff]
        %v906 = vld [vmem:[%s117 + $0x17f8] sm:$0xff]
        %v907 = vld [vmem:[%s117 + $0x1800] sm:$0xff]
        %v908 = vld [vmem:[%s117 + $0x1808] sm:$0xff]
        %v909 = vld [vmem:[%s117 + $0x1810] sm:$0xff]
        %v910 = vld [vmem:[%s117 + $0x1818] sm:$0xff]
        %v911 = vld [vmem:[%s117 + $0x1820] sm:$0xff]
        %v912 = vld [vmem:[%s117 + $0x1828] sm:$0xff]
        %v913 = vld [vmem:[%s117 + $0x1830] sm:$0xff]
        %v914 = vld [vmem:[%s117 + $0x1838] sm:$0xff]
        %v915 = vld [vmem:[%s117 + $0x1840] sm:$0xff]
        %v916 = vld [vmem:[%s117 + $0x1848] sm:$0xff]
        %v917 = vld [vmem:[%s117 + $0x1850] sm:$0xff]
        %v918 = vld [vmem:[%s117 + $0x1858] sm:$0xff]
        %v919 = vld [vmem:[%s117 + $0x1860] sm:$0xff]
        %v920 = vld [vmem:[%s117 + $0x1868] sm:$0xff]
        %v921 = vld [vmem:[%s117 + $0x1870] sm:$0xff]
        %v922 = vld [vmem:[%s117 + $0x1878] sm:$0xff]
        %v923 = vld [vmem:[%s117 + $0x1880] sm:$0xff]
        %v924 = vld [vmem:[%s117 + $0x1888] sm:$0xff]
        %v925 = vld [vmem:[%s117 + $0x1890] sm:$0xff]
        %v926 = vld [vmem:[%s117 + $0x1898] sm:$0xff]
        %v927 = vld [vmem:[%s117 + $0x18a0] sm:$0xff]
        %v928 = vld [vmem:[%s117 + $0x18a8] sm:$0xff]
        %v929 = vld [vmem:[%s117 + $0x18b0] sm:$0xff]
        %v930 = vld [vmem:[%s117 + $0x18b8] sm:$0xff]
        %v931 = vld [vmem:[%s117 + $0x18c0] sm:$0xff]
        %v932 = vld [vmem:[%s117 + $0x18c8] sm:$0xff]
        %v933 = vld [vmem:[%s117 + $0x18d0] sm:$0xff]
        %v934 = vld [vmem:[%s117 + $0x18d8] sm:$0xff]
        %v935 = vld [vmem:[%s117 + $0x18e0] sm:$0xff]
        %v936 = vld [vmem:[%s117 + $0x18e8] sm:$0xff]
        %v937 = vld [vmem:[%s117 + $0x18f0] sm:$0xff]
        %v938 = vld [vmem:[%s117 + $0x18f8] sm:$0xff]
        %v939 = vld [vmem:[%s117 + $0x1900] sm:$0xff]
        %v940 = vld [vmem:[%s117 + $0x1908] sm:$0xff]
        %v941 = vld [vmem:[%s117 + $0x1910] sm:$0xff]
        %v942 = vld [vmem:[%s117 + $0x1918] sm:$0xff]
        %v943 = vld [vmem:[%s117 + $0x1920] sm:$0xff]
        %v944 = vld [vmem:[%s117 + $0x1928] sm:$0xff]
        %v945 = vld [vmem:[%s117 + $0x1930] sm:$0xff]
        %v946 = vld [vmem:[%s117 + $0x1938] sm:$0xff]
        %v947 = vld [vmem:[%s117 + $0x1940] sm:$0xff]
        %v948 = vld [vmem:[%s117 + $0x1948] sm:$0xff]
        %v949 = vld [vmem:[%s117 + $0x1950] sm:$0xff]
        %v950 = vld [vmem:[%s117 + $0x1958] sm:$0xff]
        %v951 = vld [vmem:[%s117 + $0x1960] sm:$0xff]
        %v952 = vld [vmem:[%s117 + $0x1968] sm:$0xff]
        %v953 = vld [vmem:[%s117 + $0x1970] sm:$0xff]
        %v954 = vld [vmem:[%s117 + $0x1978] sm:$0xff]
        %v955 = vld [vmem:[%s117 + $0x1980] sm:$0xff]
        %v956 = vld [vmem:[%s117 + $0x1988] sm:$0xff]
        %v957 = vld [vmem:[%s117 + $0x1990] sm:$0xff]
        %v958 = vld [vmem:[%s117 + $0x1998] sm:$0xff]
        %v959 = vld [vmem:[%s117 + $0x19a0] sm:$0xff]
        %v960 = vld [vmem:[%s117 + $0x19a8] sm:$0xff]
        %v961 = vld [vmem:[%s117 + $0x19b0] sm:$0xff]
        %v962 = vld [vmem:[%s117 + $0x19b8] sm:$0xff]
        %v963 = vld [vmem:[%s117 + $0x19c0] sm:$0xff]
        %v964 = vld [vmem:[%s117 + $0x19c8] sm:$0xff]
        %v965 = vld [vmem:[%s117 + $0x19d0] sm:$0xff]
        %v966 = vld [vmem:[%s117 + $0x19d8] sm:$0xff]
        %v967 = vld [vmem:[%s117 + $0x19e0] sm:$0xff]
        %v968 = vld [vmem:[%s117 + $0x19e8] sm:$0xff]
        %v969 = vld [vmem:[%s117 + $0x19f0] sm:$0xff]
        %v970 = vld [vmem:[%s117 + $0x19f8] sm:$0xff]
        %v971 = vld [vmem:[%s117 + $0x1a00] sm:$0xff]
        %v972 = vld [vmem:[%s117 + $0x1a08] sm:$0xff]
        %v973 = vld [vmem:[%s117 + $0x1a10] sm:$0xff]
        %v974 = vld [vmem:[%s117 + $0x1a18] sm:$0xff]
        %v975 = vld [vmem:[%s117 + $0x1a20] sm:$0xff]
        %v976 = vld [vmem:[%s117 + $0x1a28] sm:$0xff]
        %v977 = vld [vmem:[%s117 + $0x1a30] sm:$0xff]
        %v978 = vld [vmem:[%s117 + $0x1a38] sm:$0xff]
        %v979 = vld [vmem:[%s117 + $0x1a40] sm:$0xff]
        %v980 = vld [vmem:[%s117 + $0x1a48] sm:$0xff]
        %v981 = vld [vmem:[%s117 + $0x1a50] sm:$0xff]
        %v982 = vld [vmem:[%s117 + $0x1a58] sm:$0xff]
        %v983 = vld [vmem:[%s117 + $0x1a60] sm:$0xff]
        %v984 = vld [vmem:[%s117 + $0x1a68] sm:$0xff]
        %v985 = vld [vmem:[%s117 + $0x1a70] sm:$0xff]
        %v986 = vld [vmem:[%s117 + $0x1a78] sm:$0xff]
        %v987 = vld [vmem:[%s117 + $0x1a80] sm:$0xff]
        %v988 = vld [vmem:[%s117 + $0x1a88] sm:$0xff]
        %v989 = vld [vmem:[%s117 + $0x1a90] sm:$0xff]
        %v990 = vld [vmem:[%s117 + $0x1a98] sm:$0xff]
        %v991 = vld [vmem:[%s117 + $0x1aa0] sm:$0xff]
        %v992 = vld [vmem:[%s117 + $0x1aa8] sm:$0xff]
        %v993 = vld [vmem:[%s117 + $0x1ab0] sm:$0xff]
        %v994 = vld [vmem:[%s117 + $0x1ab8] sm:$0xff]
        %v995 = vld [vmem:[%s117 + $0x1ac0] sm:$0xff]
        %v996 = vld [vmem:[%s117 + $0x1ac8] sm:$0xff]
        %v997 = vld [vmem:[%s117 + $0x1ad0] sm:$0xff]
        %v998 = vld [vmem:[%s117 + $0x1ad8] sm:$0xff]
        %v999 = vld [vmem:[%s117 + $0x1ae0] sm:$0xff]
        %v1000 = vld [vmem:[%s117 + $0x1ae8] sm:$0xff]
        %v1001 = vld [vmem:[%s117 + $0x1af0] sm:$0xff]
        %v1002 = vld [vmem:[%s117 + $0x1af8] sm:$0xff]
        %v1003 = vld [vmem:[%s117 + $0x1b00] sm:$0xff]
        %v1004 = vld [vmem:[%s117 + $0x1b08] sm:$0xff]
        %v1005 = vld [vmem:[%s117 + $0x1b10] sm:$0xff]
        %v1006 = vld [vmem:[%s117 + $0x1b18] sm:$0xff]
        %v1007 = vld [vmem:[%s117 + $0x1b20] sm:$0xff]
        %v1008 = vld [vmem:[%s117 + $0x1b28] sm:$0xff]
        %v1009 = vld [vmem:[%s117 + $0x1b30] sm:$0xff]
        %v1010 = vld [vmem:[%s117 + $0x1b38] sm:$0xff]
        %v1011 = vld [vmem:[%s117 + $0x1b40] sm:$0xff]
        %v1012 = vld [vmem:[%s117 + $0x1b48] sm:$0xff]
        %v1013 = vld [vmem:[%s117 + $0x1b50] sm:$0xff]
        %v1014 = vld [vmem:[%s117 + $0x1b58] sm:$0xff]
        %v1015 = vld [vmem:[%s117 + $0x1b60] sm:$0xff]
        %v1016 = vld [vmem:[%s117 + $0x1b68] sm:$0xff]
        %v1017 = vld [vmem:[%s117 + $0x1b70] sm:$0xff]
        %v1018 = vld [vmem:[%s117 + $0x1b78] sm:$0xff]
        %v1019 = vld [vmem:[%s117 + $0x1b80] sm:$0xff]
        %v1020 = vld [vmem:[%s117 + $0x1b88] sm:$0xff]
        %v1021 = vmax.f32 %v139, 0.0
        %v1022 = vmax.f32 %v140, 0.0
        %v1023 = vmax.f32 %v141, 0.0
        %v1024 = vmax.f32 %v142, 0.0
        %v1025 = vmax.f32 %v143, 0.0
        %v1026 = vmax.f32 %v144, 0.0
        %v1027 = vmax.f32 %v145, 0.0
        %v1028 = vmax.f32 %v146, 0.0
        %v1029 = vmax.f32 %v147, 0.0
        %v1030 = vmax.f32 %v148, 0.0
        %v1031 = vmax.f32 %v149, 0.0
        %v1032 = vmax.f32 %v150, 0.0
        %v1033 = vmax.f32 %v151, 0.0
        %v1034 = vmax.f32 %v152, 0.0
        %v1035 = vmax.f32 %v153, 0.0
        %v1036 = vmax.f32 %v154, 0.0
        %v1037 = vmax.f32 %v155, 0.0
        %v1038 = vmax.f32 %v156, 0.0
        %v1039 = vmax.f32 %v157, 0.0
        %v1040 = vmax.f32 %v158, 0.0
        %v1041 = vmax.f32 %v159, 0.0
        %v1042 = vmax.f32 %v160, 0.0
        %v1043 = vmax.f32 %v161, 0.0
        %v1044 = vmax.f32 %v162, 0.0
        %v1045 = vmax.f32 %v163, 0.0
        %v1046 = vmax.f32 %v164, 0.0
        %v1047 = vmax.f32 %v165, 0.0
        %v1048 = vmax.f32 %v166, 0.0
        %v1049 = vmax.f32 %v167, 0.0
        %v1050 = vmax.f32 %v168, 0.0
        %v1051 = vmax.f32 %v169, 0.0
        %v1052 = vmax.f32 %v170, 0.0
        %v1053 = vmax.f32 %v171, 0.0
        %v1054 = vmax.f32 %v172, 0.0
        %v1055 = vmax.f32 %v173, 0.0
        %v1056 = vmax.f32 %v174, 0.0
        %v1057 = vmax.f32 %v175, 0.0
        %v1058 = vmax.f32 %v176, 0.0
        %v1059 = vmax.f32 %v177, 0.0
        %v1060 = vmax.f32 %v178, 0.0
        %v1061 = vmax.f32 %v179, 0.0
        %v1062 = vmax.f32 %v180, 0.0
        %v1063 = vmax.f32 %v181, 0.0
        %v1064 = vmax.f32 %v182, 0.0
        %v1065 = vmax.f32 %v183, 0.0
        %v1066 = vmax.f32 %v184, 0.0
        %v1067 = vmax.f32 %v185, 0.0
        %v1068 = vmax.f32 %v186, 0.0
        %v1069 = vmax.f32 %v187, 0.0
        %v1070 = vmax.f32 %v188, 0.0
        %v1071 = vmax.f32 %v189, 0.0
        %v1072 = vmax.f32 %v190, 0.0
        %v1073 = vmax.f32 %v191, 0.0
        %v1074 = vmax.f32 %v192, 0.0
        %v1075 = vmax.f32 %v193, 0.0
        %v1076 = vmax.f32 %v194, 0.0
        %v1077 = vmax.f32 %v195, 0.0
        %v1078 = vmax.f32 %v196, 0.0
        %v1079 = vmax.f32 %v197, 0.0
        %v1080 = vmax.f32 %v198, 0.0
        %v1081 = vmax.f32 %v199, 0.0
        %v1082 = vmax.f32 %v200, 0.0
        %v1083 = vmax.f32 %v201, 0.0
        %v1084 = vmax.f32 %v202, 0.0
        %v1085 = vmax.f32 %v203, 0.0
        %v1086 = vmax.f32 %v204, 0.0
        %v1087 = vmax.f32 %v205, 0.0
        %v1088 = vmax.f32 %v206, 0.0
        %v1089 = vmax.f32 %v207, 0.0
        %v1090 = vmax.f32 %v208, 0.0
        %v1091 = vmax.f32 %v209, 0.0
        %v1092 = vmax.f32 %v210, 0.0
        %v1093 = vmax.f32 %v211, 0.0
        %v1094 = vmax.f32 %v212, 0.0
        %v1095 = vmax.f32 %v213, 0.0
        %v1096 = vmax.f32 %v214, 0.0
        %v1097 = vmax.f32 %v215, 0.0
        %v1098 = vmax.f32 %v216, 0.0
        %v1099 = vmax.f32 %v217, 0.0
        %v1100 = vmax.f32 %v218, 0.0
        %v1101 = vmax.f32 %v219, 0.0
        %v1102 = vmax.f32 %v220, 0.0
        %v1103 = vmax.f32 %v221, 0.0
        %v1104 = vmax.f32 %v222, 0.0
        %v1105 = vmax.f32 %v223, 0.0
        %v1106 = vmax.f32 %v224, 0.0
        %v1107 = vmax.f32 %v225, 0.0
        %v1108 = vmax.f32 %v226, 0.0
        %v1109 = vmax.f32 %v227, 0.0
        %v1110 = vmax.f32 %v228, 0.0
        %v1111 = vmax.f32 %v229, 0.0
        %v1112 = vmax.f32 %v230, 0.0
        %v1113 = vmax.f32 %v231, 0.0
        %v1114 = vmax.f32 %v232, 0.0
        %v1115 = vmax.f32 %v233, 0.0
        %v1116 = vmax.f32 %v234, 0.0
        %v1117 = vmax.f32 %v235, 0.0
        %v1118 = vmax.f32 %v236, 0.0
        %v1119 = vmax.f32 %v237, 0.0
        %v1120 = vmax.f32 %v238, 0.0
        %v1121 = vmax.f32 %v239, 0.0
        %v1122 = vmax.f32 %v240, 0.0
        %v1123 = vmax.f32 %v241, 0.0
        %v1124 = vmax.f32 %v242, 0.0
        %v1125 = vmax.f32 %v243, 0.0
        %v1126 = vmax.f32 %v244, 0.0
        %v1127 = vmax.f32 %v245, 0.0
        %v1128 = vmax.f32 %v246, 0.0
        %v1129 = vmax.f32 %v247, 0.0
        %v1130 = vmax.f32 %v248, 0.0
        %v1131 = vmax.f32 %v249, 0.0
        %v1132 = vmax.f32 %v250, 0.0
        %v1133 = vmax.f32 %v251, 0.0
        %v1134 = vmax.f32 %v252, 0.0
        %v1135 = vmax.f32 %v253, 0.0
        %v1136 = vmax.f32 %v254, 0.0
        %v1137 = vmax.f32 %v255, 0.0
        %v1138 = vmax.f32 %v256, 0.0
        %v1139 = vmax.f32 %v257, 0.0
        %v1140 = vmax.f32 %v258, 0.0
        %v1141 = vmax.f32 %v259, 0.0
        %v1142 = vmax.f32 %v260, 0.0
        %v1143 = vmax.f32 %v261, 0.0
        %v1144 = vmax.f32 %v262, 0.0
        %v1145 = vmax.f32 %v263, 0.0
        %v1146 = vmax.f32 %v264, 0.0
        %v1147 = vmax.f32 %v265, 0.0
        %v1148 = vmax.f32 %v266, 0.0
        %v1149 = vmax.f32 %v267, 0.0
        %v1150 = vmax.f32 %v268, 0.0
        %v1151 = vmax.f32 %v269, 0.0
        %v1152 = vmax.f32 %v270, 0.0
        %v1153 = vmax.f32 %v271, 0.0
        %v1154 = vmax.f32 %v272, 0.0
        %v1155 = vmax.f32 %v273, 0.0
        %v1156 = vmax.f32 %v274, 0.0
        %v1157 = vmax.f32 %v275, 0.0
        %v1158 = vmax.f32 %v276, 0.0
        %v1159 = vmax.f32 %v277, 0.0
        %v1160 = vmax.f32 %v278, 0.0
        %v1161 = vmax.f32 %v279, 0.0
        %v1162 = vmax.f32 %v280, 0.0
        %v1163 = vmax.f32 %v281, 0.0
        %v1164 = vmax.f32 %v282, 0.0
        %v1165 = vmax.f32 %v283, 0.0
        %v1166 = vmax.f32 %v284, 0.0
        %v1167 = vmax.f32 %v285, 0.0
        %v1168 = vmax.f32 %v286, 0.0
        %v1169 = vmax.f32 %v287, 0.0
        %v1170 = vmax.f32 %v288, 0.0
        %v1171 = vmax.f32 %v289, 0.0
        %v1172 = vmax.f32 %v290, 0.0
        %v1173 = vmax.f32 %v291, 0.0
        %v1174 = vmax.f32 %v292, 0.0
        %v1175 = vmax.f32 %v293, 0.0
        %v1176 = vmax.f32 %v294, 0.0
        %v1177 = vmax.f32 %v295, 0.0
        %v1178 = vmax.f32 %v296, 0.0
        %v1179 = vmax.f32 %v297, 0.0
        %v1180 = vmax.f32 %v298, 0.0
        %v1181 = vmax.f32 %v299, 0.0
        %v1182 = vmax.f32 %v300, 0.0
        %v1183 = vmax.f32 %v301, 0.0
        %v1184 = vmax.f32 %v302, 0.0
        %v1185 = vmax.f32 %v303, 0.0
        %v1186 = vmax.f32 %v304, 0.0
        %v1187 = vmax.f32 %v305, 0.0
        %v1188 = vmax.f32 %v306, 0.0
        %v1189 = vmax.f32 %v307, 0.0
        %v1190 = vmax.f32 %v308, 0.0
        %v1191 = vmax.f32 %v309, 0.0
        %v1192 = vmax.f32 %v310, 0.0
        %v1193 = vmax.f32 %v311, 0.0
        %v1194 = vmax.f32 %v312, 0.0
        %v1195 = vmax.f32 %v313, 0.0
        %v1196 = vmax.f32 %v314, 0.0
        %v1197 = vmax.f32 %v315, 0.0
        %v1198 = vmax.f32 %v316, 0.0
        %v1199 = vmax.f32 %v317, 0.0
        %v1200 = vmax.f32 %v318, 0.0
        %v1201 = vmax.f32 %v319, 0.0
        %v1202 = vmax.f32 %v320, 0.0
        %v1203 = vmax.f32 %v321, 0.0
        %v1204 = vmax.f32 %v322, 0.0
        %v1205 = vmax.f32 %v323, 0.0
        %v1206 = vmax.f32 %v324, 0.0
        %v1207 = vmax.f32 %v325, 0.0
        %v1208 = vmax.f32 %v326, 0.0
        %v1209 = vmax.f32 %v327, 0.0
        %v1210 = vmax.f32 %v328, 0.0
        %v1211 = vmax.f32 %v329, 0.0
        %v1212 = vmax.f32 %v330, 0.0
        %v1213 = vmax.f32 %v331, 0.0
        %v1214 = vmax.f32 %v332, 0.0
        %v1215 = vmax.f32 %v333, 0.0
        %v1216 = vmax.f32 %v334, 0.0
        %v1217 = vmax.f32 %v335, 0.0
        %v1218 = vmax.f32 %v336, 0.0
        %v1219 = vmax.f32 %v337, 0.0
        %v1220 = vmax.f32 %v338, 0.0
        %v1221 = vmax.f32 %v339, 0.0
        %v1222 = vmax.f32 %v340, 0.0
        %v1223 = vmax.f32 %v341, 0.0
        %v1224 = vmax.f32 %v342, 0.0
        %v1225 = vmax.f32 %v343, 0.0
        %v1226 = vmax.f32 %v344, 0.0
        %v1227 = vmax.f32 %v345, 0.0
        %v1228 = vmax.f32 %v346, 0.0
        %v1229 = vmax.f32 %v347, 0.0
        %v1230 = vmax.f32 %v348, 0.0
        %v1231 = vmax.f32 %v349, 0.0
        %v1232 = vmax.f32 %v350, 0.0
        %v1233 = vmax.f32 %v351, 0.0
        %v1234 = vmax.f32 %v352, 0.0
        %v1235 = vmax.f32 %v353, 0.0
        %v1236 = vmax.f32 %v354, 0.0
        %v1237 = vmax.f32 %v355, 0.0
        %v1238 = vmax.f32 %v356, 0.0
        %v1239 = vmax.f32 %v357, 0.0
        %v1240 = vmax.f32 %v358, 0.0
        %v1241 = vmax.f32 %v359, 0.0
        %v1242 = vmax.f32 %v360, 0.0
        %v1243 = vmax.f32 %v361, 0.0
        %v1244 = vmax.f32 %v362, 0.0
        %v1245 = vmax.f32 %v363, 0.0
        %v1246 = vmax.f32 %v364, 0.0
        %v1247 = vmax.f32 %v365, 0.0
        %v1248 = vmax.f32 %v366, 0.0
        %v1249 = vmax.f32 %v367, 0.0
        %v1250 = vmax.f32 %v368, 0.0
        %v1251 = vmax.f32 %v369, 0.0
        %v1252 = vmax.f32 %v370, 0.0
        %v1253 = vmax.f32 %v371, 0.0
        %v1254 = vmax.f32 %v372, 0.0
        %v1255 = vmax.f32 %v373, 0.0
        %v1256 = vmax.f32 %v374, 0.0
        %v1257 = vmax.f32 %v375, 0.0
        %v1258 = vmax.f32 %v376, 0.0
        %v1259 = vmax.f32 %v377, 0.0
        %v1260 = vmax.f32 %v378, 0.0
        %v1261 = vmax.f32 %v379, 0.0
        %v1262 = vmax.f32 %v380, 0.0
        %v1263 = vmax.f32 %v381, 0.0
        %v1264 = vmax.f32 %v382, 0.0
        %v1265 = vmax.f32 %v383, 0.0
        %v1266 = vmax.f32 %v384, 0.0
        %v1267 = vmax.f32 %v385, 0.0
        %v1268 = vmax.f32 %v386, 0.0
        %v1269 = vmax.f32 %v387, 0.0
        %v1270 = vmax.f32 %v388, 0.0
        %v1271 = vmax.f32 %v389, 0.0
        %v1272 = vmax.f32 %v390, 0.0
        %v1273 = vmax.f32 %v391, 0.0
        %v1274 = vmax.f32 %v392, 0.0
        %v1275 = vmax.f32 %v393, 0.0
        %v1276 = vmax.f32 %v394, 0.0
        %v1277 = vmax.f32 %v395, 0.0
        %v1278 = vmax.f32 %v396, 0.0
        %v1279 = vmax.f32 %v397, 0.0
        %v1280 = vmax.f32 %v398, 0.0
        %v1281 = vmax.f32 %v399, 0.0
        %v1282 = vmax.f32 %v400, 0.0
        %v1283 = vmax.f32 %v401, 0.0
        %v1284 = vmax.f32 %v402, 0.0
        %v1285 = vmax.f32 %v403, 0.0
        %v1286 = vmax.f32 %v404, 0.0
        %v1287 = vmax.f32 %v405, 0.0
        %v1288 = vmax.f32 %v406, 0.0
        %v1289 = vmax.f32 %v407, 0.0
        %v1290 = vmax.f32 %v408, 0.0
        %v1291 = vmax.f32 %v409, 0.0
        %v1292 = vmax.f32 %v410, 0.0
        %v1293 = vmax.f32 %v411, 0.0
        %v1294 = vmax.f32 %v412, 0.0
        %v1295 = vmax.f32 %v413, 0.0
        %v1296 = vmax.f32 %v414, 0.0
        %v1297 = vmax.f32 %v415, 0.0
        %v1298 = vmax.f32 %v416, 0.0
        %v1299 = vmax.f32 %v417, 0.0
        %v1300 = vmax.f32 %v418, 0.0
        %v1301 = vmax.f32 %v419, 0.0
        %v1302 = vmax.f32 %v420, 0.0
        %v1303 = vmax.f32 %v421, 0.0
        %v1304 = vmax.f32 %v422, 0.0
        %v1305 = vmax.f32 %v423, 0.0
        %v1306 = vmax.f32 %v424, 0.0
        %v1307 = vmax.f32 %v425, 0.0
        %v1308 = vmax.f32 %v426, 0.0
        %v1309 = vmax.f32 %v427, 0.0
        %v1310 = vmax.f32 %v428, 0.0
        %v1311 = vmax.f32 %v429, 0.0
        %v1312 = vmax.f32 %v430, 0.0
        %v1313 = vmax.f32 %v431, 0.0
        %v1314 = vmax.f32 %v432, 0.0
        %v1315 = vmax.f32 %v433, 0.0
        %v1316 = vmax.f32 %v434, 0.0
        %v1317 = vmax.f32 %v435, 0.0
        %v1318 = vmax.f32 %v436, 0.0
        %v1319 = vmax.f32 %v437, 0.0
        %v1320 = vmax.f32 %v438, 0.0
        %v1321 = vmax.f32 %v439, 0.0
        %v1322 = vmax.f32 %v440, 0.0
        %v1323 = vmax.f32 %v441, 0.0
        %v1324 = vmax.f32 %v442, 0.0
        %v1325 = vmax.f32 %v443, 0.0
        %v1326 = vmax.f32 %v444, 0.0
        %v1327 = vmax.f32 %v445, 0.0
        %v1328 = vmax.f32 %v446, 0.0
        %v1329 = vmax.f32 %v447, 0.0
        %v1330 = vmax.f32 %v448, 0.0
        %v1331 = vmax.f32 %v449, 0.0
        %v1332 = vmax.f32 %v450, 0.0
        %v1333 = vmax.f32 %v451, 0.0
        %v1334 = vmax.f32 %v452, 0.0
        %v1335 = vmax.f32 %v453, 0.0
        %v1336 = vmax.f32 %v454, 0.0
        %v1337 = vmax.f32 %v455, 0.0
        %v1338 = vmax.f32 %v456, 0.0
        %v1339 = vmax.f32 %v457, 0.0
        %v1340 = vmax.f32 %v458, 0.0
        %v1341 = vmax.f32 %v459, 0.0
        %v1342 = vmax.f32 %v460, 0.0
        %v1343 = vmax.f32 %v461, 0.0
        %v1344 = vmax.f32 %v462, 0.0
        %v1345 = vmax.f32 %v463, 0.0
        %v1346 = vmax.f32 %v464, 0.0
        %v1347 = vmax.f32 %v465, 0.0
        %v1348 = vmax.f32 %v466, 0.0
        %v1349 = vmax.f32 %v467, 0.0
        %v1350 = vmax.f32 %v468, 0.0
        %v1351 = vmax.f32 %v469, 0.0
        %v1352 = vmax.f32 %v470, 0.0
        %v1353 = vmax.f32 %v471, 0.0
        %v1354 = vmax.f32 %v472, 0.0
        %v1355 = vmax.f32 %v473, 0.0
        %v1356 = vmax.f32 %v474, 0.0
        %v1357 = vmax.f32 %v475, 0.0
        %v1358 = vmax.f32 %v476, 0.0
        %v1359 = vmax.f32 %v477, 0.0
        %v1360 = vmax.f32 %v478, 0.0
        %v1361 = vmax.f32 %v479, 0.0
        %v1362 = vmax.f32 %v480, 0.0
        %v1363 = vmax.f32 %v481, 0.0
        %v1364 = vmax.f32 %v482, 0.0
        %v1365 = vmax.f32 %v483, 0.0
        %v1366 = vmax.f32 %v484, 0.0
        %v1367 = vmax.f32 %v485, 0.0
        %v1368 = vmax.f32 %v486, 0.0
        %v1369 = vmax.f32 %v487, 0.0
        %v1370 = vmax.f32 %v488, 0.0
        %v1371 = vmax.f32 %v489, 0.0
        %v1372 = vmax.f32 %v490, 0.0
        %v1373 = vmax.f32 %v491, 0.0
        %v1374 = vmax.f32 %v492, 0.0
        %v1375 = vmax.f32 %v493, 0.0
        %v1376 = vmax.f32 %v494, 0.0
        %v1377 = vmax.f32 %v495, 0.0
        %v1378 = vmax.f32 %v496, 0.0
        %v1379 = vmax.f32 %v497, 0.0
        %v1380 = vmax.f32 %v498, 0.0
        %v1381 = vmax.f32 %v499, 0.0
        %v1382 = vmax.f32 %v500, 0.0
        %v1383 = vmax.f32 %v501, 0.0
        %v1384 = vmax.f32 %v502, 0.0
        %v1385 = vmax.f32 %v503, 0.0
        %v1386 = vmax.f32 %v504, 0.0
        %v1387 = vmax.f32 %v505, 0.0
        %v1388 = vmax.f32 %v506, 0.0
        %v1389 = vmax.f32 %v507, 0.0
        %v1390 = vmax.f32 %v508, 0.0
        %v1391 = vmax.f32 %v509, 0.0
        %v1392 = vmax.f32 %v510, 0.0
        %v1393 = vmax.f32 %v511, 0.0
        %v1394 = vmax.f32 %v512, 0.0
        %v1395 = vmax.f32 %v513, 0.0
        %v1396 = vmax.f32 %v514, 0.0
        %v1397 = vmax.f32 %v515, 0.0
        %v1398 = vmax.f32 %v516, 0.0
        %v1399 = vmax.f32 %v517, 0.0
        %v1400 = vmax.f32 %v518, 0.0
        %v1401 = vmax.f32 %v519, 0.0
        %v1402 = vmax.f32 %v520, 0.0
        %v1403 = vmax.f32 %v521, 0.0
        %v1404 = vmax.f32 %v522, 0.0
        %v1405 = vmax.f32 %v523, 0.0
        %v1406 = vmax.f32 %v524, 0.0
        %v1407 = vmax.f32 %v525, 0.0
        %v1408 = vmax.f32 %v526, 0.0
        %v1409 = vmax.f32 %v527, 0.0
        %v1410 = vmax.f32 %v528, 0.0
        %v1411 = vmax.f32 %v529, 0.0
        %v1412 = vmax.f32 %v530, 0.0
        %v1413 = vmax.f32 %v531, 0.0
        %v1414 = vmax.f32 %v532, 0.0
        %v1415 = vmax.f32 %v533, 0.0
        %v1416 = vmax.f32 %v534, 0.0
        %v1417 = vmax.f32 %v535, 0.0
        %v1418 = vmax.f32 %v536, 0.0
        %v1419 = vmax.f32 %v537, 0.0
        %v1420 = vmax.f32 %v538, 0.0
        %v1421 = vmax.f32 %v539, 0.0
        %v1422 = vmax.f32 %v540, 0.0
        %v1423 = vmax.f32 %v541, 0.0
        %v1424 = vmax.f32 %v542, 0.0
        %v1425 = vmax.f32 %v543, 0.0
        %v1426 = vmax.f32 %v544, 0.0
        %v1427 = vmax.f32 %v545, 0.0
        %v1428 = vmax.f32 %v546, 0.0
        %v1429 = vmax.f32 %v547, 0.0
        %v1430 = vmax.f32 %v548, 0.0
        %v1431 = vmax.f32 %v549, 0.0
        %v1432 = vmax.f32 %v550, 0.0
        %v1433 = vmax.f32 %v551, 0.0
        %v1434 = vmax.f32 %v552, 0.0
        %v1435 = vmax.f32 %v553, 0.0
        %v1436 = vmax.f32 %v554, 0.0
        %v1437 = vmax.f32 %v555, 0.0
        %v1438 = vmax.f32 %v556, 0.0
        %v1439 = vmax.f32 %v557, 0.0
        %v1440 = vmax.f32 %v558, 0.0
        %v1441 = vmax.f32 %v559, 0.0
        %v1442 = vmax.f32 %v560, 0.0
        %v1443 = vmax.f32 %v561, 0.0
        %v1444 = vmax.f32 %v562, 0.0
        %v1445 = vmax.f32 %v563, 0.0
        %v1446 = vmax.f32 %v564, 0.0
        %v1447 = vmax.f32 %v565, 0.0
        %v1448 = vmax.f32 %v566, 0.0
        %v1449 = vmax.f32 %v567, 0.0
        %v1450 = vmax.f32 %v568, 0.0
        %v1451 = vmax.f32 %v569, 0.0
        %v1452 = vmax.f32 %v570, 0.0
        %v1453 = vmax.f32 %v571, 0.0
        %v1454 = vmax.f32 %v572, 0.0
        %v1455 = vmax.f32 %v573, 0.0
        %v1456 = vmax.f32 %v574, 0.0
        %v1457 = vmax.f32 %v575, 0.0
        %v1458 = vmax.f32 %v576, 0.0
        %v1459 = vmax.f32 %v577, 0.0
        %v1460 = vmax.f32 %v578, 0.0
        %v1461 = vmax.f32 %v579, 0.0
        %v1462 = vmax.f32 %v580, 0.0
        %v1463 = vmax.f32 %v581, 0.0
        %v1464 = vmax.f32 %v582, 0.0
        %v1465 = vmax.f32 %v583, 0.0
        %v1466 = vmax.f32 %v584, 0.0
        %v1467 = vmax.f32 %v585, 0.0
        %v1468 = vmax.f32 %v586, 0.0
        %v1469 = vmax.f32 %v587, 0.0
        %v1470 = vmax.f32 %v588, 0.0
        %v1471 = vmax.f32 %v589, 0.0
        %v1472 = vmax.f32 %v590, 0.0
        %v1473 = vmax.f32 %v591, 0.0
        %v1474 = vmax.f32 %v592, 0.0
        %v1475 = vmax.f32 %v593, 0.0
        %v1476 = vmax.f32 %v594, 0.0
        %v1477 = vmax.f32 %v595, 0.0
        %v1478 = vmax.f32 %v596, 0.0
        %v1479 = vmax.f32 %v597, 0.0
        %v1480 = vmax.f32 %v598, 0.0
        %v1481 = vmax.f32 %v599, 0.0
        %v1482 = vmax.f32 %v600, 0.0
        %v1483 = vmax.f32 %v601, 0.0
        %v1484 = vmax.f32 %v602, 0.0
        %v1485 = vmax.f32 %v603, 0.0
        %v1486 = vmax.f32 %v604, 0.0
        %v1487 = vmax.f32 %v605, 0.0
        %v1488 = vmax.f32 %v606, 0.0
        %v1489 = vmax.f32 %v607, 0.0
        %v1490 = vmax.f32 %v608, 0.0
        %v1491 = vmax.f32 %v609, 0.0
        %v1492 = vmax.f32 %v610, 0.0
        %v1493 = vmax.f32 %v611, 0.0
        %v1494 = vmax.f32 %v612, 0.0
        %v1495 = vmax.f32 %v613, 0.0
        %v1496 = vmax.f32 %v614, 0.0
        %v1497 = vmax.f32 %v615, 0.0
        %v1498 = vmax.f32 %v616, 0.0
        %v1499 = vmax.f32 %v617, 0.0
        %v1500 = vmax.f32 %v618, 0.0
        %v1501 = vmax.f32 %v619, 0.0
        %v1502 = vmax.f32 %v620, 0.0
        %v1503 = vmax.f32 %v621, 0.0
        %v1504 = vmax.f32 %v622, 0.0
        %v1505 = vmax.f32 %v623, 0.0
        %v1506 = vmax.f32 %v624, 0.0
        %v1507 = vmax.f32 %v625, 0.0
        %v1508 = vmax.f32 %v626, 0.0
        %v1509 = vmax.f32 %v627, 0.0
        %v1510 = vmax.f32 %v628, 0.0
        %v1511 = vmax.f32 %v629, 0.0
        %v1512 = vmax.f32 %v630, 0.0
        %v1513 = vmax.f32 %v631, 0.0
        %v1514 = vmax.f32 %v632, 0.0
        %v1515 = vmax.f32 %v633, 0.0
        %v1516 = vmax.f32 %v634, 0.0
        %v1517 = vmax.f32 %v635, 0.0
        %v1518 = vmax.f32 %v636, 0.0
        %v1519 = vmax.f32 %v637, 0.0
        %v1520 = vmax.f32 %v638, 0.0
        %v1521 = vmax.f32 %v639, 0.0
        %v1522 = vmax.f32 %v640, 0.0
        %v1523 = vmax.f32 %v641, 0.0
        %v1524 = vmax.f32 %v642, 0.0
        %v1525 = vmax.f32 %v643, 0.0
        %v1526 = vmax.f32 %v644, 0.0
        %v1527 = vmax.f32 %v645, 0.0
        %v1528 = vmax.f32 %v646, 0.0
        %v1529 = vmax.f32 %v647, 0.0
        %v1530 = vmax.f32 %v648, 0.0
        %v1531 = vmax.f32 %v649, 0.0
        %v1532 = vmax.f32 %v650, 0.0
        %v1533 = vmax.f32 %v651, 0.0
        %v1534 = vmax.f32 %v652, 0.0
        %v1535 = vmax.f32 %v653, 0.0
        %v1536 = vmax.f32 %v654, 0.0
        %v1537 = vmax.f32 %v655, 0.0
        %v1538 = vmax.f32 %v656, 0.0
        %v1539 = vmax.f32 %v657, 0.0
        %v1540 = vmax.f32 %v658, 0.0
        %v1541 = vmax.f32 %v659, 0.0
        %v1542 = vmax.f32 %v660, 0.0
        %v1543 = vmax.f32 %v661, 0.0
        %v1544 = vmax.f32 %v662, 0.0
        %v1545 = vmax.f32 %v663, 0.0
        %v1546 = vmax.f32 %v664, 0.0
        %v1547 = vmax.f32 %v665, 0.0
        %v1548 = vmax.f32 %v666, 0.0
        %v1549 = vmax.f32 %v667, 0.0
        %v1550 = vmax.f32 %v668, 0.0
        %v1551 = vmax.f32 %v669, 0.0
        %v1552 = vmax.f32 %v670, 0.0
        %v1553 = vmax.f32 %v671, 0.0
        %v1554 = vmax.f32 %v672, 0.0
        %v1555 = vmax.f32 %v673, 0.0
        %v1556 = vmax.f32 %v674, 0.0
        %v1557 = vmax.f32 %v675, 0.0
        %v1558 = vmax.f32 %v676, 0.0
        %v1559 = vmax.f32 %v677, 0.0
        %v1560 = vmax.f32 %v678, 0.0
        %v1561 = vmax.f32 %v679, 0.0
        %v1562 = vmax.f32 %v680, 0.0
        %v1563 = vmax.f32 %v681, 0.0
        %v1564 = vmax.f32 %v682, 0.0
        %v1565 = vmax.f32 %v683, 0.0
        %v1566 = vmax.f32 %v684, 0.0
        %v1567 = vmax.f32 %v685, 0.0
        %v1568 = vmax.f32 %v686, 0.0
        %v1569 = vmax.f32 %v687, 0.0
        %v1570 = vmax.f32 %v688, 0.0
        %v1571 = vmax.f32 %v689, 0.0
        %v1572 = vmax.f32 %v690, 0.0
        %v1573 = vmax.f32 %v691, 0.0
        %v1574 = vmax.f32 %v692, 0.0
        %v1575 = vmax.f32 %v693, 0.0
        %v1576 = vmax.f32 %v694, 0.0
        %v1577 = vmax.f32 %v695, 0.0
        %v1578 = vmax.f32 %v696, 0.0
        %v1579 = vmax.f32 %v697, 0.0
        %v1580 = vmax.f32 %v698, 0.0
        %v1581 = vmax.f32 %v699, 0.0
        %v1582 = vmax.f32 %v700, 0.0
        %v1583 = vmax.f32 %v701, 0.0
        %v1584 = vmax.f32 %v702, 0.0
        %v1585 = vmax.f32 %v703, 0.0
        %v1586 = vmax.f32 %v704, 0.0
        %v1587 = vmax.f32 %v705, 0.0
        %v1588 = vmax.f32 %v706, 0.0
        %v1589 = vmax.f32 %v707, 0.0
        %v1590 = vmax.f32 %v708, 0.0
        %v1591 = vmax.f32 %v709, 0.0
        %v1592 = vmax.f32 %v710, 0.0
        %v1593 = vmax.f32 %v711, 0.0
        %v1594 = vmax.f32 %v712, 0.0
        %v1595 = vmax.f32 %v713, 0.0
        %v1596 = vmax.f32 %v714, 0.0
        %v1597 = vmax.f32 %v715, 0.0
        %v1598 = vmax.f32 %v716, 0.0
        %v1599 = vmax.f32 %v717, 0.0
        %v1600 = vmax.f32 %v718, 0.0
        %v1601 = vmax.f32 %v719, 0.0
        %v1602 = vmax.f32 %v720, 0.0
        %v1603 = vmax.f32 %v721, 0.0
        %v1604 = vmax.f32 %v722, 0.0
        %v1605 = vmax.f32 %v723, 0.0
        %v1606 = vmax.f32 %v724, 0.0
        %v1607 = vmax.f32 %v725, 0.0
        %v1608 = vmax.f32 %v726, 0.0
        %v1609 = vmax.f32 %v727, 0.0
        %v1610 = vmax.f32 %v728, 0.0
        %v1611 = vmax.f32 %v729, 0.0
        %v1612 = vmax.f32 %v730, 0.0
        %v1613 = vmax.f32 %v731, 0.0
        %v1614 = vmax.f32 %v732, 0.0
        %v1615 = vmax.f32 %v733, 0.0
        %v1616 = vmax.f32 %v734, 0.0
        %v1617 = vmax.f32 %v735, 0.0
        %v1618 = vmax.f32 %v736, 0.0
        %v1619 = vmax.f32 %v737, 0.0
        %v1620 = vmax.f32 %v738, 0.0
        %v1621 = vmax.f32 %v739, 0.0
        %v1622 = vmax.f32 %v740, 0.0
        %v1623 = vmax.f32 %v741, 0.0
        %v1624 = vmax.f32 %v742, 0.0
        %v1625 = vmax.f32 %v743, 0.0
        %v1626 = vmax.f32 %v744, 0.0
        %v1627 = vmax.f32 %v745, 0.0
        %v1628 = vmax.f32 %v746, 0.0
        %v1629 = vmax.f32 %v747, 0.0
        %v1630 = vmax.f32 %v748, 0.0
        %v1631 = vmax.f32 %v749, 0.0
        %v1632 = vmax.f32 %v750, 0.0
        %v1633 = vmax.f32 %v751, 0.0
        %v1634 = vmax.f32 %v752, 0.0
        %v1635 = vmax.f32 %v753, 0.0
        %v1636 = vmax.f32 %v754, 0.0
        %v1637 = vmax.f32 %v755, 0.0
        %v1638 = vmax.f32 %v756, 0.0
        %v1639 = vmax.f32 %v757, 0.0
        %v1640 = vmax.f32 %v758, 0.0
        %v1641 = vmax.f32 %v759, 0.0
        %v1642 = vmax.f32 %v760, 0.0
        %v1643 = vmax.f32 %v761, 0.0
        %v1644 = vmax.f32 %v762, 0.0
        %v1645 = vmax.f32 %v763, 0.0
        %v1646 = vmax.f32 %v764, 0.0
        %v1647 = vmax.f32 %v765, 0.0
        %v1648 = vmax.f32 %v766, 0.0
        %v1649 = vmax.f32 %v767, 0.0
        %v1650 = vmax.f32 %v768, 0.0
        %v1651 = vmax.f32 %v769, 0.0
        %v1652 = vmax.f32 %v770, 0.0
        %v1653 = vmax.f32 %v771, 0.0
        %v1654 = vmax.f32 %v772, 0.0
        %v1655 = vmax.f32 %v773, 0.0
        %v1656 = vmax.f32 %v774, 0.0
        %v1657 = vmax.f32 %v775, 0.0
        %v1658 = vmax.f32 %v776, 0.0
        %v1659 = vmax.f32 %v777, 0.0
        %v1660 = vmax.f32 %v778, 0.0
        %v1661 = vmax.f32 %v779, 0.0
        %v1662 = vmax.f32 %v780, 0.0
        %v1663 = vmax.f32 %v781, 0.0
        %v1664 = vmax.f32 %v782, 0.0
        %v1665 = vmax.f32 %v783, 0.0
        %v1666 = vmax.f32 %v784, 0.0
        %v1667 = vmax.f32 %v785, 0.0
        %v1668 = vmax.f32 %v786, 0.0
        %v1669 = vmax.f32 %v787, 0.0
        %v1670 = vmax.f32 %v788, 0.0
        %v1671 = vmax.f32 %v789, 0.0
        %v1672 = vmax.f32 %v790, 0.0
        %v1673 = vmax.f32 %v791, 0.0
        %v1674 = vmax.f32 %v792, 0.0
        %v1675 = vmax.f32 %v793, 0.0
        %v1676 = vmax.f32 %v794, 0.0
        %v1677 = vmax.f32 %v795, 0.0
        %v1678 = vmax.f32 %v796, 0.0
        %v1679 = vmax.f32 %v797, 0.0
        %v1680 = vmax.f32 %v798, 0.0
        %v1681 = vmax.f32 %v799, 0.0
        %v1682 = vmax.f32 %v800, 0.0
        %v1683 = vmax.f32 %v801, 0.0
        %v1684 = vmax.f32 %v802, 0.0
        %v1685 = vmax.f32 %v803, 0.0
        %v1686 = vmax.f32 %v804, 0.0
        %v1687 = vmax.f32 %v805, 0.0
        %v1688 = vmax.f32 %v806, 0.0
        %v1689 = vmax.f32 %v807, 0.0
        %v1690 = vmax.f32 %v808, 0.0
        %v1691 = vmax.f32 %v809, 0.0
        %v1692 = vmax.f32 %v810, 0.0
        %v1693 = vmax.f32 %v811, 0.0
        %v1694 = vmax.f32 %v812, 0.0
        %v1695 = vmax.f32 %v813, 0.0
        %v1696 = vmax.f32 %v814, 0.0
        %v1697 = vmax.f32 %v815, 0.0
        %v1698 = vmax.f32 %v816, 0.0
        %v1699 = vmax.f32 %v817, 0.0
        %v1700 = vmax.f32 %v818, 0.0
        %v1701 = vmax.f32 %v819, 0.0
        %v1702 = vmax.f32 %v820, 0.0
        %v1703 = vmax.f32 %v821, 0.0
        %v1704 = vmax.f32 %v822, 0.0
        %v1705 = vmax.f32 %v823, 0.0
        %v1706 = vmax.f32 %v824, 0.0
        %v1707 = vmax.f32 %v825, 0.0
        %v1708 = vmax.f32 %v826, 0.0
        %v1709 = vmax.f32 %v827, 0.0
        %v1710 = vmax.f32 %v828, 0.0
        %v1711 = vmax.f32 %v829, 0.0
        %v1712 = vmax.f32 %v830, 0.0
        %v1713 = vmax.f32 %v831, 0.0
        %v1714 = vmax.f32 %v832, 0.0
        %v1715 = vmax.f32 %v833, 0.0
        %v1716 = vmax.f32 %v834, 0.0
        %v1717 = vmax.f32 %v835, 0.0
        %v1718 = vmax.f32 %v836, 0.0
        %v1719 = vmax.f32 %v837, 0.0
        %v1720 = vmax.f32 %v838, 0.0
        %v1721 = vmax.f32 %v839, 0.0
        %v1722 = vmax.f32 %v840, 0.0
        %v1723 = vmax.f32 %v841, 0.0
        %v1724 = vmax.f32 %v842, 0.0
        %v1725 = vmax.f32 %v843, 0.0
        %v1726 = vmax.f32 %v844, 0.0
        %v1727 = vmax.f32 %v845, 0.0
        %v1728 = vmax.f32 %v846, 0.0
        %v1729 = vmax.f32 %v847, 0.0
        %v1730 = vmax.f32 %v848, 0.0
        %v1731 = vmax.f32 %v849, 0.0
        %v1732 = vmax.f32 %v850, 0.0
        %v1733 = vmax.f32 %v851, 0.0
        %v1734 = vmax.f32 %v852, 0.0
        %v1735 = vmax.f32 %v853, 0.0
        %v1736 = vmax.f32 %v854, 0.0
        %v1737 = vmax.f32 %v855, 0.0
        %v1738 = vmax.f32 %v856, 0.0
        %v1739 = vmax.f32 %v857, 0.0
        %v1740 = vmax.f32 %v858, 0.0
        %v1741 = vmax.f32 %v859, 0.0
        %v1742 = vmax.f32 %v860, 0.0
        %v1743 = vmax.f32 %v861, 0.0
        %v1744 = vmax.f32 %v862, 0.0
        %v1745 = vmax.f32 %v863, 0.0
        %v1746 = vmax.f32 %v864, 0.0
        %v1747 = vmax.f32 %v865, 0.0
        %v1748 = vmax.f32 %v866, 0.0
        %v1749 = vmax.f32 %v867, 0.0
        %v1750 = vmax.f32 %v868, 0.0
        %v1751 = vmax.f32 %v869, 0.0
        %v1752 = vmax.f32 %v870, 0.0
        %v1753 = vmax.f32 %v871, 0.0
        %v1754 = vmax.f32 %v872, 0.0
        %v1755 = vmax.f32 %v873, 0.0
        %v1756 = vmax.f32 %v874, 0.0
        %v1757 = vmax.f32 %v875, 0.0
        %v1758 = vmax.f32 %v876, 0.0
        %v1759 = vmax.f32 %v877, 0.0
        %v1760 = vmax.f32 %v878, 0.0
        %v1761 = vmax.f32 %v879, 0.0
        %v1762 = vmax.f32 %v880, 0.0
        %v1763 = vmax.f32 %v881, 0.0
        %v1764 = vmax.f32 %v882, 0.0
        %v1765 = vmax.f32 %v883, 0.0
        %v1766 = vmax.f32 %v884, 0.0
        %v1767 = vmax.f32 %v885, 0.0
        %v1768 = vmax.f32 %v886, 0.0
        %v1769 = vmax.f32 %v887, 0.0
        %v1770 = vmax.f32 %v888, 0.0
        %v1771 = vmax.f32 %v889, 0.0
        %v1772 = vmax.f32 %v890, 0.0
        %v1773 = vmax.f32 %v891, 0.0
        %v1774 = vmax.f32 %v892, 0.0
        %v1775 = vmax.f32 %v893, 0.0
        %v1776 = vmax.f32 %v894, 0.0
        %v1777 = vmax.f32 %v895, 0.0
        %v1778 = vmax.f32 %v896, 0.0
        %v1779 = vmax.f32 %v897, 0.0
        %v1780 = vmax.f32 %v898, 0.0
        %v1781 = vmax.f32 %v899, 0.0
        %v1782 = vmax.f32 %v900, 0.0
        %v1783 = vmax.f32 %v901, 0.0
        %v1784 = vmax.f32 %v902, 0.0
        %v1785 = vmax.f32 %v903, 0.0
        %v1786 = vmax.f32 %v904, 0.0
        %v1787 = vmax.f32 %v905, 0.0
        %v1788 = vmax.f32 %v906, 0.0
        %v1789 = vmax.f32 %v907, 0.0
        %v1790 = vmax.f32 %v908, 0.0
        %v1791 = vmax.f32 %v909, 0.0
        %v1792 = vmax.f32 %v910, 0.0
        %v1793 = vmax.f32 %v911, 0.0
        %v1794 = vmax.f32 %v912, 0.0
        %v1795 = vmax.f32 %v913, 0.0
        %v1796 = vmax.f32 %v914, 0.0
        %v1797 = vmax.f32 %v915, 0.0
        %v1798 = vmax.f32 %v916, 0.0
        %v1799 = vmax.f32 %v917, 0.0
        %v1800 = vmax.f32 %v918, 0.0
        %v1801 = vmax.f32 %v919, 0.0
        %v1802 = vmax.f32 %v920, 0.0
        %v1803 = vmax.f32 %v921, 0.0
        %v1804 = vmax.f32 %v922, 0.0
        %v1805 = vmax.f32 %v923, 0.0
        %v1806 = vmax.f32 %v924, 0.0
        %v1807 = vmax.f32 %v925, 0.0
        %v1808 = vmax.f32 %v926, 0.0
        %v1809 = vmax.f32 %v927, 0.0
        %v1810 = vmax.f32 %v928, 0.0
        %v1811 = vmax.f32 %v929, 0.0
        %v1812 = vmax.f32 %v930, 0.0
        %v1813 = vmax.f32 %v931, 0.0
        %v1814 = vmax.f32 %v932, 0.0
        %v1815 = vmax.f32 %v933, 0.0
        %v1816 = vmax.f32 %v934, 0.0
        %v1817 = vmax.f32 %v935, 0.0
        %v1818 = vmax.f32 %v936, 0.0
        %v1819 = vmax.f32 %v937, 0.0
        %v1820 = vmax.f32 %v938, 0.0
        %v1821 = vmax.f32 %v939, 0.0
        %v1822 = vmax.f32 %v940, 0.0
        %v1823 = vmax.f32 %v941, 0.0
        %v1824 = vmax.f32 %v942, 0.0
        %v1825 = vmax.f32 %v943, 0.0
        %v1826 = vmax.f32 %v944, 0.0
        %v1827 = vmax.f32 %v945, 0.0
        %v1828 = vmax.f32 %v946, 0.0
        %v1829 = vmax.f32 %v947, 0.0
        %v1830 = vmax.f32 %v948, 0.0
        %v1831 = vmax.f32 %v949, 0.0
        %v1832 = vmax.f32 %v950, 0.0
        %v1833 = vmax.f32 %v951, 0.0
        %v1834 = vmax.f32 %v952, 0.0
        %v1835 = vmax.f32 %v953, 0.0
        %v1836 = vmax.f32 %v954, 0.0
        %v1837 = vmax.f32 %v955, 0.0
        %v1838 = vmax.f32 %v956, 0.0
        %v1839 = vmax.f32 %v957, 0.0
        %v1840 = vmax.f32 %v958, 0.0
        %v1841 = vmax.f32 %v959, 0.0
        %v1842 = vmax.f32 %v960, 0.0
        %v1843 = vmax.f32 %v961, 0.0
        %v1844 = vmax.f32 %v962, 0.0
        %v1845 = vmax.f32 %v963, 0.0
        %v1846 = vmax.f32 %v964, 0.0
        %v1847 = vmax.f32 %v965, 0.0
        %v1848 = vmax.f32 %v966, 0.0
        %v1849 = vmax.f32 %v967, 0.0
        %v1850 = vmax.f32 %v968, 0.0
        %v1851 = vmax.f32 %v969, 0.0
        %v1852 = vmax.f32 %v970, 0.0
        %v1853 = vmax.f32 %v971, 0.0
        %v1854 = vmax.f32 %v972, 0.0
        %v1855 = vmax.f32 %v973, 0.0
        %v1856 = vmax.f32 %v974, 0.0
        %v1857 = vmax.f32 %v975, 0.0
        %v1858 = vmax.f32 %v976, 0.0
        %v1859 = vmax.f32 %v977, 0.0
        %v1860 = vmax.f32 %v978, 0.0
        %v1861 = vmax.f32 %v979, 0.0
        %v1862 = vmax.f32 %v980, 0.0
        %v1863 = vmax.f32 %v981, 0.0
        %v1864 = vmax.f32 %v982, 0.0
        %v1865 = vmax.f32 %v983, 0.0
        %v1866 = vmax.f32 %v984, 0.0
        %v1867 = vmax.f32 %v985, 0.0
        %v1868 = vmax.f32 %v986, 0.0
        %v1869 = vmax.f32 %v987, 0.0
        %v1870 = vmax.f32 %v988, 0.0
        %v1871 = vmax.f32 %v989, 0.0
        %v1872 = vmax.f32 %v990, 0.0
        %v1873 = vmax.f32 %v991, 0.0
        %v1874 = vmax.f32 %v992, 0.0
        %v1875 = vmax.f32 %v993, 0.0
        %v1876 = vmax.f32 %v994, 0.0
        %v1877 = vmax.f32 %v995, 0.0
        %v1878 = vmax.f32 %v996, 0.0
        %v1879 = vmax.f32 %v997, 0.0
        %v1880 = vmax.f32 %v998, 0.0
        %v1881 = vmax.f32 %v999, 0.0
        %v1882 = vmax.f32 %v1000, 0.0
        %v1883 = vmax.f32 %v1001, 0.0
        %v1884 = vmax.f32 %v1002, 0.0
        %v1885 = vmax.f32 %v1003, 0.0
        %v1886 = vmax.f32 %v1004, 0.0
        %v1887 = vmax.f32 %v1005, 0.0
        %v1888 = vmax.f32 %v1006, 0.0
        %v1889 = vmax.f32 %v1007, 0.0
        %v1890 = vmax.f32 %v1008, 0.0
        %v1891 = vmax.f32 %v1009, 0.0
        %v1892 = vmax.f32 %v1010, 0.0
        %v1893 = vmax.f32 %v1011, 0.0
        %v1894 = vmax.f32 %v1012, 0.0
        %v1895 = vmax.f32 %v1013, 0.0
        %v1896 = vmax.f32 %v1014, 0.0
        %v1897 = vmax.f32 %v1015, 0.0
        %v1898 = vmax.f32 %v1016, 0.0
        %v1899 = vmax.f32 %v1017, 0.0
        %v1900 = vmax.f32 %v1018, 0.0
        %v1901 = vmax.f32 %v1019, 0.0
        %v1902 = vmax.f32 %v1020, 0.0
        %1903 = vst [vmem:[%s136] sm:$0xff] %v1021
        %1904 = vst [vmem:[%s136 + $0x8] sm:$0xff] %v1022
        %1905 = vst [vmem:[%s136 + $0x10] sm:$0xff] %v1023
        %1906 = vst [vmem:[%s136 + $0x18] sm:$0xff] %v1024
        %1907 = vst [vmem:[%s136 + $0x20] sm:$0xff] %v1025
        %1908 = vst [vmem:[%s136 + $0x28] sm:$0xff] %v1026
        %1909 = vst [vmem:[%s136 + $0x30] sm:$0xff] %v1027
        %1910 = vst [vmem:[%s136 + $0x38] sm:$0xff] %v1028
        %1911 = vst [vmem:[%s136 + $0x40] sm:$0xff] %v1029
        %1912 = vst [vmem:[%s136 + $0x48] sm:$0xff] %v1030
        %1913 = vst [vmem:[%s136 + $0x50] sm:$0xff] %v1031
        %1914 = vst [vmem:[%s136 + $0x58] sm:$0xff] %v1032
        %1915 = vst [vmem:[%s136 + $0x60] sm:$0xff] %v1033
        %1916 = vst [vmem:[%s136 + $0x68] sm:$0xff] %v1034
        %1917 = vst [vmem:[%s136 + $0x70] sm:$0xff] %v1035
        %1918 = vst [vmem:[%s136 + $0x78] sm:$0xff] %v1036
        %1919 = vst [vmem:[%s136 + $0x80] sm:$0xff] %v1037
        %1920 = vst [vmem:[%s136 + $0x88] sm:$0xff] %v1038
        %1921 = vst [vmem:[%s136 + $0x90] sm:$0xff] %v1039
        %1922 = vst [vmem:[%s136 + $0x98] sm:$0xff] %v1040
        %1923 = vst [vmem:[%s136 + $0xa0] sm:$0xff] %v1041
        %1924 = vst [vmem:[%s136 + $0xa8] sm:$0xff] %v1042
        %1925 = vst [vmem:[%s136 + $0xb0] sm:$0xff] %v1043
        %1926 = vst [vmem:[%s136 + $0xb8] sm:$0xff] %v1044
        %1927 = vst [vmem:[%s136 + $0xc0] sm:$0xff] %v1045
        %1928 = vst [vmem:[%s136 + $0xc8] sm:$0xff] %v1046
        %1929 = vst [vmem:[%s136 + $0xd0] sm:$0xff] %v1047
        %1930 = vst [vmem:[%s136 + $0xd8] sm:$0xff] %v1048
        %1931 = vst [vmem:[%s136 + $0xe0] sm:$0xff] %v1049
        %1932 = vst [vmem:[%s136 + $0xe8] sm:$0xff] %v1050
        %1933 = vst [vmem:[%s136 + $0xf0] sm:$0xff] %v1051
        %1934 = vst [vmem:[%s136 + $0xf8] sm:$0xff] %v1052
        %1935 = vst [vmem:[%s136 + $0x100] sm:$0xff] %v1053
        %1936 = vst [vmem:[%s136 + $0x108] sm:$0xff] %v1054
        %1937 = vst [vmem:[%s136 + $0x110] sm:$0xff] %v1055
        %1938 = vst [vmem:[%s136 + $0x118] sm:$0xff] %v1056
        %1939 = vst [vmem:[%s136 + $0x120] sm:$0xff] %v1057
        %1940 = vst [vmem:[%s136 + $0x128] sm:$0xff] %v1058
        %1941 = vst [vmem:[%s136 + $0x130] sm:$0xff] %v1059
        %1942 = vst [vmem:[%s136 + $0x138] sm:$0xff] %v1060
        %1943 = vst [vmem:[%s136 + $0x140] sm:$0xff] %v1061
        %1944 = vst [vmem:[%s136 + $0x148] sm:$0xff] %v1062
        %1945 = vst [vmem:[%s136 + $0x150] sm:$0xff] %v1063
        %1946 = vst [vmem:[%s136 + $0x158] sm:$0xff] %v1064
        %1947 = vst [vmem:[%s136 + $0x160] sm:$0xff] %v1065
        %1948 = vst [vmem:[%s136 + $0x168] sm:$0xff] %v1066
        %1949 = vst [vmem:[%s136 + $0x170] sm:$0xff] %v1067
        %1950 = vst [vmem:[%s136 + $0x178] sm:$0xff] %v1068
        %1951 = vst [vmem:[%s136 + $0x180] sm:$0xff] %v1069
        %1952 = vst [vmem:[%s136 + $0x188] sm:$0xff] %v1070
        %1953 = vst [vmem:[%s136 + $0x190] sm:$0xff] %v1071
        %1954 = vst [vmem:[%s136 + $0x198] sm:$0xff] %v1072
        %1955 = vst [vmem:[%s136 + $0x1a0] sm:$0xff] %v1073
        %1956 = vst [vmem:[%s136 + $0x1a8] sm:$0xff] %v1074
        %1957 = vst [vmem:[%s136 + $0x1b0] sm:$0xff] %v1075
        %1958 = vst [vmem:[%s136 + $0x1b8] sm:$0xff] %v1076
        %1959 = vst [vmem:[%s136 + $0x1c0] sm:$0xff] %v1077
        %1960 = vst [vmem:[%s136 + $0x1c8] sm:$0xff] %v1078
        %1961 = vst [vmem:[%s136 + $0x1d0] sm:$0xff] %v1079
        %1962 = vst [vmem:[%s136 + $0x1d8] sm:$0xff] %v1080
        %1963 = vst [vmem:[%s136 + $0x1e0] sm:$0xff] %v1081
        %1964 = vst [vmem:[%s136 + $0x1e8] sm:$0xff] %v1082
        %1965 = vst [vmem:[%s136 + $0x1f0] sm:$0xff] %v1083
        %1966 = vst [vmem:[%s136 + $0x1f8] sm:$0xff] %v1084
        %1967 = vst [vmem:[%s136 + $0x200] sm:$0xff] %v1085
        %1968 = vst [vmem:[%s136 + $0x208] sm:$0xff] %v1086
        %1969 = vst [vmem:[%s136 + $0x210] sm:$0xff] %v1087
        %1970 = vst [vmem:[%s136 + $0x218] sm:$0xff] %v1088
        %1971 = vst [vmem:[%s136 + $0x220] sm:$0xff] %v1089
        %1972 = vst [vmem:[%s136 + $0x228] sm:$0xff] %v1090
        %1973 = vst [vmem:[%s136 + $0x230] sm:$0xff] %v1091
        %1974 = vst [vmem:[%s136 + $0x238] sm:$0xff] %v1092
        %1975 = vst [vmem:[%s136 + $0x240] sm:$0xff] %v1093
        %1976 = vst [vmem:[%s136 + $0x248] sm:$0xff] %v1094
        %1977 = vst [vmem:[%s136 + $0x250] sm:$0xff] %v1095
        %1978 = vst [vmem:[%s136 + $0x258] sm:$0xff] %v1096
        %1979 = vst [vmem:[%s136 + $0x260] sm:$0xff] %v1097
        %1980 = vst [vmem:[%s136 + $0x268] sm:$0xff] %v1098
        %1981 = vst [vmem:[%s136 + $0x270] sm:$0xff] %v1099
        %1982 = vst [vmem:[%s136 + $0x278] sm:$0xff] %v1100
        %1983 = vst [vmem:[%s136 + $0x280] sm:$0xff] %v1101
        %1984 = vst [vmem:[%s136 + $0x288] sm:$0xff] %v1102
        %1985 = vst [vmem:[%s136 + $0x290] sm:$0xff] %v1103
        %1986 = vst [vmem:[%s136 + $0x298] sm:$0xff] %v1104
        %1987 = vst [vmem:[%s136 + $0x2a0] sm:$0xff] %v1105
        %1988 = vst [vmem:[%s136 + $0x2a8] sm:$0xff] %v1106
        %1989 = vst [vmem:[%s136 + $0x2b0] sm:$0xff] %v1107
        %1990 = vst [vmem:[%s136 + $0x2b8] sm:$0xff] %v1108
        %1991 = vst [vmem:[%s136 + $0x2c0] sm:$0xff] %v1109
        %1992 = vst [vmem:[%s136 + $0x2c8] sm:$0xff] %v1110
        %1993 = vst [vmem:[%s136 + $0x2d0] sm:$0xff] %v1111
        %1994 = vst [vmem:[%s136 + $0x2d8] sm:$0xff] %v1112
        %1995 = vst [vmem:[%s136 + $0x2e0] sm:$0xff] %v1113
        %1996 = vst [vmem:[%s136 + $0x2e8] sm:$0xff] %v1114
        %1997 = vst [vmem:[%s136 + $0x2f0] sm:$0xff] %v1115
        %1998 = vst [vmem:[%s136 + $0x2f8] sm:$0xff] %v1116
        %1999 = vst [vmem:[%s136 + $0x300] sm:$0xff] %v1117
        %2000 = vst [vmem:[%s136 + $0x308] sm:$0xff] %v1118
        %2001 = vst [vmem:[%s136 + $0x310] sm:$0xff] %v1119
        %2002 = vst [vmem:[%s136 + $0x318] sm:$0xff] %v1120
        %2003 = vst [vmem:[%s136 + $0x320] sm:$0xff] %v1121
        %2004 = vst [vmem:[%s136 + $0x328] sm:$0xff] %v1122
        %2005 = vst [vmem:[%s136 + $0x330] sm:$0xff] %v1123
        %2006 = vst [vmem:[%s136 + $0x338] sm:$0xff] %v1124
        %2007 = vst [vmem:[%s136 + $0x340] sm:$0xff] %v1125
        %2008 = vst [vmem:[%s136 + $0x348] sm:$0xff] %v1126
        %2009 = vst [vmem:[%s136 + $0x350] sm:$0xff] %v1127
        %2010 = vst [vmem:[%s136 + $0x358] sm:$0xff] %v1128
        %2011 = vst [vmem:[%s136 + $0x360] sm:$0xff] %v1129
        %2012 = vst [vmem:[%s136 + $0x368] sm:$0xff] %v1130
        %2013 = vst [vmem:[%s136 + $0x370] sm:$0xff] %v1131
        %2014 = vst [vmem:[%s136 + $0x378] sm:$0xff] %v1132
        %2015 = vst [vmem:[%s136 + $0x380] sm:$0xff] %v1133
        %2016 = vst [vmem:[%s136 + $0x388] sm:$0xff] %v1134
        %2017 = vst [vmem:[%s136 + $0x390] sm:$0xff] %v1135
        %2018 = vst [vmem:[%s136 + $0x398] sm:$0xff] %v1136
        %2019 = vst [vmem:[%s136 + $0x3a0] sm:$0xff] %v1137
        %2020 = vst [vmem:[%s136 + $0x3a8] sm:$0xff] %v1138
        %2021 = vst [vmem:[%s136 + $0x3b0] sm:$0xff] %v1139
        %2022 = vst [vmem:[%s136 + $0x3b8] sm:$0xff] %v1140
        %2023 = vst [vmem:[%s136 + $0x3c0] sm:$0xff] %v1141
        %2024 = vst [vmem:[%s136 + $0x3c8] sm:$0xff] %v1142
        %2025 = vst [vmem:[%s136 + $0x3d0] sm:$0xff] %v1143
        %2026 = vst [vmem:[%s136 + $0x3d8] sm:$0xff] %v1144
        %2027 = vst [vmem:[%s136 + $0x3e0] sm:$0xff] %v1145
        %2028 = vst [vmem:[%s136 + $0x3e8] sm:$0xff] %v1146
        %2029 = vst [vmem:[%s136 + $0x3f0] sm:$0xff] %v1147
        %2030 = vst [vmem:[%s136 + $0x3f8] sm:$0xff] %v1148
        %2031 = vst [vmem:[%s136 + $0x400] sm:$0xff] %v1149
        %2032 = vst [vmem:[%s136 + $0x408] sm:$0xff] %v1150
        %2033 = vst [vmem:[%s136 + $0x410] sm:$0xff] %v1151
        %2034 = vst [vmem:[%s136 + $0x418] sm:$0xff] %v1152
        %2035 = vst [vmem:[%s136 + $0x420] sm:$0xff] %v1153
        %2036 = vst [vmem:[%s136 + $0x428] sm:$0xff] %v1154
        %2037 = vst [vmem:[%s136 + $0x430] sm:$0xff] %v1155
        %2038 = vst [vmem:[%s136 + $0x438] sm:$0xff] %v1156
        %2039 = vst [vmem:[%s136 + $0x440] sm:$0xff] %v1157
        %2040 = vst [vmem:[%s136 + $0x448] sm:$0xff] %v1158
        %2041 = vst [vmem:[%s136 + $0x450] sm:$0xff] %v1159
        %2042 = vst [vmem:[%s136 + $0x458] sm:$0xff] %v1160
        %2043 = vst [vmem:[%s136 + $0x460] sm:$0xff] %v1161
        %2044 = vst [vmem:[%s136 + $0x468] sm:$0xff] %v1162
        %2045 = vst [vmem:[%s136 + $0x470] sm:$0xff] %v1163
        %2046 = vst [vmem:[%s136 + $0x478] sm:$0xff] %v1164
        %2047 = vst [vmem:[%s136 + $0x480] sm:$0xff] %v1165
        %2048 = vst [vmem:[%s136 + $0x488] sm:$0xff] %v1166
        %2049 = vst [vmem:[%s136 + $0x490] sm:$0xff] %v1167
        %2050 = vst [vmem:[%s136 + $0x498] sm:$0xff] %v1168
        %2051 = vst [vmem:[%s136 + $0x4a0] sm:$0xff] %v1169
        %2052 = vst [vmem:[%s136 + $0x4a8] sm:$0xff] %v1170
        %2053 = vst [vmem:[%s136 + $0x4b0] sm:$0xff] %v1171
        %2054 = vst [vmem:[%s136 + $0x4b8] sm:$0xff] %v1172
        %2055 = vst [vmem:[%s136 + $0x4c0] sm:$0xff] %v1173
        %2056 = vst [vmem:[%s136 + $0x4c8] sm:$0xff] %v1174
        %2057 = vst [vmem:[%s136 + $0x4d0] sm:$0xff] %v1175
        %2058 = vst [vmem:[%s136 + $0x4d8] sm:$0xff] %v1176
        %2059 = vst [vmem:[%s136 + $0x4e0] sm:$0xff] %v1177
        %2060 = vst [vmem:[%s136 + $0x4e8] sm:$0xff] %v1178
        %2061 = vst [vmem:[%s136 + $0x4f0] sm:$0xff] %v1179
        %2062 = vst [vmem:[%s136 + $0x4f8] sm:$0xff] %v1180
        %2063 = vst [vmem:[%s136 + $0x500] sm:$0xff] %v1181
        %2064 = vst [vmem:[%s136 + $0x508] sm:$0xff] %v1182
        %2065 = vst [vmem:[%s136 + $0x510] sm:$0xff] %v1183
        %2066 = vst [vmem:[%s136 + $0x518] sm:$0xff] %v1184
        %2067 = vst [vmem:[%s136 + $0x520] sm:$0xff] %v1185
        %2068 = vst [vmem:[%s136 + $0x528] sm:$0xff] %v1186
        %2069 = vst [vmem:[%s136 + $0x530] sm:$0xff] %v1187
        %2070 = vst [vmem:[%s136 + $0x538] sm:$0xff] %v1188
        %2071 = vst [vmem:[%s136 + $0x540] sm:$0xff] %v1189
        %2072 = vst [vmem:[%s136 + $0x548] sm:$0xff] %v1190
        %2073 = vst [vmem:[%s136 + $0x550] sm:$0xff] %v1191
        %2074 = vst [vmem:[%s136 + $0x558] sm:$0xff] %v1192
        %2075 = vst [vmem:[%s136 + $0x560] sm:$0xff] %v1193
        %2076 = vst [vmem:[%s136 + $0x568] sm:$0xff] %v1194
        %2077 = vst [vmem:[%s136 + $0x570] sm:$0xff] %v1195
        %2078 = vst [vmem:[%s136 + $0x578] sm:$0xff] %v1196
        %2079 = vst [vmem:[%s136 + $0x580] sm:$0xff] %v1197
        %2080 = vst [vmem:[%s136 + $0x588] sm:$0xff] %v1198
        %2081 = vst [vmem:[%s136 + $0x590] sm:$0xff] %v1199
        %2082 = vst [vmem:[%s136 + $0x598] sm:$0xff] %v1200
        %2083 = vst [vmem:[%s136 + $0x5a0] sm:$0xff] %v1201
        %2084 = vst [vmem:[%s136 + $0x5a8] sm:$0xff] %v1202
        %2085 = vst [vmem:[%s136 + $0x5b0] sm:$0xff] %v1203
        %2086 = vst [vmem:[%s136 + $0x5b8] sm:$0xff] %v1204
        %2087 = vst [vmem:[%s136 + $0x5c0] sm:$0xff] %v1205
        %2088 = vst [vmem:[%s136 + $0x5c8] sm:$0xff] %v1206
        %2089 = vst [vmem:[%s136 + $0x5d0] sm:$0xff] %v1207
        %2090 = vst [vmem:[%s136 + $0x5d8] sm:$0xff] %v1208
        %2091 = vst [vmem:[%s136 + $0x5e0] sm:$0xff] %v1209
        %2092 = vst [vmem:[%s136 + $0x5e8] sm:$0xff] %v1210
        %2093 = vst [vmem:[%s136 + $0x5f0] sm:$0xff] %v1211
        %2094 = vst [vmem:[%s136 + $0x5f8] sm:$0xff] %v1212
        %2095 = vst [vmem:[%s136 + $0x600] sm:$0xff] %v1213
        %2096 = vst [vmem:[%s136 + $0x608] sm:$0xff] %v1214
        %2097 = vst [vmem:[%s136 + $0x610] sm:$0xff] %v1215
        %2098 = vst [vmem:[%s136 + $0x618] sm:$0xff] %v1216
        %2099 = vst [vmem:[%s136 + $0x620] sm:$0xff] %v1217
        %2100 = vst [vmem:[%s136 + $0x628] sm:$0xff] %v1218
        %2101 = vst [vmem:[%s136 + $0x630] sm:$0xff] %v1219
        %2102 = vst [vmem:[%s136 + $0x638] sm:$0xff] %v1220
        %2103 = vst [vmem:[%s136 + $0x640] sm:$0xff] %v1221
        %2104 = vst [vmem:[%s136 + $0x648] sm:$0xff] %v1222
        %2105 = vst [vmem:[%s136 + $0x650] sm:$0xff] %v1223
        %2106 = vst [vmem:[%s136 + $0x658] sm:$0xff] %v1224
        %2107 = vst [vmem:[%s136 + $0x660] sm:$0xff] %v1225
        %2108 = vst [vmem:[%s136 + $0x668] sm:$0xff] %v1226
        %2109 = vst [vmem:[%s136 + $0x670] sm:$0xff] %v1227
        %2110 = vst [vmem:[%s136 + $0x678] sm:$0xff] %v1228
        %2111 = vst [vmem:[%s136 + $0x680] sm:$0xff] %v1229
        %2112 = vst [vmem:[%s136 + $0x688] sm:$0xff] %v1230
        %2113 = vst [vmem:[%s136 + $0x690] sm:$0xff] %v1231
        %2114 = vst [vmem:[%s136 + $0x698] sm:$0xff] %v1232
        %2115 = vst [vmem:[%s136 + $0x6a0] sm:$0xff] %v1233
        %2116 = vst [vmem:[%s136 + $0x6a8] sm:$0xff] %v1234
        %2117 = vst [vmem:[%s136 + $0x6b0] sm:$0xff] %v1235
        %2118 = vst [vmem:[%s136 + $0x6b8] sm:$0xff] %v1236
        %2119 = vst [vmem:[%s136 + $0x6c0] sm:$0xff] %v1237
        %2120 = vst [vmem:[%s136 + $0x6c8] sm:$0xff] %v1238
        %2121 = vst [vmem:[%s136 + $0x6d0] sm:$0xff] %v1239
        %2122 = vst [vmem:[%s136 + $0x6d8] sm:$0xff] %v1240
        %2123 = vst [vmem:[%s136 + $0x6e0] sm:$0xff] %v1241
        %2124 = vst [vmem:[%s136 + $0x6e8] sm:$0xff] %v1242
        %2125 = vst [vmem:[%s136 + $0x6f0] sm:$0xff] %v1243
        %2126 = vst [vmem:[%s136 + $0x6f8] sm:$0xff] %v1244
        %2127 = vst [vmem:[%s136 + $0x700] sm:$0xff] %v1245
        %2128 = vst [vmem:[%s136 + $0x708] sm:$0xff] %v1246
        %2129 = vst [vmem:[%s136 + $0x710] sm:$0xff] %v1247
        %2130 = vst [vmem:[%s136 + $0x718] sm:$0xff] %v1248
        %2131 = vst [vmem:[%s136 + $0x720] sm:$0xff] %v1249
        %2132 = vst [vmem:[%s136 + $0x728] sm:$0xff] %v1250
        %2133 = vst [vmem:[%s136 + $0x730] sm:$0xff] %v1251
        %2134 = vst [vmem:[%s136 + $0x738] sm:$0xff] %v1252
        %2135 = vst [vmem:[%s136 + $0x740] sm:$0xff] %v1253
        %2136 = vst [vmem:[%s136 + $0x748] sm:$0xff] %v1254
        %2137 = vst [vmem:[%s136 + $0x750] sm:$0xff] %v1255
        %2138 = vst [vmem:[%s136 + $0x758] sm:$0xff] %v1256
        %2139 = vst [vmem:[%s136 + $0x760] sm:$0xff] %v1257
        %2140 = vst [vmem:[%s136 + $0x768] sm:$0xff] %v1258
        %2141 = vst [vmem:[%s136 + $0x770] sm:$0xff] %v1259
        %2142 = vst [vmem:[%s136 + $0x778] sm:$0xff] %v1260
        %2143 = vst [vmem:[%s136 + $0x780] sm:$0xff] %v1261
        %2144 = vst [vmem:[%s136 + $0x788] sm:$0xff] %v1262
        %2145 = vst [vmem:[%s136 + $0x790] sm:$0xff] %v1263
        %2146 = vst [vmem:[%s136 + $0x798] sm:$0xff] %v1264
        %2147 = vst [vmem:[%s136 + $0x7a0] sm:$0xff] %v1265
        %2148 = vst [vmem:[%s136 + $0x7a8] sm:$0xff] %v1266
        %2149 = vst [vmem:[%s136 + $0x7b0] sm:$0xff] %v1267
        %2150 = vst [vmem:[%s136 + $0x7b8] sm:$0xff] %v1268
        %2151 = vst [vmem:[%s136 + $0x7c0] sm:$0xff] %v1269
        %2152 = vst [vmem:[%s136 + $0x7c8] sm:$0xff] %v1270
        %2153 = vst [vmem:[%s136 + $0x7d0] sm:$0xff] %v1271
        %2154 = vst [vmem:[%s136 + $0x7d8] sm:$0xff] %v1272
        %2155 = vst [vmem:[%s136 + $0x7e0] sm:$0xff] %v1273
        %2156 = vst [vmem:[%s136 + $0x7e8] sm:$0xff] %v1274
        %2157 = vst [vmem:[%s136 + $0x7f0] sm:$0xff] %v1275
        %2158 = vst [vmem:[%s136 + $0x7f8] sm:$0xff] %v1276
        %2159 = vst [vmem:[%s136 + $0x800] sm:$0xff] %v1277
        %2160 = vst [vmem:[%s136 + $0x808] sm:$0xff] %v1278
        %2161 = vst [vmem:[%s136 + $0x810] sm:$0xff] %v1279
        %2162 = vst [vmem:[%s136 + $0x818] sm:$0xff] %v1280
        %2163 = vst [vmem:[%s136 + $0x820] sm:$0xff] %v1281
        %2164 = vst [vmem:[%s136 + $0x828] sm:$0xff] %v1282
        %2165 = vst [vmem:[%s136 + $0x830] sm:$0xff] %v1283
        %2166 = vst [vmem:[%s136 + $0x838] sm:$0xff] %v1284
        %2167 = vst [vmem:[%s136 + $0x840] sm:$0xff] %v1285
        %2168 = vst [vmem:[%s136 + $0x848] sm:$0xff] %v1286
        %2169 = vst [vmem:[%s136 + $0x850] sm:$0xff] %v1287
        %2170 = vst [vmem:[%s136 + $0x858] sm:$0xff] %v1288
        %2171 = vst [vmem:[%s136 + $0x860] sm:$0xff] %v1289
        %2172 = vst [vmem:[%s136 + $0x868] sm:$0xff] %v1290
        %2173 = vst [vmem:[%s136 + $0x870] sm:$0xff] %v1291
        %2174 = vst [vmem:[%s136 + $0x878] sm:$0xff] %v1292
        %2175 = vst [vmem:[%s136 + $0x880] sm:$0xff] %v1293
        %2176 = vst [vmem:[%s136 + $0x888] sm:$0xff] %v1294
        %2177 = vst [vmem:[%s136 + $0x890] sm:$0xff] %v1295
        %2178 = vst [vmem:[%s136 + $0x898] sm:$0xff] %v1296
        %2179 = vst [vmem:[%s136 + $0x8a0] sm:$0xff] %v1297
        %2180 = vst [vmem:[%s136 + $0x8a8] sm:$0xff] %v1298
        %2181 = vst [vmem:[%s136 + $0x8b0] sm:$0xff] %v1299
        %2182 = vst [vmem:[%s136 + $0x8b8] sm:$0xff] %v1300
        %2183 = vst [vmem:[%s136 + $0x8c0] sm:$0xff] %v1301
        %2184 = vst [vmem:[%s136 + $0x8c8] sm:$0xff] %v1302
        %2185 = vst [vmem:[%s136 + $0x8d0] sm:$0xff] %v1303
        %2186 = vst [vmem:[%s136 + $0x8d8] sm:$0xff] %v1304
        %2187 = vst [vmem:[%s136 + $0x8e0] sm:$0xff] %v1305
        %2188 = vst [vmem:[%s136 + $0x8e8] sm:$0xff] %v1306
        %2189 = vst [vmem:[%s136 + $0x8f0] sm:$0xff] %v1307
        %2190 = vst [vmem:[%s136 + $0x8f8] sm:$0xff] %v1308
        %2191 = vst [vmem:[%s136 + $0x900] sm:$0xff] %v1309
        %2192 = vst [vmem:[%s136 + $0x908] sm:$0xff] %v1310
        %2193 = vst [vmem:[%s136 + $0x910] sm:$0xff] %v1311
        %2194 = vst [vmem:[%s136 + $0x918] sm:$0xff] %v1312
        %2195 = vst [vmem:[%s136 + $0x920] sm:$0xff] %v1313
        %2196 = vst [vmem:[%s136 + $0x928] sm:$0xff] %v1314
        %2197 = vst [vmem:[%s136 + $0x930] sm:$0xff] %v1315
        %2198 = vst [vmem:[%s136 + $0x938] sm:$0xff] %v1316
        %2199 = vst [vmem:[%s136 + $0x940] sm:$0xff] %v1317
        %2200 = vst [vmem:[%s136 + $0x948] sm:$0xff] %v1318
        %2201 = vst [vmem:[%s136 + $0x950] sm:$0xff] %v1319
        %2202 = vst [vmem:[%s136 + $0x958] sm:$0xff] %v1320
        %2203 = vst [vmem:[%s136 + $0x960] sm:$0xff] %v1321
        %2204 = vst [vmem:[%s136 + $0x968] sm:$0xff] %v1322
        %2205 = vst [vmem:[%s136 + $0x970] sm:$0xff] %v1323
        %2206 = vst [vmem:[%s136 + $0x978] sm:$0xff] %v1324
        %2207 = vst [vmem:[%s136 + $0x980] sm:$0xff] %v1325
        %2208 = vst [vmem:[%s136 + $0x988] sm:$0xff] %v1326
        %2209 = vst [vmem:[%s136 + $0x990] sm:$0xff] %v1327
        %2210 = vst [vmem:[%s136 + $0x998] sm:$0xff] %v1328
        %2211 = vst [vmem:[%s136 + $0x9a0] sm:$0xff] %v1329
        %2212 = vst [vmem:[%s136 + $0x9a8] sm:$0xff] %v1330
        %2213 = vst [vmem:[%s136 + $0x9b0] sm:$0xff] %v1331
        %2214 = vst [vmem:[%s136 + $0x9b8] sm:$0xff] %v1332
        %2215 = vst [vmem:[%s136 + $0x9c0] sm:$0xff] %v1333
        %2216 = vst [vmem:[%s136 + $0x9c8] sm:$0xff] %v1334
        %2217 = vst [vmem:[%s136 + $0x9d0] sm:$0xff] %v1335
        %2218 = vst [vmem:[%s136 + $0x9d8] sm:$0xff] %v1336
        %2219 = vst [vmem:[%s136 + $0x9e0] sm:$0xff] %v1337
        %2220 = vst [vmem:[%s136 + $0x9e8] sm:$0xff] %v1338
        %2221 = vst [vmem:[%s136 + $0x9f0] sm:$0xff] %v1339
        %2222 = vst [vmem:[%s136 + $0x9f8] sm:$0xff] %v1340
        %2223 = vst [vmem:[%s136 + $0xa00] sm:$0xff] %v1341
        %2224 = vst [vmem:[%s136 + $0xa08] sm:$0xff] %v1342
        %2225 = vst [vmem:[%s136 + $0xa10] sm:$0xff] %v1343
        %2226 = vst [vmem:[%s136 + $0xa18] sm:$0xff] %v1344
        %2227 = vst [vmem:[%s136 + $0xa20] sm:$0xff] %v1345
        %2228 = vst [vmem:[%s136 + $0xa28] sm:$0xff] %v1346
        %2229 = vst [vmem:[%s136 + $0xa30] sm:$0xff] %v1347
        %2230 = vst [vmem:[%s136 + $0xa38] sm:$0xff] %v1348
        %2231 = vst [vmem:[%s136 + $0xa40] sm:$0xff] %v1349
        %2232 = vst [vmem:[%s136 + $0xa48] sm:$0xff] %v1350
        %2233 = vst [vmem:[%s136 + $0xa50] sm:$0xff] %v1351
        %2234 = vst [vmem:[%s136 + $0xa58] sm:$0xff] %v1352
        %2235 = vst [vmem:[%s136 + $0xa60] sm:$0xff] %v1353
        %2236 = vst [vmem:[%s136 + $0xa68] sm:$0xff] %v1354
        %2237 = vst [vmem:[%s136 + $0xa70] sm:$0xff] %v1355
        %2238 = vst [vmem:[%s136 + $0xa78] sm:$0xff] %v1356
        %2239 = vst [vmem:[%s136 + $0xa80] sm:$0xff] %v1357
        %2240 = vst [vmem:[%s136 + $0xa88] sm:$0xff] %v1358
        %2241 = vst [vmem:[%s136 + $0xa90] sm:$0xff] %v1359
        %2242 = vst [vmem:[%s136 + $0xa98] sm:$0xff] %v1360
        %2243 = vst [vmem:[%s136 + $0xaa0] sm:$0xff] %v1361
        %2244 = vst [vmem:[%s136 + $0xaa8] sm:$0xff] %v1362
        %2245 = vst [vmem:[%s136 + $0xab0] sm:$0xff] %v1363
        %2246 = vst [vmem:[%s136 + $0xab8] sm:$0xff] %v1364
        %2247 = vst [vmem:[%s136 + $0xac0] sm:$0xff] %v1365
        %2248 = vst [vmem:[%s136 + $0xac8] sm:$0xff] %v1366
        %2249 = vst [vmem:[%s136 + $0xad0] sm:$0xff] %v1367
        %2250 = vst [vmem:[%s136 + $0xad8] sm:$0xff] %v1368
        %2251 = vst [vmem:[%s136 + $0xae0] sm:$0xff] %v1369
        %2252 = vst [vmem:[%s136 + $0xae8] sm:$0xff] %v1370
        %2253 = vst [vmem:[%s136 + $0xaf0] sm:$0xff] %v1371
        %2254 = vst [vmem:[%s136 + $0xaf8] sm:$0xff] %v1372
        %2255 = vst [vmem:[%s136 + $0xb00] sm:$0xff] %v1373
        %2256 = vst [vmem:[%s136 + $0xb08] sm:$0xff] %v1374
        %2257 = vst [vmem:[%s136 + $0xb10] sm:$0xff] %v1375
        %2258 = vst [vmem:[%s136 + $0xb18] sm:$0xff] %v1376
        %2259 = vst [vmem:[%s136 + $0xb20] sm:$0xff] %v1377
        %2260 = vst [vmem:[%s136 + $0xb28] sm:$0xff] %v1378
        %2261 = vst [vmem:[%s136 + $0xb30] sm:$0xff] %v1379
        %2262 = vst [vmem:[%s136 + $0xb38] sm:$0xff] %v1380
        %2263 = vst [vmem:[%s136 + $0xb40] sm:$0xff] %v1381
        %2264 = vst [vmem:[%s136 + $0xb48] sm:$0xff] %v1382
        %2265 = vst [vmem:[%s136 + $0xb50] sm:$0xff] %v1383
        %2266 = vst [vmem:[%s136 + $0xb58] sm:$0xff] %v1384
        %2267 = vst [vmem:[%s136 + $0xb60] sm:$0xff] %v1385
        %2268 = vst [vmem:[%s136 + $0xb68] sm:$0xff] %v1386
        %2269 = vst [vmem:[%s136 + $0xb70] sm:$0xff] %v1387
        %2270 = vst [vmem:[%s136 + $0xb78] sm:$0xff] %v1388
        %2271 = vst [vmem:[%s136 + $0xb80] sm:$0xff] %v1389
        %2272 = vst [vmem:[%s136 + $0xb88] sm:$0xff] %v1390
        %2273 = vst [vmem:[%s136 + $0xb90] sm:$0xff] %v1391
        %2274 = vst [vmem:[%s136 + $0xb98] sm:$0xff] %v1392
        %2275 = vst [vmem:[%s136 + $0xba0] sm:$0xff] %v1393
        %2276 = vst [vmem:[%s136 + $0xba8] sm:$0xff] %v1394
        %2277 = vst [vmem:[%s136 + $0xbb0] sm:$0xff] %v1395
        %2278 = vst [vmem:[%s136 + $0xbb8] sm:$0xff] %v1396
        %2279 = vst [vmem:[%s136 + $0xbc0] sm:$0xff] %v1397
        %2280 = vst [vmem:[%s136 + $0xbc8] sm:$0xff] %v1398
        %2281 = vst [vmem:[%s136 + $0xbd0] sm:$0xff] %v1399
        %2282 = vst [vmem:[%s136 + $0xbd8] sm:$0xff] %v1400
        %2283 = vst [vmem:[%s136 + $0xbe0] sm:$0xff] %v1401
        %2284 = vst [vmem:[%s136 + $0xbe8] sm:$0xff] %v1402
        %2285 = vst [vmem:[%s136 + $0xbf0] sm:$0xff] %v1403
        %2286 = vst [vmem:[%s136 + $0xbf8] sm:$0xff] %v1404
        %2287 = vst [vmem:[%s136 + $0xc00] sm:$0xff] %v1405
        %2288 = vst [vmem:[%s136 + $0xc08] sm:$0xff] %v1406
        %2289 = vst [vmem:[%s136 + $0xc10] sm:$0xff] %v1407
        %2290 = vst [vmem:[%s136 + $0xc18] sm:$0xff] %v1408
        %2291 = vst [vmem:[%s136 + $0xc20] sm:$0xff] %v1409
        %2292 = vst [vmem:[%s136 + $0xc28] sm:$0xff] %v1410
        %2293 = vst [vmem:[%s136 + $0xc30] sm:$0xff] %v1411
        %2294 = vst [vmem:[%s136 + $0xc38] sm:$0xff] %v1412
        %2295 = vst [vmem:[%s136 + $0xc40] sm:$0xff] %v1413
        %2296 = vst [vmem:[%s136 + $0xc48] sm:$0xff] %v1414
        %2297 = vst [vmem:[%s136 + $0xc50] sm:$0xff] %v1415
        %2298 = vst [vmem:[%s136 + $0xc58] sm:$0xff] %v1416
        %2299 = vst [vmem:[%s136 + $0xc60] sm:$0xff] %v1417
        %2300 = vst [vmem:[%s136 + $0xc68] sm:$0xff] %v1418
        %2301 = vst [vmem:[%s136 + $0xc70] sm:$0xff] %v1419
        %2302 = vst [vmem:[%s136 + $0xc78] sm:$0xff] %v1420
        %2303 = vst [vmem:[%s136 + $0xc80] sm:$0xff] %v1421
        %2304 = vst [vmem:[%s136 + $0xc88] sm:$0xff] %v1422
        %2305 = vst [vmem:[%s136 + $0xc90] sm:$0xff] %v1423
        %2306 = vst [vmem:[%s136 + $0xc98] sm:$0xff] %v1424
        %2307 = vst [vmem:[%s136 + $0xca0] sm:$0xff] %v1425
        %2308 = vst [vmem:[%s136 + $0xca8] sm:$0xff] %v1426
        %2309 = vst [vmem:[%s136 + $0xcb0] sm:$0xff] %v1427
        %2310 = vst [vmem:[%s136 + $0xcb8] sm:$0xff] %v1428
        %2311 = vst [vmem:[%s136 + $0xcc0] sm:$0xff] %v1429
        %2312 = vst [vmem:[%s136 + $0xcc8] sm:$0xff] %v1430
        %2313 = vst [vmem:[%s136 + $0xcd0] sm:$0xff] %v1431
        %2314 = vst [vmem:[%s136 + $0xcd8] sm:$0xff] %v1432
        %2315 = vst [vmem:[%s136 + $0xce0] sm:$0xff] %v1433
        %2316 = vst [vmem:[%s136 + $0xce8] sm:$0xff] %v1434
        %2317 = vst [vmem:[%s136 + $0xcf0] sm:$0xff] %v1435
        %2318 = vst [vmem:[%s136 + $0xcf8] sm:$0xff] %v1436
        %2319 = vst [vmem:[%s136 + $0xd00] sm:$0xff] %v1437
        %2320 = vst [vmem:[%s136 + $0xd08] sm:$0xff] %v1438
        %2321 = vst [vmem:[%s136 + $0xd10] sm:$0xff] %v1439
        %2322 = vst [vmem:[%s136 + $0xd18] sm:$0xff] %v1440
        %2323 = vst [vmem:[%s136 + $0xd20] sm:$0xff] %v1441
        %2324 = vst [vmem:[%s136 + $0xd28] sm:$0xff] %v1442
        %2325 = vst [vmem:[%s136 + $0xd30] sm:$0xff] %v1443
        %2326 = vst [vmem:[%s136 + $0xd38] sm:$0xff] %v1444
        %2327 = vst [vmem:[%s136 + $0xd40] sm:$0xff] %v1445
        %2328 = vst [vmem:[%s136 + $0xd48] sm:$0xff] %v1446
        %2329 = vst [vmem:[%s136 + $0xd50] sm:$0xff] %v1447
        %2330 = vst [vmem:[%s136 + $0xd58] sm:$0xff] %v1448
        %2331 = vst [vmem:[%s136 + $0xd60] sm:$0xff] %v1449
        %2332 = vst [vmem:[%s136 + $0xd68] sm:$0xff] %v1450
        %2333 = vst [vmem:[%s136 + $0xd70] sm:$0xff] %v1451
        %2334 = vst [vmem:[%s136 + $0xd78] sm:$0xff] %v1452
        %2335 = vst [vmem:[%s136 + $0xd80] sm:$0xff] %v1453
        %2336 = vst [vmem:[%s136 + $0xd88] sm:$0xff] %v1454
        %2337 = vst [vmem:[%s136 + $0xd90] sm:$0xff] %v1455
        %2338 = vst [vmem:[%s136 + $0xd98] sm:$0xff] %v1456
        %2339 = vst [vmem:[%s136 + $0xda0] sm:$0xff] %v1457
        %2340 = vst [vmem:[%s136 + $0xda8] sm:$0xff] %v1458
        %2341 = vst [vmem:[%s136 + $0xdb0] sm:$0xff] %v1459
        %2342 = vst [vmem:[%s136 + $0xdb8] sm:$0xff] %v1460
        %2343 = vst [vmem:[%s136 + $0xdc0] sm:$0xff] %v1461
        %2344 = vst [vmem:[%s136 + $0xdc8] sm:$0xff] %v1462
        %2345 = vst [vmem:[%s136 + $0xdd0] sm:$0xff] %v1463
        %2346 = vst [vmem:[%s136 + $0xdd8] sm:$0xff] %v1464
        %2347 = vst [vmem:[%s136 + $0xde0] sm:$0xff] %v1465
        %2348 = vst [vmem:[%s136 + $0xde8] sm:$0xff] %v1466
        %2349 = vst [vmem:[%s136 + $0xdf0] sm:$0xff] %v1467
        %2350 = vst [vmem:[%s136 + $0xdf8] sm:$0xff] %v1468
        %2351 = vst [vmem:[%s136 + $0xe00] sm:$0xff] %v1469
        %2352 = vst [vmem:[%s136 + $0xe08] sm:$0xff] %v1470
        %2353 = vst [vmem:[%s136 + $0xe10] sm:$0xff] %v1471
        %2354 = vst [vmem:[%s136 + $0xe18] sm:$0xff] %v1472
        %2355 = vst [vmem:[%s136 + $0xe20] sm:$0xff] %v1473
        %2356 = vst [vmem:[%s136 + $0xe28] sm:$0xff] %v1474
        %2357 = vst [vmem:[%s136 + $0xe30] sm:$0xff] %v1475
        %2358 = vst [vmem:[%s136 + $0xe38] sm:$0xff] %v1476
        %2359 = vst [vmem:[%s136 + $0xe40] sm:$0xff] %v1477
        %2360 = vst [vmem:[%s136 + $0xe48] sm:$0xff] %v1478
        %2361 = vst [vmem:[%s136 + $0xe50] sm:$0xff] %v1479
        %2362 = vst [vmem:[%s136 + $0xe58] sm:$0xff] %v1480
        %2363 = vst [vmem:[%s136 + $0xe60] sm:$0xff] %v1481
        %2364 = vst [vmem:[%s136 + $0xe68] sm:$0xff] %v1482
        %2365 = vst [vmem:[%s136 + $0xe70] sm:$0xff] %v1483
        %2366 = vst [vmem:[%s136 + $0xe78] sm:$0xff] %v1484
        %2367 = vst [vmem:[%s136 + $0xe80] sm:$0xff] %v1485
        %2368 = vst [vmem:[%s136 + $0xe88] sm:$0xff] %v1486
        %2369 = vst [vmem:[%s136 + $0xe90] sm:$0xff] %v1487
        %2370 = vst [vmem:[%s136 + $0xe98] sm:$0xff] %v1488
        %2371 = vst [vmem:[%s136 + $0xea0] sm:$0xff] %v1489
        %2372 = vst [vmem:[%s136 + $0xea8] sm:$0xff] %v1490
        %2373 = vst [vmem:[%s136 + $0xeb0] sm:$0xff] %v1491
        %2374 = vst [vmem:[%s136 + $0xeb8] sm:$0xff] %v1492
        %2375 = vst [vmem:[%s136 + $0xec0] sm:$0xff] %v1493
        %2376 = vst [vmem:[%s136 + $0xec8] sm:$0xff] %v1494
        %2377 = vst [vmem:[%s136 + $0xed0] sm:$0xff] %v1495
        %2378 = vst [vmem:[%s136 + $0xed8] sm:$0xff] %v1496
        %2379 = vst [vmem:[%s136 + $0xee0] sm:$0xff] %v1497
        %2380 = vst [vmem:[%s136 + $0xee8] sm:$0xff] %v1498
        %2381 = vst [vmem:[%s136 + $0xef0] sm:$0xff] %v1499
        %2382 = vst [vmem:[%s136 + $0xef8] sm:$0xff] %v1500
        %2383 = vst [vmem:[%s136 + $0xf00] sm:$0xff] %v1501
        %2384 = vst [vmem:[%s136 + $0xf08] sm:$0xff] %v1502
        %2385 = vst [vmem:[%s136 + $0xf10] sm:$0xff] %v1503
        %2386 = vst [vmem:[%s136 + $0xf18] sm:$0xff] %v1504
        %2387 = vst [vmem:[%s136 + $0xf20] sm:$0xff] %v1505
        %2388 = vst [vmem:[%s136 + $0xf28] sm:$0xff] %v1506
        %2389 = vst [vmem:[%s136 + $0xf30] sm:$0xff] %v1507
        %2390 = vst [vmem:[%s136 + $0xf38] sm:$0xff] %v1508
        %2391 = vst [vmem:[%s136 + $0xf40] sm:$0xff] %v1509
        %2392 = vst [vmem:[%s136 + $0xf48] sm:$0xff] %v1510
        %2393 = vst [vmem:[%s136 + $0xf50] sm:$0xff] %v1511
        %2394 = vst [vmem:[%s136 + $0xf58] sm:$0xff] %v1512
        %2395 = vst [vmem:[%s136 + $0xf60] sm:$0xff] %v1513
        %2396 = vst [vmem:[%s136 + $0xf68] sm:$0xff] %v1514
        %2397 = vst [vmem:[%s136 + $0xf70] sm:$0xff] %v1515
        %2398 = vst [vmem:[%s136 + $0xf78] sm:$0xff] %v1516
        %2399 = vst [vmem:[%s136 + $0xf80] sm:$0xff] %v1517
        %2400 = vst [vmem:[%s136 + $0xf88] sm:$0xff] %v1518
        %2401 = vst [vmem:[%s136 + $0xf90] sm:$0xff] %v1519
        %2402 = vst [vmem:[%s136 + $0xf98] sm:$0xff] %v1520
        %2403 = vst [vmem:[%s136 + $0xfa0] sm:$0xff] %v1521
        %2404 = vst [vmem:[%s136 + $0xfa8] sm:$0xff] %v1522
        %2405 = vst [vmem:[%s136 + $0xfb0] sm:$0xff] %v1523
        %2406 = vst [vmem:[%s136 + $0xfb8] sm:$0xff] %v1524
        %2407 = vst [vmem:[%s136 + $0xfc0] sm:$0xff] %v1525
        %2408 = vst [vmem:[%s136 + $0xfc8] sm:$0xff] %v1526
        %2409 = vst [vmem:[%s136 + $0xfd0] sm:$0xff] %v1527
        %2410 = vst [vmem:[%s136 + $0xfd8] sm:$0xff] %v1528
        %2411 = vst [vmem:[%s136 + $0xfe0] sm:$0xff] %v1529
        %2412 = vst [vmem:[%s136 + $0xfe8] sm:$0xff] %v1530
        %2413 = vst [vmem:[%s136 + $0xff0] sm:$0xff] %v1531
        %2414 = vst [vmem:[%s136 + $0xff8] sm:$0xff] %v1532
        %2415 = vst [vmem:[%s136 + $0x1000] sm:$0xff] %v1533
        %2416 = vst [vmem:[%s136 + $0x1008] sm:$0xff] %v1534
        %2417 = vst [vmem:[%s136 + $0x1010] sm:$0xff] %v1535
        %2418 = vst [vmem:[%s136 + $0x1018] sm:$0xff] %v1536
        %2419 = vst [vmem:[%s136 + $0x1020] sm:$0xff] %v1537
        %2420 = vst [vmem:[%s136 + $0x1028] sm:$0xff] %v1538
        %2421 = vst [vmem:[%s136 + $0x1030] sm:$0xff] %v1539
        %2422 = vst [vmem:[%s136 + $0x1038] sm:$0xff] %v1540
        %2423 = vst [vmem:[%s136 + $0x1040] sm:$0xff] %v1541
        %2424 = vst [vmem:[%s136 + $0x1048] sm:$0xff] %v1542
        %2425 = vst [vmem:[%s136 + $0x1050] sm:$0xff] %v1543
        %2426 = vst [vmem:[%s136 + $0x1058] sm:$0xff] %v1544
        %2427 = vst [vmem:[%s136 + $0x1060] sm:$0xff] %v1545
        %2428 = vst [vmem:[%s136 + $0x1068] sm:$0xff] %v1546
        %2429 = vst [vmem:[%s136 + $0x1070] sm:$0xff] %v1547
        %2430 = vst [vmem:[%s136 + $0x1078] sm:$0xff] %v1548
        %2431 = vst [vmem:[%s136 + $0x1080] sm:$0xff] %v1549
        %2432 = vst [vmem:[%s136 + $0x1088] sm:$0xff] %v1550
        %2433 = vst [vmem:[%s136 + $0x1090] sm:$0xff] %v1551
        %2434 = vst [vmem:[%s136 + $0x1098] sm:$0xff] %v1552
        %2435 = vst [vmem:[%s136 + $0x10a0] sm:$0xff] %v1553
        %2436 = vst [vmem:[%s136 + $0x10a8] sm:$0xff] %v1554
        %2437 = vst [vmem:[%s136 + $0x10b0] sm:$0xff] %v1555
        %2438 = vst [vmem:[%s136 + $0x10b8] sm:$0xff] %v1556
        %2439 = vst [vmem:[%s136 + $0x10c0] sm:$0xff] %v1557
        %2440 = vst [vmem:[%s136 + $0x10c8] sm:$0xff] %v1558
        %2441 = vst [vmem:[%s136 + $0x10d0] sm:$0xff] %v1559
        %2442 = vst [vmem:[%s136 + $0x10d8] sm:$0xff] %v1560
        %2443 = vst [vmem:[%s136 + $0x10e0] sm:$0xff] %v1561
        %2444 = vst [vmem:[%s136 + $0x10e8] sm:$0xff] %v1562
        %2445 = vst [vmem:[%s136 + $0x10f0] sm:$0xff] %v1563
        %2446 = vst [vmem:[%s136 + $0x10f8] sm:$0xff] %v1564
        %2447 = vst [vmem:[%s136 + $0x1100] sm:$0xff] %v1565
        %2448 = vst [vmem:[%s136 + $0x1108] sm:$0xff] %v1566
        %2449 = vst [vmem:[%s136 + $0x1110] sm:$0xff] %v1567
        %2450 = vst [vmem:[%s136 + $0x1118] sm:$0xff] %v1568
        %2451 = vst [vmem:[%s136 + $0x1120] sm:$0xff] %v1569
        %2452 = vst [vmem:[%s136 + $0x1128] sm:$0xff] %v1570
        %2453 = vst [vmem:[%s136 + $0x1130] sm:$0xff] %v1571
        %2454 = vst [vmem:[%s136 + $0x1138] sm:$0xff] %v1572
        %2455 = vst [vmem:[%s136 + $0x1140] sm:$0xff] %v1573
        %2456 = vst [vmem:[%s136 + $0x1148] sm:$0xff] %v1574
        %2457 = vst [vmem:[%s136 + $0x1150] sm:$0xff] %v1575
        %2458 = vst [vmem:[%s136 + $0x1158] sm:$0xff] %v1576
        %2459 = vst [vmem:[%s136 + $0x1160] sm:$0xff] %v1577
        %2460 = vst [vmem:[%s136 + $0x1168] sm:$0xff] %v1578
        %2461 = vst [vmem:[%s136 + $0x1170] sm:$0xff] %v1579
        %2462 = vst [vmem:[%s136 + $0x1178] sm:$0xff] %v1580
        %2463 = vst [vmem:[%s136 + $0x1180] sm:$0xff] %v1581
        %2464 = vst [vmem:[%s136 + $0x1188] sm:$0xff] %v1582
        %2465 = vst [vmem:[%s136 + $0x1190] sm:$0xff] %v1583
        %2466 = vst [vmem:[%s136 + $0x1198] sm:$0xff] %v1584
        %2467 = vst [vmem:[%s136 + $0x11a0] sm:$0xff] %v1585
        %2468 = vst [vmem:[%s136 + $0x11a8] sm:$0xff] %v1586
        %2469 = vst [vmem:[%s136 + $0x11b0] sm:$0xff] %v1587
        %2470 = vst [vmem:[%s136 + $0x11b8] sm:$0xff] %v1588
        %2471 = vst [vmem:[%s136 + $0x11c0] sm:$0xff] %v1589
        %2472 = vst [vmem:[%s136 + $0x11c8] sm:$0xff] %v1590
        %2473 = vst [vmem:[%s136 + $0x11d0] sm:$0xff] %v1591
        %2474 = vst [vmem:[%s136 + $0x11d8] sm:$0xff] %v1592
        %2475 = vst [vmem:[%s136 + $0x11e0] sm:$0xff] %v1593
        %2476 = vst [vmem:[%s136 + $0x11e8] sm:$0xff] %v1594
        %2477 = vst [vmem:[%s136 + $0x11f0] sm:$0xff] %v1595
        %2478 = vst [vmem:[%s136 + $0x11f8] sm:$0xff] %v1596
        %2479 = vst [vmem:[%s136 + $0x1200] sm:$0xff] %v1597
        %2480 = vst [vmem:[%s136 + $0x1208] sm:$0xff] %v1598
        %2481 = vst [vmem:[%s136 + $0x1210] sm:$0xff] %v1599
        %2482 = vst [vmem:[%s136 + $0x1218] sm:$0xff] %v1600
        %2483 = vst [vmem:[%s136 + $0x1220] sm:$0xff] %v1601
        %2484 = vst [vmem:[%s136 + $0x1228] sm:$0xff] %v1602
        %2485 = vst [vmem:[%s136 + $0x1230] sm:$0xff] %v1603
        %2486 = vst [vmem:[%s136 + $0x1238] sm:$0xff] %v1604
        %2487 = vst [vmem:[%s136 + $0x1240] sm:$0xff] %v1605
        %2488 = vst [vmem:[%s136 + $0x1248] sm:$0xff] %v1606
        %2489 = vst [vmem:[%s136 + $0x1250] sm:$0xff] %v1607
        %2490 = vst [vmem:[%s136 + $0x1258] sm:$0xff] %v1608
        %2491 = vst [vmem:[%s136 + $0x1260] sm:$0xff] %v1609
        %2492 = vst [vmem:[%s136 + $0x1268] sm:$0xff] %v1610
        %2493 = vst [vmem:[%s136 + $0x1270] sm:$0xff] %v1611
        %2494 = vst [vmem:[%s136 + $0x1278] sm:$0xff] %v1612
        %2495 = vst [vmem:[%s136 + $0x1280] sm:$0xff] %v1613
        %2496 = vst [vmem:[%s136 + $0x1288] sm:$0xff] %v1614
        %2497 = vst [vmem:[%s136 + $0x1290] sm:$0xff] %v1615
        %2498 = vst [vmem:[%s136 + $0x1298] sm:$0xff] %v1616
        %2499 = vst [vmem:[%s136 + $0x12a0] sm:$0xff] %v1617
        %2500 = vst [vmem:[%s136 + $0x12a8] sm:$0xff] %v1618
        %2501 = vst [vmem:[%s136 + $0x12b0] sm:$0xff] %v1619
        %2502 = vst [vmem:[%s136 + $0x12b8] sm:$0xff] %v1620
        %2503 = vst [vmem:[%s136 + $0x12c0] sm:$0xff] %v1621
        %2504 = vst [vmem:[%s136 + $0x12c8] sm:$0xff] %v1622
        %2505 = vst [vmem:[%s136 + $0x12d0] sm:$0xff] %v1623
        %2506 = vst [vmem:[%s136 + $0x12d8] sm:$0xff] %v1624
        %2507 = vst [vmem:[%s136 + $0x12e0] sm:$0xff] %v1625
        %2508 = vst [vmem:[%s136 + $0x12e8] sm:$0xff] %v1626
        %2509 = vst [vmem:[%s136 + $0x12f0] sm:$0xff] %v1627
        %2510 = vst [vmem:[%s136 + $0x12f8] sm:$0xff] %v1628
        %2511 = vst [vmem:[%s136 + $0x1300] sm:$0xff] %v1629
        %2512 = vst [vmem:[%s136 + $0x1308] sm:$0xff] %v1630
        %2513 = vst [vmem:[%s136 + $0x1310] sm:$0xff] %v1631
        %2514 = vst [vmem:[%s136 + $0x1318] sm:$0xff] %v1632
        %2515 = vst [vmem:[%s136 + $0x1320] sm:$0xff] %v1633
        %2516 = vst [vmem:[%s136 + $0x1328] sm:$0xff] %v1634
        %2517 = vst [vmem:[%s136 + $0x1330] sm:$0xff] %v1635
        %2518 = vst [vmem:[%s136 + $0x1338] sm:$0xff] %v1636
        %2519 = vst [vmem:[%s136 + $0x1340] sm:$0xff] %v1637
        %2520 = vst [vmem:[%s136 + $0x1348] sm:$0xff] %v1638
        %2521 = vst [vmem:[%s136 + $0x1350] sm:$0xff] %v1639
        %2522 = vst [vmem:[%s136 + $0x1358] sm:$0xff] %v1640
        %2523 = vst [vmem:[%s136 + $0x1360] sm:$0xff] %v1641
        %2524 = vst [vmem:[%s136 + $0x1368] sm:$0xff] %v1642
        %2525 = vst [vmem:[%s136 + $0x1370] sm:$0xff] %v1643
        %2526 = vst [vmem:[%s136 + $0x1378] sm:$0xff] %v1644
        %2527 = vst [vmem:[%s136 + $0x1380] sm:$0xff] %v1645
        %2528 = vst [vmem:[%s136 + $0x1388] sm:$0xff] %v1646
        %2529 = vst [vmem:[%s136 + $0x1390] sm:$0xff] %v1647
        %2530 = vst [vmem:[%s136 + $0x1398] sm:$0xff] %v1648
        %2531 = vst [vmem:[%s136 + $0x13a0] sm:$0xff] %v1649
        %2532 = vst [vmem:[%s136 + $0x13a8] sm:$0xff] %v1650
        %2533 = vst [vmem:[%s136 + $0x13b0] sm:$0xff] %v1651
        %2534 = vst [vmem:[%s136 + $0x13b8] sm:$0xff] %v1652
        %2535 = vst [vmem:[%s136 + $0x13c0] sm:$0xff] %v1653
        %2536 = vst [vmem:[%s136 + $0x13c8] sm:$0xff] %v1654
        %2537 = vst [vmem:[%s136 + $0x13d0] sm:$0xff] %v1655
        %2538 = vst [vmem:[%s136 + $0x13d8] sm:$0xff] %v1656
        %2539 = vst [vmem:[%s136 + $0x13e0] sm:$0xff] %v1657
        %2540 = vst [vmem:[%s136 + $0x13e8] sm:$0xff] %v1658
        %2541 = vst [vmem:[%s136 + $0x13f0] sm:$0xff] %v1659
        %2542 = vst [vmem:[%s136 + $0x13f8] sm:$0xff] %v1660
        %2543 = vst [vmem:[%s136 + $0x1400] sm:$0xff] %v1661
        %2544 = vst [vmem:[%s136 + $0x1408] sm:$0xff] %v1662
        %2545 = vst [vmem:[%s136 + $0x1410] sm:$0xff] %v1663
        %2546 = vst [vmem:[%s136 + $0x1418] sm:$0xff] %v1664
        %2547 = vst [vmem:[%s136 + $0x1420] sm:$0xff] %v1665
        %2548 = vst [vmem:[%s136 + $0x1428] sm:$0xff] %v1666
        %2549 = vst [vmem:[%s136 + $0x1430] sm:$0xff] %v1667
        %2550 = vst [vmem:[%s136 + $0x1438] sm:$0xff] %v1668
        %2551 = vst [vmem:[%s136 + $0x1440] sm:$0xff] %v1669
        %2552 = vst [vmem:[%s136 + $0x1448] sm:$0xff] %v1670
        %2553 = vst [vmem:[%s136 + $0x1450] sm:$0xff] %v1671
        %2554 = vst [vmem:[%s136 + $0x1458] sm:$0xff] %v1672
        %2555 = vst [vmem:[%s136 + $0x1460] sm:$0xff] %v1673
        %2556 = vst [vmem:[%s136 + $0x1468] sm:$0xff] %v1674
        %2557 = vst [vmem:[%s136 + $0x1470] sm:$0xff] %v1675
        %2558 = vst [vmem:[%s136 + $0x1478] sm:$0xff] %v1676
        %2559 = vst [vmem:[%s136 + $0x1480] sm:$0xff] %v1677
        %2560 = vst [vmem:[%s136 + $0x1488] sm:$0xff] %v1678
        %2561 = vst [vmem:[%s136 + $0x1490] sm:$0xff] %v1679
        %2562 = vst [vmem:[%s136 + $0x1498] sm:$0xff] %v1680
        %2563 = vst [vmem:[%s136 + $0x14a0] sm:$0xff] %v1681
        %2564 = vst [vmem:[%s136 + $0x14a8] sm:$0xff] %v1682
        %2565 = vst [vmem:[%s136 + $0x14b0] sm:$0xff] %v1683
        %2566 = vst [vmem:[%s136 + $0x14b8] sm:$0xff] %v1684
        %2567 = vst [vmem:[%s136 + $0x14c0] sm:$0xff] %v1685
        %2568 = vst [vmem:[%s136 + $0x14c8] sm:$0xff] %v1686
        %2569 = vst [vmem:[%s136 + $0x14d0] sm:$0xff] %v1687
        %2570 = vst [vmem:[%s136 + $0x14d8] sm:$0xff] %v1688
        %2571 = vst [vmem:[%s136 + $0x14e0] sm:$0xff] %v1689
        %2572 = vst [vmem:[%s136 + $0x14e8] sm:$0xff] %v1690
        %2573 = vst [vmem:[%s136 + $0x14f0] sm:$0xff] %v1691
        %2574 = vst [vmem:[%s136 + $0x14f8] sm:$0xff] %v1692
        %2575 = vst [vmem:[%s136 + $0x1500] sm:$0xff] %v1693
        %2576 = vst [vmem:[%s136 + $0x1508] sm:$0xff] %v1694
        %2577 = vst [vmem:[%s136 + $0x1510] sm:$0xff] %v1695
        %2578 = vst [vmem:[%s136 + $0x1518] sm:$0xff] %v1696
        %2579 = vst [vmem:[%s136 + $0x1520] sm:$0xff] %v1697
        %2580 = vst [vmem:[%s136 + $0x1528] sm:$0xff] %v1698
        %2581 = vst [vmem:[%s136 + $0x1530] sm:$0xff] %v1699
        %2582 = vst [vmem:[%s136 + $0x1538] sm:$0xff] %v1700
        %2583 = vst [vmem:[%s136 + $0x1540] sm:$0xff] %v1701
        %2584 = vst [vmem:[%s136 + $0x1548] sm:$0xff] %v1702
        %2585 = vst [vmem:[%s136 + $0x1550] sm:$0xff] %v1703
        %2586 = vst [vmem:[%s136 + $0x1558] sm:$0xff] %v1704
        %2587 = vst [vmem:[%s136 + $0x1560] sm:$0xff] %v1705
        %2588 = vst [vmem:[%s136 + $0x1568] sm:$0xff] %v1706
        %2589 = vst [vmem:[%s136 + $0x1570] sm:$0xff] %v1707
        %2590 = vst [vmem:[%s136 + $0x1578] sm:$0xff] %v1708
        %2591 = vst [vmem:[%s136 + $0x1580] sm:$0xff] %v1709
        %2592 = vst [vmem:[%s136 + $0x1588] sm:$0xff] %v1710
        %2593 = vst [vmem:[%s136 + $0x1590] sm:$0xff] %v1711
        %2594 = vst [vmem:[%s136 + $0x1598] sm:$0xff] %v1712
        %2595 = vst [vmem:[%s136 + $0x15a0] sm:$0xff] %v1713
        %2596 = vst [vmem:[%s136 + $0x15a8] sm:$0xff] %v1714
        %2597 = vst [vmem:[%s136 + $0x15b0] sm:$0xff] %v1715
        %2598 = vst [vmem:[%s136 + $0x15b8] sm:$0xff] %v1716
        %2599 = vst [vmem:[%s136 + $0x15c0] sm:$0xff] %v1717
        %2600 = vst [vmem:[%s136 + $0x15c8] sm:$0xff] %v1718
        %2601 = vst [vmem:[%s136 + $0x15d0] sm:$0xff] %v1719
        %2602 = vst [vmem:[%s136 + $0x15d8] sm:$0xff] %v1720
        %2603 = vst [vmem:[%s136 + $0x15e0] sm:$0xff] %v1721
        %2604 = vst [vmem:[%s136 + $0x15e8] sm:$0xff] %v1722
        %2605 = vst [vmem:[%s136 + $0x15f0] sm:$0xff] %v1723
        %2606 = vst [vmem:[%s136 + $0x15f8] sm:$0xff] %v1724
        %2607 = vst [vmem:[%s136 + $0x1600] sm:$0xff] %v1725
        %2608 = vst [vmem:[%s136 + $0x1608] sm:$0xff] %v1726
        %2609 = vst [vmem:[%s136 + $0x1610] sm:$0xff] %v1727
        %2610 = vst [vmem:[%s136 + $0x1618] sm:$0xff] %v1728
        %2611 = vst [vmem:[%s136 + $0x1620] sm:$0xff] %v1729
        %2612 = vst [vmem:[%s136 + $0x1628] sm:$0xff] %v1730
        %2613 = vst [vmem:[%s136 + $0x1630] sm:$0xff] %v1731
        %2614 = vst [vmem:[%s136 + $0x1638] sm:$0xff] %v1732
        %2615 = vst [vmem:[%s136 + $0x1640] sm:$0xff] %v1733
        %2616 = vst [vmem:[%s136 + $0x1648] sm:$0xff] %v1734
        %2617 = vst [vmem:[%s136 + $0x1650] sm:$0xff] %v1735
        %2618 = vst [vmem:[%s136 + $0x1658] sm:$0xff] %v1736
        %2619 = vst [vmem:[%s136 + $0x1660] sm:$0xff] %v1737
        %2620 = vst [vmem:[%s136 + $0x1668] sm:$0xff] %v1738
        %2621 = vst [vmem:[%s136 + $0x1670] sm:$0xff] %v1739
        %2622 = vst [vmem:[%s136 + $0x1678] sm:$0xff] %v1740
        %2623 = vst [vmem:[%s136 + $0x1680] sm:$0xff] %v1741
        %2624 = vst [vmem:[%s136 + $0x1688] sm:$0xff] %v1742
        %2625 = vst [vmem:[%s136 + $0x1690] sm:$0xff] %v1743
        %2626 = vst [vmem:[%s136 + $0x1698] sm:$0xff] %v1744
        %2627 = vst [vmem:[%s136 + $0x16a0] sm:$0xff] %v1745
        %2628 = vst [vmem:[%s136 + $0x16a8] sm:$0xff] %v1746
        %2629 = vst [vmem:[%s136 + $0x16b0] sm:$0xff] %v1747
        %2630 = vst [vmem:[%s136 + $0x16b8] sm:$0xff] %v1748
        %2631 = vst [vmem:[%s136 + $0x16c0] sm:$0xff] %v1749
        %2632 = vst [vmem:[%s136 + $0x16c8] sm:$0xff] %v1750
        %2633 = vst [vmem:[%s136 + $0x16d0] sm:$0xff] %v1751
        %2634 = vst [vmem:[%s136 + $0x16d8] sm:$0xff] %v1752
        %2635 = vst [vmem:[%s136 + $0x16e0] sm:$0xff] %v1753
        %2636 = vst [vmem:[%s136 + $0x16e8] sm:$0xff] %v1754
        %2637 = vst [vmem:[%s136 + $0x16f0] sm:$0xff] %v1755
        %2638 = vst [vmem:[%s136 + $0x16f8] sm:$0xff] %v1756
        %2639 = vst [vmem:[%s136 + $0x1700] sm:$0xff] %v1757
        %2640 = vst [vmem:[%s136 + $0x1708] sm:$0xff] %v1758
        %2641 = vst [vmem:[%s136 + $0x1710] sm:$0xff] %v1759
        %2642 = vst [vmem:[%s136 + $0x1718] sm:$0xff] %v1760
        %2643 = vst [vmem:[%s136 + $0x1720] sm:$0xff] %v1761
        %2644 = vst [vmem:[%s136 + $0x1728] sm:$0xff] %v1762
        %2645 = vst [vmem:[%s136 + $0x1730] sm:$0xff] %v1763
        %2646 = vst [vmem:[%s136 + $0x1738] sm:$0xff] %v1764
        %2647 = vst [vmem:[%s136 + $0x1740] sm:$0xff] %v1765
        %2648 = vst [vmem:[%s136 + $0x1748] sm:$0xff] %v1766
        %2649 = vst [vmem:[%s136 + $0x1750] sm:$0xff] %v1767
        %2650 = vst [vmem:[%s136 + $0x1758] sm:$0xff] %v1768
        %2651 = vst [vmem:[%s136 + $0x1760] sm:$0xff] %v1769
        %2652 = vst [vmem:[%s136 + $0x1768] sm:$0xff] %v1770
        %2653 = vst [vmem:[%s136 + $0x1770] sm:$0xff] %v1771
        %2654 = vst [vmem:[%s136 + $0x1778] sm:$0xff] %v1772
        %2655 = vst [vmem:[%s136 + $0x1780] sm:$0xff] %v1773
        %2656 = vst [vmem:[%s136 + $0x1788] sm:$0xff] %v1774
        %2657 = vst [vmem:[%s136 + $0x1790] sm:$0xff] %v1775
        %2658 = vst [vmem:[%s136 + $0x1798] sm:$0xff] %v1776
        %2659 = vst [vmem:[%s136 + $0x17a0] sm:$0xff] %v1777
        %2660 = vst [vmem:[%s136 + $0x17a8] sm:$0xff] %v1778
        %2661 = vst [vmem:[%s136 + $0x17b0] sm:$0xff] %v1779
        %2662 = vst [vmem:[%s136 + $0x17b8] sm:$0xff] %v1780
        %2663 = vst [vmem:[%s136 + $0x17c0] sm:$0xff] %v1781
        %2664 = vst [vmem:[%s136 + $0x17c8] sm:$0xff] %v1782
        %2665 = vst [vmem:[%s136 + $0x17d0] sm:$0xff] %v1783
        %2666 = vst [vmem:[%s136 + $0x17d8] sm:$0xff] %v1784
        %2667 = vst [vmem:[%s136 + $0x17e0] sm:$0xff] %v1785
        %2668 = vst [vmem:[%s136 + $0x17e8] sm:$0xff] %v1786
        %2669 = vst [vmem:[%s136 + $0x17f0] sm:$0xff] %v1787
        %2670 = vst [vmem:[%s136 + $0x17f8] sm:$0xff] %v1788
        %2671 = vst [vmem:[%s136 + $0x1800] sm:$0xff] %v1789
        %2672 = vst [vmem:[%s136 + $0x1808] sm:$0xff] %v1790
        %2673 = vst [vmem:[%s136 + $0x1810] sm:$0xff] %v1791
        %2674 = vst [vmem:[%s136 + $0x1818] sm:$0xff] %v1792
        %2675 = vst [vmem:[%s136 + $0x1820] sm:$0xff] %v1793
        %2676 = vst [vmem:[%s136 + $0x1828] sm:$0xff] %v1794
        %2677 = vst [vmem:[%s136 + $0x1830] sm:$0xff] %v1795
        %2678 = vst [vmem:[%s136 + $0x1838] sm:$0xff] %v1796
        %2679 = vst [vmem:[%s136 + $0x1840] sm:$0xff] %v1797
        %2680 = vst [vmem:[%s136 + $0x1848] sm:$0xff] %v1798
        %2681 = vst [vmem:[%s136 + $0x1850] sm:$0xff] %v1799
        %2682 = vst [vmem:[%s136 + $0x1858] sm:$0xff] %v1800
        %2683 = vst [vmem:[%s136 + $0x1860] sm:$0xff] %v1801
        %2684 = vst [vmem:[%s136 + $0x1868] sm:$0xff] %v1802
        %2685 = vst [vmem:[%s136 + $0x1870] sm:$0xff] %v1803
        %2686 = vst [vmem:[%s136 + $0x1878] sm:$0xff] %v1804
        %2687 = vst [vmem:[%s136 + $0x1880] sm:$0xff] %v1805
        %2688 = vst [vmem:[%s136 + $0x1888] sm:$0xff] %v1806
        %2689 = vst [vmem:[%s136 + $0x1890] sm:$0xff] %v1807
        %2690 = vst [vmem:[%s136 + $0x1898] sm:$0xff] %v1808
        %2691 = vst [vmem:[%s136 + $0x18a0] sm:$0xff] %v1809
        %2692 = vst [vmem:[%s136 + $0x18a8] sm:$0xff] %v1810
        %2693 = vst [vmem:[%s136 + $0x18b0] sm:$0xff] %v1811
        %2694 = vst [vmem:[%s136 + $0x18b8] sm:$0xff] %v1812
        %2695 = vst [vmem:[%s136 + $0x18c0] sm:$0xff] %v1813
        %2696 = vst [vmem:[%s136 + $0x18c8] sm:$0xff] %v1814
        %2697 = vst [vmem:[%s136 + $0x18d0] sm:$0xff] %v1815
        %2698 = vst [vmem:[%s136 + $0x18d8] sm:$0xff] %v1816
        %2699 = vst [vmem:[%s136 + $0x18e0] sm:$0xff] %v1817
        %2700 = vst [vmem:[%s136 + $0x18e8] sm:$0xff] %v1818
        %2701 = vst [vmem:[%s136 + $0x18f0] sm:$0xff] %v1819
        %2702 = vst [vmem:[%s136 + $0x18f8] sm:$0xff] %v1820
        %2703 = vst [vmem:[%s136 + $0x1900] sm:$0xff] %v1821
        %2704 = vst [vmem:[%s136 + $0x1908] sm:$0xff] %v1822
        %2705 = vst [vmem:[%s136 + $0x1910] sm:$0xff] %v1823
        %2706 = vst [vmem:[%s136 + $0x1918] sm:$0xff] %v1824
        %2707 = vst [vmem:[%s136 + $0x1920] sm:$0xff] %v1825
        %2708 = vst [vmem:[%s136 + $0x1928] sm:$0xff] %v1826
        %2709 = vst [vmem:[%s136 + $0x1930] sm:$0xff] %v1827
        %2710 = vst [vmem:[%s136 + $0x1938] sm:$0xff] %v1828
        %2711 = vst [vmem:[%s136 + $0x1940] sm:$0xff] %v1829
        %2712 = vst [vmem:[%s136 + $0x1948] sm:$0xff] %v1830
        %2713 = vst [vmem:[%s136 + $0x1950] sm:$0xff] %v1831
        %2714 = vst [vmem:[%s136 + $0x1958] sm:$0xff] %v1832
        %2715 = vst [vmem:[%s136 + $0x1960] sm:$0xff] %v1833
        %2716 = vst [vmem:[%s136 + $0x1968] sm:$0xff] %v1834
        %2717 = vst [vmem:[%s136 + $0x1970] sm:$0xff] %v1835
        %2718 = vst [vmem:[%s136 + $0x1978] sm:$0xff] %v1836
        %2719 = vst [vmem:[%s136 + $0x1980] sm:$0xff] %v1837
        %2720 = vst [vmem:[%s136 + $0x1988] sm:$0xff] %v1838
        %2721 = vst [vmem:[%s136 + $0x1990] sm:$0xff] %v1839
        %2722 = vst [vmem:[%s136 + $0x1998] sm:$0xff] %v1840
        %2723 = vst [vmem:[%s136 + $0x19a0] sm:$0xff] %v1841
        %2724 = vst [vmem:[%s136 + $0x19a8] sm:$0xff] %v1842
        %2725 = vst [vmem:[%s136 + $0x19b0] sm:$0xff] %v1843
        %2726 = vst [vmem:[%s136 + $0x19b8] sm:$0xff] %v1844
        %2727 = vst [vmem:[%s136 + $0x19c0] sm:$0xff] %v1845
        %2728 = vst [vmem:[%s136 + $0x19c8] sm:$0xff] %v1846
        %2729 = vst [vmem:[%s136 + $0x19d0] sm:$0xff] %v1847
        %2730 = vst [vmem:[%s136 + $0x19d8] sm:$0xff] %v1848
        %2731 = vst [vmem:[%s136 + $0x19e0] sm:$0xff] %v1849
        %2732 = vst [vmem:[%s136 + $0x19e8] sm:$0xff] %v1850
        %2733 = vst [vmem:[%s136 + $0x19f0] sm:$0xff] %v1851
        %2734 = vst [vmem:[%s136 + $0x19f8] sm:$0xff] %v1852
        %2735 = vst [vmem:[%s136 + $0x1a00] sm:$0xff] %v1853
        %2736 = vst [vmem:[%s136 + $0x1a08] sm:$0xff] %v1854
        %2737 = vst [vmem:[%s136 + $0x1a10] sm:$0xff] %v1855
        %2738 = vst [vmem:[%s136 + $0x1a18] sm:$0xff] %v1856
        %2739 = vst [vmem:[%s136 + $0x1a20] sm:$0xff] %v1857
        %2740 = vst [vmem:[%s136 + $0x1a28] sm:$0xff] %v1858
        %2741 = vst [vmem:[%s136 + $0x1a30] sm:$0xff] %v1859
        %2742 = vst [vmem:[%s136 + $0x1a38] sm:$0xff] %v1860
        %2743 = vst [vmem:[%s136 + $0x1a40] sm:$0xff] %v1861
        %2744 = vst [vmem:[%s136 + $0x1a48] sm:$0xff] %v1862
        %2745 = vst [vmem:[%s136 + $0x1a50] sm:$0xff] %v1863
        %2746 = vst [vmem:[%s136 + $0x1a58] sm:$0xff] %v1864
        %2747 = vst [vmem:[%s136 + $0x1a60] sm:$0xff] %v1865
        %2748 = vst [vmem:[%s136 + $0x1a68] sm:$0xff] %v1866
        %2749 = vst [vmem:[%s136 + $0x1a70] sm:$0xff] %v1867
        %2750 = vst [vmem:[%s136 + $0x1a78] sm:$0xff] %v1868
        %2751 = vst [vmem:[%s136 + $0x1a80] sm:$0xff] %v1869
        %2752 = vst [vmem:[%s136 + $0x1a88] sm:$0xff] %v1870
        %2753 = vst [vmem:[%s136 + $0x1a90] sm:$0xff] %v1871
        %2754 = vst [vmem:[%s136 + $0x1a98] sm:$0xff] %v1872
        %2755 = vst [vmem:[%s136 + $0x1aa0] sm:$0xff] %v1873
        %2756 = vst [vmem:[%s136 + $0x1aa8] sm:$0xff] %v1874
        %2757 = vst [vmem:[%s136 + $0x1ab0] sm:$0xff] %v1875
        %2758 = vst [vmem:[%s136 + $0x1ab8] sm:$0xff] %v1876
        %2759 = vst [vmem:[%s136 + $0x1ac0] sm:$0xff] %v1877
        %2760 = vst [vmem:[%s136 + $0x1ac8] sm:$0xff] %v1878
        %2761 = vst [vmem:[%s136 + $0x1ad0] sm:$0xff] %v1879
        %2762 = vst [vmem:[%s136 + $0x1ad8] sm:$0xff] %v1880
        %2763 = vst [vmem:[%s136 + $0x1ae0] sm:$0xff] %v1881
        %2764 = vst [vmem:[%s136 + $0x1ae8] sm:$0xff] %v1882
        %2765 = vst [vmem:[%s136 + $0x1af0] sm:$0xff] %v1883
        %2766 = vst [vmem:[%s136 + $0x1af8] sm:$0xff] %v1884
        %2767 = vst [vmem:[%s136 + $0x1b00] sm:$0xff] %v1885
        %2768 = vst [vmem:[%s136 + $0x1b08] sm:$0xff] %v1886
        %2769 = vst [vmem:[%s136 + $0x1b10] sm:$0xff] %v1887
        %2770 = vst [vmem:[%s136 + $0x1b18] sm:$0xff] %v1888
        %2771 = vst [vmem:[%s136 + $0x1b20] sm:$0xff] %v1889
        %2772 = vst [vmem:[%s136 + $0x1b28] sm:$0xff] %v1890
        %2773 = vst [vmem:[%s136 + $0x1b30] sm:$0xff] %v1891
        %2774 = vst [vmem:[%s136 + $0x1b38] sm:$0xff] %v1892
        %2775 = vst [vmem:[%s136 + $0x1b40] sm:$0xff] %v1893
        %2776 = vst [vmem:[%s136 + $0x1b48] sm:$0xff] %v1894
        %2777 = vst [vmem:[%s136 + $0x1b50] sm:$0xff] %v1895
        %2778 = vst [vmem:[%s136 + $0x1b58] sm:$0xff] %v1896
        %2779 = vst [vmem:[%s136 + $0x1b60] sm:$0xff] %v1897
        %2780 = vst [vmem:[%s136 + $0x1b68] sm:$0xff] %v1898
        %2781 = vst [vmem:[%s136 + $0x1b70] sm:$0xff] %v1899
        %2782 = vst [vmem:[%s136 + $0x1b78] sm:$0xff] %v1900
        %2783 = vst [vmem:[%s136 + $0x1b80] sm:$0xff] %v1901
        %2784 = vst [vmem:[%s136 + $0x1b88] sm:$0xff] %v1902
        %s2785 = sand.u32 %s52, 1
        %s2786 = scalar_lea.sflag [#allocation4], %s2785
        %s2787 = sand.u32 %s52, 1
        %s2788 = smul.addr %s2787, 7056
        %s2789 = scalar_lea.vmem [#allocation5], %s2788
        // Predicated region
        $region29: #{tpu_custom_call.1} parent=23 // pred_check
          %p2790 = pneg %p62
        $region30: #{tpu_custom_call.1} parent=23 // pred_check_branch
          %2792 = sbr.rel (%p2790) target = $region32
        $region31: #{tpu_custom_call.1} parent=23 // pred_region
          %s2793 = smul.u32 882, %s18
          %2795 = vsyncadd %s2786, 0
          %s2796 = smul.addr %s2793, 8
          %s2797 = scalar_lea.hbm %s1, %s2796
          %s2798 = sshll.u32 %s2789, 4
          %s2799 = int_to_ptr.vmem [resolvable:$true] %s2798
          %s2800 = sshll.u32 %s2797, 4
          %s2801 = int_to_ptr.hbm [resolvable:$true] %s2800
          %2806 = dma.vmem_to_hbm [thread:$0]  %s2799, 112896, %s2801, %s2786, 128, 128, 8
        $region32: #{tpu_custom_call.1} parent=23 // pred_fallthru
          _
      $region24: #{tpu_custom_call.1} parent=5 // pred_fallthru
        _
      %p2807 = scmp.le.s32.totalorder 2, %s13
      // Predicated region
      $region33: #{tpu_custom_call.1} parent=5 // pred_check
        %p2808 = pneg %p2807
      $region34: #{tpu_custom_call.1} parent=5 // pred_check_branch
        %2810 = sbr.rel (%p2808) target = $region36
      $region35: #{tpu_custom_call.1} parent=5 // pred_region
        %s2811 = ssub.s32 %s13, 2
        // Predicated region
        $region37: #{tpu_custom_call.1} parent=35 // pred_check
          %p2812 = pneg %p68
        $region38: #{tpu_custom_call.1} parent=35 // pred_check_branch
          %2814 = sbr.rel (%p2812) target = $region40
        $region39: #{tpu_custom_call.1} parent=35 // pred_region
          %s2815 = sand.u32 %s53, 1
          %s2816 = scalar_lea.sflag [#allocation4], %s2815
          %s2817 = sand.u32 %s53, 1
          %s2818 = smul.addr %s2817, 7056
          %s2819 = scalar_lea.vmem [#allocation5], %s2818
          %2821 = dma.done %s2816, 112896
        $region40: #{tpu_custom_call.1} parent=35 // pred_fallthru
          _
      $region36: #{tpu_custom_call.1} parent=5 // pred_fallthru
        _
    $region6: #{tpu_custom_call.1} parent=1 // loop_footer
      %s17 = sadd.s32 1, %s13
    $region7: #{tpu_custom_call.1} parent=1 // loop_footer_branch
      %12 = sbr.rel target = $region3
    $region8: #{tpu_custom_call.1} parent=1 // loop_exit
      _
    %2822 = vsyncpa [#allocation3], 1
    %s2823 = scalar_lea.sflag [#allocation3], 1
    %2824 = vsyncpa %s2823, 1
    %2825 = vsyncpa [#allocation4], 1
    %s2826 = scalar_lea.sflag [#allocation4], 1
    %2827 = vsyncpa %s2826, 1

</llo_original>
